<compile_context>
chip_gen: v7x
topology: tpu7x:2x2x1
jax: 0.10.0
libtpu: 0.0.40
codegen_flags: <defaults>
</compile_context>

<pallas_src>
import functools

import jax
import jax.numpy as jnp
import numpy as np
from jax.experimental import pallas as pl
from jax.experimental.pallas import tpu as pltpu


def _layernorm(h, w, b, eps=1e-5):
    mu = jnp.mean(h, axis=-1, keepdims=True)
    var = jnp.mean(jnp.square(h - mu), axis=-1, keepdims=True)
    return (h - mu) * jax.lax.rsqrt(var + eps) * w + b


def transformer_block_kernel(
    x_ref, ln1w_ref, ln1b_ref, wqkv_ref, wproj_ref, bproj_ref,
    ln2w_ref, ln2b_ref, wfc1_ref, bfc1_ref, wfc2_ref, bfc2_ref,
    o_ref, *, num_heads, seq_len, mlp_chunk,
):
    """Grid = (batch_tile, layer).  The f32 residual stream is carried in the
    output block itself (its BlockSpec is layer-invariant, so the block stays
    resident in VMEM across the whole layer axis and is written back to HBM
    once per batch tile)."""
    layer = pl.program_id(1)

    @pl.when(layer == 0)
    def _init():
        o_ref[...] = x_ref[...].astype(jnp.float32)

    x = o_ref[...]                       # (N, D) f32, N = bt * S
    N, D = x.shape
    S = seq_len
    bt = N // S
    H = num_heads
    dh = D // H
    scale = dh ** -0.5

    # ---- Attention sub-block: x = x + proj(MHA(LN1(x))) ----
    h = _layernorm(x, ln1w_ref[0], ln1b_ref[0]).astype(jnp.bfloat16)
    qkv = jnp.dot(h, wqkv_ref[...], preferred_element_type=jnp.float32)  # (N, 3D) f32

    # Single reshape/transpose into head-batched (G, S, dh); scale folded
    # into q (small tensor) instead of the (G, S, S) scores.
    def to_heads(a):
        return jnp.transpose(a.reshape(bt, S, H, dh), (0, 2, 1, 3)).reshape(bt * H, S, dh)

    q = to_heads(qkv[:, :D] * scale).astype(jnp.bfloat16)
    k = to_heads(qkv[:, D:2 * D]).astype(jnp.bfloat16)
    v = to_heads(qkv[:, 2 * D:]).astype(jnp.bfloat16)

    scores = jnp.einsum("gqd,gkd->gqk", q, k,
                        preferred_element_type=jnp.float32)            # (G, S, S) f32
    scores = scores - jnp.max(scores, axis=-1, keepdims=True)
    p = jnp.exp(scores)                                                 # f32 (v5e-friendly)
    denom = jnp.sum(p, axis=-1, keepdims=True)                          # (G, S, 1)
    ctx = jnp.einsum("gqk,gkd->gqd", p.astype(jnp.bfloat16), v,
                     preferred_element_type=jnp.float32)                # (G, S, dh)
    # Normalize AFTER the PV matmul, on the small (G, S, dh) tensor.
    ctx = ctx * pl.reciprocal(denom, approx=True)
    attn = jnp.transpose(ctx.reshape(bt, H, S, dh), (0, 2, 1, 3)).reshape(N, D)

    attn = jnp.dot(attn.astype(jnp.bfloat16), wproj_ref[...],
                   preferred_element_type=jnp.float32) + bproj_ref[0]
    x = x + attn

    # ---- MLP sub-block: x = x + fc2(gelu(fc1(LN2(x)))), tiled over hidden ----
    h2 = _layernorm(x, ln2w_ref[0], ln2b_ref[0]).astype(jnp.bfloat16)
    Hm = wfc1_ref.shape[-1]
    b1 = bfc1_ref[0]
    n_chunks = Hm // mlp_chunk
    hout = jnp.zeros((N, D), jnp.float32)
    for c in range(n_chunks):
        c0 = c * mlp_chunk
        hm = jnp.dot(h2, wfc1_ref[:, c0:c0 + mlp_chunk],
                     preferred_element_type=jnp.float32) + b1[c0:c0 + mlp_chunk]
        # TODO(synk): PyTorch nn.GELU is exact (erf); tanh approximation used
        # here (EUP-friendly) -> ~1e-3 level activation difference.
        hm = jax.nn.gelu(hm, approximate=True).astype(jnp.bfloat16)
        hout = hout + jnp.dot(hm, wfc2_ref[c0:c0 + mlp_chunk, :],
                              preferred_element_type=jnp.float32)
    x = x + hout + bfc2_ref[0]

    o_ref[...] = x


def _tpu_topology():
    """Physical VMEM bytes per TensorCore and TensorCores per chip."""
    vmem = 128 << 20
    try:
        info = pltpu.get_tpu_info()
        vmem = int(getattr(info, "vmem_capacity_bytes", vmem))
    except Exception:
        pass
    cores = 1
    try:
        kind = jax.devices()[0].device_kind.lower()
        if "v7" in kind:
            cores = 2
    except Exception:
        pass
    if vmem <= (64 << 20):        # 64 MiB per core -> v7x-class chip
        cores = max(cores, 2)
    return vmem, cores


def _pick_mlp_chunk(Hm, max_chunk=1024):
    if Hm <= max_chunk:
        return Hm
    for c in range(max_chunk, 0, -128):
        if c % 128 == 0 and Hm % c == 0:
            return c
    return Hm


def _pick_batch_tile(B, S, D, Hm, H, mlp_chunk, vmem_budget, num_cores):
    """Largest batch tile whose estimated VMEM footprint fits the budget.
    On single-core chips prefer a single tile (minimal weight re-streaming);
    on multi-core chips keep the number of tiles a multiple of the core count
    so the 'parallel' batch axis splits evenly."""
    def est(bt):
        N = bt * S
        w_elems = 4 * D * D + 2 * D * Hm
        weights = 2 * 2 * w_elems                          # bf16, double-buffered
        x_io = 2 * 2 * N * D * 4                           # x in + out blocks (f32)
        qkv_act = N * 3 * D * (4 + 2)                      # f32 qkv + bf16 q/k/v
        attn_act = bt * H * S * S * (4 + 2) + 3 * N * D * 4  # scores + p + ctx/attn
        mlp_act = N * mlp_chunk * (4 + 2) + 2 * N * D * 4
        return weights + x_io + qkv_act + attn_act + mlp_act + (2 << 20)

    candidates = [bt for bt in range(B, 0, -1) if B % bt == 0]
    if num_cores > 1 and B >= num_cores:
        preferred = [bt for bt in candidates if (B // bt) % num_cores == 0]
    else:
        preferred = candidates
    for group in (preferred, candidates):
        for bt in group:
            N = bt * S
            if bt != B and N % 8 != 0:     # (8,128) sublane alignment
                continue
            if est(bt) <= vmem_budget:
                return bt, est(bt)
    bt = candidates[-1]                    # fall back to smallest tile
    return bt, est(bt)


def transformer_forward(x, params, num_heads):
    B, S, D = x.shape
    L = params["ln1w"].shape[0]
    Hm = params["wfc1"].shape[-1]

    vmem_phys, num_cores = _tpu_topology()
    mlp_chunk = _pick_mlp_chunk(Hm)

    # Per-generation VMEM cap: leave headroom for Mosaic internal scratch.
    if vmem_phys <= (64 << 20):                      # v7x: 64 MiB / core
        cap = vmem_phys - (8 << 20)
    else:                                            # v5e / v6e: 128 MiB
        cap = min(vmem_phys - (16 << 20), 112 << 20)

    bt, est = _pick_batch_tile(B, S, D, Hm, num_heads, mlp_chunk,
                               int(0.9 * cap), num_cores)
    n_bt = B // bt
    N = bt * S
    vmem_limit = int(max(16 << 20, min(cap, est + (4 << 20))))

    x2 = x.reshape(B * S, D).astype(jnp.float32)     # all in-kernel math is 2-D

    def vec_spec(k):     # params shaped (L, 1, k)
        return pl.BlockSpec((None, 1, k), lambda b, l: (l, 0, 0))

    def mat_spec(m, n):  # params shaped (L, m, n)
        return pl.BlockSpec((None, m, n), lambda b, l: (l, 0, 0))

    kernel = functools.partial(transformer_block_kernel,
                               num_heads=num_heads, seq_len=S,
                               mlp_chunk=mlp_chunk)
    out2 = pl.pallas_call(
        kernel,
        out_shape=jax.ShapeDtypeStruct((B * S, D), jnp.float32),
        grid_spec=pltpu.PrefetchScalarGridSpec(
            num_scalar_prefetch=0,
            grid=(n_bt, L),
            in_specs=[
                # x block index is layer-invariant -> fetched once per batch tile.
                pl.BlockSpec((N, D), lambda b, l: (b, 0)),
                vec_spec(D), vec_spec(D),           # ln1 w, b
                mat_spec(D, 3 * D),                 # qkv weight (no bias)
                mat_spec(D, D), vec_spec(D),        # proj weight, bias
                vec_spec(D), vec_spec(D),           # ln2 w, b
                mat_spec(D, Hm), vec_spec(Hm),      # fc1 weight, bias
                mat_spec(Hm, D), vec_spec(D),       # fc2 weight, bias
            ],
            # Layer-invariant output block => residual stream stays resident
            # in VMEM across the whole layer axis (written back once).
            out_specs=pl.BlockSpec((N, D), lambda b, l: (b, 0)),
        ),
        compiler_params=pltpu.CompilerParams(
            dimension_semantics=("parallel", "arbitrary"),
            vmem_limit_bytes=vmem_limit),
    )(
        x2,
        params["ln1w"], params["ln1b"],
        params["wqkv"],
        params["wproj"], params["bproj"],
        params["ln2w"], params["ln2b"],
        params["wfc1"], params["bfc1"],
        params["wfc2"], params["bfc2"],
    )
    return out2.reshape(B, S, D).astype(x.dtype)


def reference_forward(x, params, num_heads):
    """Pure-JAX f32 reference (mirrors PyTorch Block/Transformer forward)."""
    L = params["ln1w"].shape[0]
    B, S, D = x.shape
    dh = D // num_heads
    scale = dh ** -0.5
    x = x.astype(jnp.float32)
    for l in range(L):
        h = _layernorm(x, params["ln1w"][l, 0], params["ln1b"][l, 0])
        qkv = h @ params["wqkv"][l].astype(jnp.float32)
        q, k, v = jnp.split(qkv, 3, axis=-1)
        q = q.reshape(B, S, num_heads, dh).transpose(0, 2, 1, 3)
        k = k.reshape(B, S, num_heads, dh).transpose(0, 2, 1, 3)
        v = v.reshape(B, S, num_heads, dh).transpose(0, 2, 1, 3)
        scores = jnp.einsum("bhqd,bhkd->bhqk", q, k) * scale
        p = jax.nn.softmax(scores, axis=-1)
        attn = jnp.einsum("bhqk,bhkd->bhqd", p, v).transpose(0, 2, 1, 3).reshape(B, S, D)
        attn = attn @ params["wproj"][l].astype(jnp.float32) + params["bproj"][l, 0]
        x = x + attn
        h2 = _layernorm(x, params["ln2w"][l, 0], params["ln2b"][l, 0])
        hmid = jax.nn.gelu(h2 @ params["wfc1"][l].astype(jnp.float32)
                           + params["bfc1"][l, 0], approximate=False)
        x = x + (hmid @ params["wfc2"][l].astype(jnp.float32) + params["bfc2"][l, 0])
    return x


def init_params(key, depth, dim, mlp_ratio):
    hidden = int(dim * mlp_ratio)
    ks = jax.random.split(key, 6)
    std = 0.02
    wdt = jnp.bfloat16   # big matmul weights stored in bf16 (MXU-native path)
    return {
        "ln1w": jnp.ones((depth, 1, dim), jnp.float32),
        "ln1b": jnp.zeros((depth, 1, dim), jnp.float32),
        "wqkv": (std * jax.random.normal(ks[0], (depth, dim, 3 * dim), jnp.float32)).astype(wdt),
        "wproj": (std * jax.random.normal(ks[1], (depth, dim, dim), jnp.float32)).astype(wdt),
        "bproj": std * jax.random.normal(ks[2], (depth, 1, dim), jnp.float32),
        "ln2w": jnp.ones((depth, 1, dim), jnp.float32),
        "ln2b": jnp.zeros((depth, 1, dim), jnp.float32),
        "wfc1": (std * jax.random.normal(ks[3], (depth, dim, hidden), jnp.float32)).astype(wdt),
        "bfc1": std * jax.random.normal(ks[4], (depth, 1, hidden), jnp.float32),
        "wfc2": (std * jax.random.normal(ks[5], (depth, hidden, dim), jnp.float32)).astype(wdt),
        "bfc2": jnp.zeros((depth, 1, dim), jnp.float32),
    }


if __name__ == "__main__":
    # Small config: embed_dim=32, depth=2, num_heads=4, mlp_ratio=4, B=2, S=8.
    B, S, D, H, L, R = 2, 8, 32, 4, 2, 4.0
    key = jax.random.PRNGKey(0)
    kx, kp = jax.random.split(key)
    x = jax.random.normal(kx, (B, S, D), jnp.float32)
    params = init_params(kp, L, D, R)

    out = jax.block_until_ready(transformer_forward(x, params, H))
    ref = jax.block_until_ready(reference_forward(x, params, H))

    # bf16 matmuls / approx reciprocal / tanh-GELU in the kernel vs. f32 exact
    # reference -> compare with a bf16-appropriate tolerance.
    np.testing.assert_allclose(np.asarray(out), np.asarray(ref), atol=2e-2, rtol=2e-2)
    print("KERNEL_OK")
</pallas_src>

<mosaic_0001>
module attributes {stable_mosaic.version = 11 : i64} {
  func.func @transformer_block_kernel(%arg0: i32, %arg1: i32, %arg2: memref<16x32xf32, #tpu.memory_space<vmem>>, %arg3: memref<1x1x32xf32, #tpu.memory_space<vmem>>, %arg4: memref<1x1x32xf32, #tpu.memory_space<vmem>>, %arg5: memref<1x32x96xbf16, #tpu.memory_space<vmem>>, %arg6: memref<1x32x32xbf16, #tpu.memory_space<vmem>>, %arg7: memref<1x1x32xf32, #tpu.memory_space<vmem>>, %arg8: memref<1x1x32xf32, #tpu.memory_space<vmem>>, %arg9: memref<1x1x32xf32, #tpu.memory_space<vmem>>, %arg10: memref<1x32x128xbf16, #tpu.memory_space<vmem>>, %arg11: memref<1x1x128xf32, #tpu.memory_space<vmem>>, %arg12: memref<1x128x32xbf16, #tpu.memory_space<vmem>>, %arg13: memref<1x1x32xf32, #tpu.memory_space<vmem>>, %arg14: memref<16x32xf32, #tpu.memory_space<vmem>>) attributes {dimension_semantics = [#tpu.dimension_semantics<parallel>, #tpu.dimension_semantics<arbitrary>], iteration_bounds = array<i64: 1, 2>, scalar_prefetch = 0 : i64, scratch_operands = 0 : i64, tpu.core_type = #tpu.core_type<tc>, window_params = [{transform_indices = @transform_0, window_bounds = array<i64: 16, 32>}, {transform_indices = @transform_1, window_bounds = array<i64: 1, 1, 32>}, {transform_indices = @transform_2, window_bounds = array<i64: 1, 1, 32>}, {transform_indices = @transform_3, window_bounds = array<i64: 1, 32, 96>}, {transform_indices = @transform_4, window_bounds = array<i64: 1, 32, 32>}, {transform_indices = @transform_5, window_bounds = array<i64: 1, 1, 32>}, {transform_indices = @transform_6, window_bounds = array<i64: 1, 1, 32>}, {transform_indices = @transform_7, window_bounds = array<i64: 1, 1, 32>}, {transform_indices = @transform_8, window_bounds = array<i64: 1, 32, 128>}, {transform_indices = @transform_9, window_bounds = array<i64: 1, 1, 128>}, {transform_indices = @transform_10, window_bounds = array<i64: 1, 128, 32>}, {transform_indices = @transform_11, window_bounds = array<i64: 1, 1, 32>}, {transform_indices = @transform_12, window_bounds = array<i64: 16, 32>}]} {
    %c0_i32 = arith.constant 0 : i32
    %0 = arith.cmpi eq, %arg1, %c0_i32 : i32
    %1 = arith.extui %0 : i1 to i32
    %c0_i32_0 = arith.constant 0 : i32
    %2 = arith.cmpi ne, %1, %c0_i32_0 : i32
    scf.if %2 {
      %c0_60 = arith.constant 0 : index
      %c0_61 = arith.constant 0 : index
      %142 = vector.load %arg2[%c0_60, %c0_61] : memref<16x32xf32, #tpu.memory_space<vmem>>, vector<16x32xf32>
      %c0_62 = arith.constant 0 : index
      %c0_63 = arith.constant 0 : index
      %143 = vector.load %arg14[%c0_62, %c0_63] : memref<16x32xf32, #tpu.memory_space<vmem>>, vector<16x32xf32>
      tpu.vector_store %arg14[%c0_62, %c0_63], %142 {strides = array<i32>} : memref<16x32xf32, #tpu.memory_space<vmem>>, vector<16x32xf32>,
    } else {
    }
    %c0 = arith.constant 0 : index
    %c0_1 = arith.constant 0 : index
    %3 = vector.load %arg14[%c0, %c0_1] : memref<16x32xf32, #tpu.memory_space<vmem>>, vector<16x32xf32>
    %c0_2 = arith.constant 0 : index
    %c0_3 = arith.constant 0 : index
    %c0_4 = arith.constant 0 : index
    %4 = vector.load %arg3[%c0_2, %c0_3, %c0_4] : memref<1x1x32xf32, #tpu.memory_space<vmem>>, vector<1x1x32xf32>
    %5 = vector.shape_cast %4 : vector<1x1x32xf32> to vector<32xf32>
    %c0_5 = arith.constant 0 : index
    %c0_6 = arith.constant 0 : index
    %c0_7 = arith.constant 0 : index
    %6 = vector.load %arg4[%c0_5, %c0_6, %c0_7] : memref<1x1x32xf32, #tpu.memory_space<vmem>>, vector<1x1x32xf32>
    %7 = vector.shape_cast %6 : vector<1x1x32xf32> to vector<32xf32>
    %cst = arith.constant dense<0.000000e+00> : vector<16xf32>
    %8 = vector.multi_reduction <add>, %3, %cst [1] : vector<16x32xf32> to vector<16xf32>
    %9 = vector.shape_cast %8 : vector<16xf32> to vector<16x1xf32>
    %cst_8 = arith.constant 3.200000e+01 : f32
    %10 = vector.broadcast %cst_8 : f32 to vector<16x1xf32>
    %11 = arith.divf %9, %10 : vector<16x1xf32>
    %12 = vector.broadcast %11 : vector<16x1xf32> to vector<16x32xf32>
    %13 = arith.subf %3, %12 : vector<16x32xf32>
    %14 = arith.mulf %13, %13 : vector<16x32xf32>
    %cst_9 = arith.constant dense<0.000000e+00> : vector<16xf32>
    %15 = vector.multi_reduction <add>, %14, %cst_9 [1] : vector<16x32xf32> to vector<16xf32>
    %16 = vector.shape_cast %15 : vector<16xf32> to vector<16x1xf32>
    %cst_10 = arith.constant 3.200000e+01 : f32
    %17 = vector.broadcast %cst_10 : f32 to vector<16x1xf32>
    %18 = arith.divf %16, %17 : vector<16x1xf32>
    %19 = vector.broadcast %11 : vector<16x1xf32> to vector<16x32xf32>
    %20 = arith.subf %3, %19 : vector<16x32xf32>
    %cst_11 = arith.constant 9.99999974E-6 : f32
    %21 = vector.broadcast %cst_11 : f32 to vector<16x1xf32>
    %22 = arith.addf %18, %21 : vector<16x1xf32>
    %23 = math.rsqrt %22 : vector<16x1xf32>
    %24 = vector.broadcast %23 : vector<16x1xf32> to vector<16x32xf32>
    %25 = arith.mulf %20, %24 : vector<16x32xf32>
    %26 = vector.shape_cast %5 : vector<32xf32> to vector<1x32xf32>
    %27 = vector.broadcast %26 : vector<1x32xf32> to vector<16x32xf32>
    %28 = arith.mulf %25, %27 : vector<16x32xf32>
    %29 = vector.shape_cast %7 : vector<32xf32> to vector<1x32xf32>
    %30 = vector.broadcast %29 : vector<1x32xf32> to vector<16x32xf32>
    %31 = arith.addf %28, %30 : vector<16x32xf32>
    %32 = arith.truncf %31 : vector<16x32xf32> to vector<16x32xbf16>
    %c0_12 = arith.constant 0 : index
    %c0_13 = arith.constant 0 : index
    %c0_14 = arith.constant 0 : index
    %33 = vector.load %arg5[%c0_12, %c0_13, %c0_14] : memref<1x32x96xbf16, #tpu.memory_space<vmem>>, vector<1x32x96xbf16>
    %34 = vector.shape_cast %33 : vector<1x32x96xbf16> to vector<32x96xbf16>
    %cst_15 = arith.constant dense<0.000000e+00> : vector<16x96xf32>
    %35 = tpu.matmul %32, %34, %cst_15 {dimension_numbers = #tpu.dot_dimension_numbers<[1], [0], [0], [1], [0, 0, 1, 1], [], []>} : vector<16x32xbf16>, vector<32x96xbf16>, vector<16x96xf32> -> vector<16x96xf32>
    %36 = vector.extract_strided_slice %35 {offsets = [0, 0], sizes = [16, 32], strides = [1, 1]} : vector<16x96xf32> to vector<16x32xf32>
    %cst_16 = arith.constant 0.353553385 : f32
    %37 = vector.broadcast %cst_16 : f32 to vector<16x32xf32>
    %38 = arith.mulf %36, %37 : vector<16x32xf32>
    %39 = vector.shape_cast %38 : vector<16x32xf32> to vector<2x8x4x8xf32>
    %40 = tpu.transpose %39, [0, 2, 1, 3] : vector<2x8x4x8xf32> -> vector<2x4x8x8xf32>
    %41 = vector.shape_cast %40 : vector<2x4x8x8xf32> to vector<8x8x8xf32>
    %42 = arith.truncf %41 : vector<8x8x8xf32> to vector<8x8x8xbf16>
    %43 = vector.extract_strided_slice %35 {offsets = [0, 32], sizes = [16, 32], strides = [1, 1]} : vector<16x96xf32> to vector<16x32xf32>
    %44 = vector.shape_cast %43 : vector<16x32xf32> to vector<2x8x4x8xf32>
    %45 = tpu.transpose %44, [0, 2, 1, 3] : vector<2x8x4x8xf32> -> vector<2x4x8x8xf32>
    %46 = vector.shape_cast %45 : vector<2x4x8x8xf32> to vector<8x8x8xf32>
    %47 = arith.truncf %46 : vector<8x8x8xf32> to vector<8x8x8xbf16>
    %48 = vector.extract_strided_slice %35 {offsets = [0, 64], sizes = [16, 32], strides = [1, 1]} : vector<16x96xf32> to vector<16x32xf32>
    %49 = vector.shape_cast %48 : vector<16x32xf32> to vector<2x8x4x8xf32>
    %50 = tpu.transpose %49, [0, 2, 1, 3] : vector<2x8x4x8xf32> -> vector<2x4x8x8xf32>
    %51 = vector.shape_cast %50 : vector<2x4x8x8xf32> to vector<8x8x8xf32>
    %52 = arith.truncf %51 : vector<8x8x8xf32> to vector<8x8x8xbf16>
    "tpu.trace_start"() <{level = 10 : i32, message = "gqd,gkd->gqk"}> : () -> ()
    %cst_17 = arith.constant dense<0.000000e+00> : vector<8x8x8xf32>
    %53 = tpu.matmul %42, %47, %cst_17 {dimension_numbers = #tpu.dot_dimension_numbers<[2], [2], [1], [1], [0, 0, 0, 1, 1, 1], [0], [0]>} : vector<8x8x8xbf16>, vector<8x8x8xbf16>, vector<8x8x8xf32> -> vector<8x8x8xf32>
    "tpu.trace_stop"() : () -> ()
    %cst_18 = arith.constant dense<0xFF800000> : vector<8x8xf32>
    %54 = vector.multi_reduction <maximumf>, %53, %cst_18 [2] : vector<8x8x8xf32> to vector<8x8xf32>
    %55 = vector.shape_cast %54 : vector<8x8xf32> to vector<8x8x1xf32>
    %56 = vector.broadcast %55 : vector<8x8x1xf32> to vector<8x8x8xf32>
    %57 = arith.subf %53, %56 : vector<8x8x8xf32>
    %58 = math.exp %57 : vector<8x8x8xf32>
    %cst_19 = arith.constant dense<0.000000e+00> : vector<8x8xf32>
    %59 = vector.multi_reduction <add>, %58, %cst_19 [2] : vector<8x8x8xf32> to vector<8x8xf32>
    %60 = vector.shape_cast %59 : vector<8x8xf32> to vector<8x8x1xf32>
    %61 = arith.truncf %58 : vector<8x8x8xf32> to vector<8x8x8xbf16>
    "tpu.trace_start"() <{level = 10 : i32, message = "gqk,gkd->gqd"}> : () -> ()
    %cst_20 = arith.constant dense<0.000000e+00> : vector<8x8x8xf32>
    %62 = tpu.matmul %61, %52, %cst_20 {dimension_numbers = #tpu.dot_dimension_numbers<[2], [1], [1], [2], [0, 0, 0, 1, 1, 2], [0], [0]>} : vector<8x8x8xbf16>, vector<8x8x8xbf16>, vector<8x8x8xf32> -> vector<8x8x8xf32>
    "tpu.trace_stop"() : () -> ()
    %63 = tpu.reciprocal %60 {approx = true} : vector<8x8x1xf32> -> vector<8x8x1xf32>
    %64 = vector.broadcast %63 : vector<8x8x1xf32> to vector<8x8x8xf32>
    %65 = arith.mulf %62, %64 : vector<8x8x8xf32>
    %66 = vector.shape_cast %65 : vector<8x8x8xf32> to vector<2x4x8x8xf32>
    %67 = tpu.transpose %66, [0, 2, 1, 3] : vector<2x4x8x8xf32> -> vector<2x8x4x8xf32>
    %68 = vector.shape_cast %67 : vector<2x8x4x8xf32> to vector<16x32xf32>
    %69 = arith.truncf %68 : vector<16x32xf32> to vector<16x32xbf16>
    %c0_21 = arith.constant 0 : index
    %c0_22 = arith.constant 0 : index
    %c0_23 = arith.constant 0 : index
    %70 = vector.load %arg6[%c0_21, %c0_22, %c0_23] : memref<1x32x32xbf16, #tpu.memory_space<vmem>>, vector<1x32x32xbf16>
    %71 = vector.shape_cast %70 : vector<1x32x32xbf16> to vector<32x32xbf16>
    %cst_24 = arith.constant dense<0.000000e+00> : vector<16x32xf32>
    %72 = tpu.matmul %69, %71, %cst_24 {dimension_numbers = #tpu.dot_dimension_numbers<[1], [0], [0], [1], [0, 0, 1, 1], [], []>} : vector<16x32xbf16>, vector<32x32xbf16>, vector<16x32xf32> -> vector<16x32xf32>
    %c0_25 = arith.constant 0 : index
    %c0_26 = arith.constant 0 : index
    %c0_27 = arith.constant 0 : index
    %73 = vector.load %arg7[%c0_25, %c0_26, %c0_27] : memref<1x1x32xf32, #tpu.memory_space<vmem>>, vector<1x1x32xf32>
    %74 = vector.shape_cast %73 : vector<1x1x32xf32> to vector<32xf32>
    %75 = vector.shape_cast %74 : vector<32xf32> to vector<1x32xf32>
    %76 = vector.broadcast %75 : vector<1x32xf32> to vector<16x32xf32>
    %77 = arith.addf %72, %76 : vector<16x32xf32>
    %78 = arith.addf %3, %77 : vector<16x32xf32>
    %c0_28 = arith.constant 0 : index
    %c0_29 = arith.constant 0 : index
    %c0_30 = arith.constant 0 : index
    %79 = vector.load %arg8[%c0_28, %c0_29, %c0_30] : memref<1x1x32xf32, #tpu.memory_space<vmem>>, vector<1x1x32xf32>
    %80 = vector.shape_cast %79 : vector<1x1x32xf32> to vector<32xf32>
    %c0_31 = arith.constant 0 : index
    %c0_32 = arith.constant 0 : index
    %c0_33 = arith.constant 0 : index
    %81 = vector.load %arg9[%c0_31, %c0_32, %c0_33] : memref<1x1x32xf32, #tpu.memory_space<vmem>>, vector<1x1x32xf32>
    %82 = vector.shape_cast %81 : vector<1x1x32xf32> to vector<32xf32>
    %cst_34 = arith.constant dense<0.000000e+00> : vector<16xf32>
    %83 = vector.multi_reduction <add>, %78, %cst_34 [1] : vector<16x32xf32> to vector<16xf32>
    %84 = vector.shape_cast %83 : vector<16xf32> to vector<16x1xf32>
    %cst_35 = arith.constant 3.200000e+01 : f32
    %85 = vector.broadcast %cst_35 : f32 to vector<16x1xf32>
    %86 = arith.divf %84, %85 : vector<16x1xf32>
    %87 = vector.broadcast %86 : vector<16x1xf32> to vector<16x32xf32>
    %88 = arith.subf %78, %87 : vector<16x32xf32>
    %89 = arith.mulf %88, %88 : vector<16x32xf32>
    %cst_36 = arith.constant dense<0.000000e+00> : vector<16xf32>
    %90 = vector.multi_reduction <add>, %89, %cst_36 [1] : vector<16x32xf32> to vector<16xf32>
    %91 = vector.shape_cast %90 : vector<16xf32> to vector<16x1xf32>
    %cst_37 = arith.constant 3.200000e+01 : f32
    %92 = vector.broadcast %cst_37 : f32 to vector<16x1xf32>
    %93 = arith.divf %91, %92 : vector<16x1xf32>
    %94 = vector.broadcast %86 : vector<16x1xf32> to vector<16x32xf32>
    %95 = arith.subf %78, %94 : vector<16x32xf32>
    %cst_38 = arith.constant 9.99999974E-6 : f32
    %96 = vector.broadcast %cst_38 : f32 to vector<16x1xf32>
    %97 = arith.addf %93, %96 : vector<16x1xf32>
    %98 = math.rsqrt %97 : vector<16x1xf32>
    %99 = vector.broadcast %98 : vector<16x1xf32> to vector<16x32xf32>
    %100 = arith.mulf %95, %99 : vector<16x32xf32>
    %101 = vector.shape_cast %80 : vector<32xf32> to vector<1x32xf32>
    %102 = vector.broadcast %101 : vector<1x32xf32> to vector<16x32xf32>
    %103 = arith.mulf %100, %102 : vector<16x32xf32>
    %104 = vector.shape_cast %82 : vector<32xf32> to vector<1x32xf32>
    %105 = vector.broadcast %104 : vector<1x32xf32> to vector<16x32xf32>
    %106 = arith.addf %103, %105 : vector<16x32xf32>
    %107 = arith.truncf %106 : vector<16x32xf32> to vector<16x32xbf16>
    %c0_39 = arith.constant 0 : index
    %c0_40 = arith.constant 0 : index
    %c0_41 = arith.constant 0 : index
    %108 = vector.load %arg11[%c0_39, %c0_40, %c0_41] : memref<1x1x128xf32, #tpu.memory_space<vmem>>, vector<1x1x128xf32>
    %109 = vector.shape_cast %108 : vector<1x1x128xf32> to vector<128xf32>
    %cst_42 = arith.constant 0.000000e+00 : f32
    %110 = vector.broadcast %cst_42 : f32 to vector<16x32xf32>
    %c0_43 = arith.constant 0 : index
    %c0_44 = arith.constant 0 : index
    %c0_45 = arith.constant 0 : index
    %111 = vector.load %arg10[%c0_43, %c0_44, %c0_45] : memref<1x32x128xbf16, #tpu.memory_space<vmem>>, vector<1x32x128xbf16>
    %112 = vector.shape_cast %111 : vector<1x32x128xbf16> to vector<32x128xbf16>
    %cst_46 = arith.constant dense<0.000000e+00> : vector<16x128xf32>
    %113 = tpu.matmul %107, %112, %cst_46 {dimension_numbers = #tpu.dot_dimension_numbers<[1], [0], [0], [1], [0, 0, 1, 1], [], []>} : vector<16x32xbf16>, vector<32x128xbf16>, vector<16x128xf32> -> vector<16x128xf32>
    %114 = vector.shape_cast %109 : vector<128xf32> to vector<1x128xf32>
    %115 = vector.broadcast %114 : vector<1x128xf32> to vector<16x128xf32>
    %116 = arith.addf %113, %115 : vector<16x128xf32>
    %117 = arith.mulf %116, %116 : vector<16x128xf32>
    %118 = arith.mulf %116, %117 : vector<16x128xf32>
    %cst_47 = arith.constant 4.471500e-02 : f32
    %119 = vector.broadcast %cst_47 : f32 to vector<16x128xf32>
    %120 = arith.mulf %119, %118 : vector<16x128xf32>
    %121 = arith.addf %116, %120 : vector<16x128xf32>
    %cst_48 = arith.constant 0.797884583 : f32
    %122 = vector.broadcast %cst_48 : f32 to vector<16x128xf32>
    %123 = arith.mulf %122, %121 : vector<16x128xf32>
    %124 = math.tanh %123 : vector<16x128xf32>
    %cst_49 = arith.constant 1.000000e+00 : f32
    %125 = vector.broadcast %cst_49 : f32 to vector<16x128xf32>
    %126 = arith.addf %125, %124 : vector<16x128xf32>
    %cst_50 = arith.constant 5.000000e-01 : f32
    %127 = vector.broadcast %cst_50 : f32 to vector<16x128xf32>
    %128 = arith.mulf %127, %126 : vector<16x128xf32>
    %129 = arith.mulf %116, %128 : vector<16x128xf32>
    %130 = arith.truncf %129 : vector<16x128xf32> to vector<16x128xbf16>
    %c0_51 = arith.constant 0 : index
    %c0_52 = arith.constant 0 : index
    %c0_53 = arith.constant 0 : index
    %131 = vector.load %arg12[%c0_51, %c0_52, %c0_53] : memref<1x128x32xbf16, #tpu.memory_space<vmem>>, vector<1x128x32xbf16>
    %132 = vector.shape_cast %131 : vector<1x128x32xbf16> to vector<128x32xbf16>
    %cst_54 = arith.constant dense<0.000000e+00> : vector<16x32xf32>
    %133 = tpu.matmul %130, %132, %cst_54 {dimension_numbers = #tpu.dot_dimension_numbers<[1], [0], [0], [1], [0, 0, 1, 1], [], []>} : vector<16x128xbf16>, vector<128x32xbf16>, vector<16x32xf32> -> vector<16x32xf32>
    %134 = arith.addf %110, %133 : vector<16x32xf32>
    %135 = arith.addf %78, %134 : vector<16x32xf32>
    %c0_55 = arith.constant 0 : index
    %c0_56 = arith.constant 0 : index
    %c0_57 = arith.constant 0 : index
    %136 = vector.load %arg13[%c0_55, %c0_56, %c0_57] : memref<1x1x32xf32, #tpu.memory_space<vmem>>, vector<1x1x32xf32>
    %137 = vector.shape_cast %136 : vector<1x1x32xf32> to vector<32xf32>
    %138 = vector.shape_cast %137 : vector<32xf32> to vector<1x32xf32>
    %139 = vector.broadcast %138 : vector<1x32xf32> to vector<16x32xf32>
    %140 = arith.addf %135, %139 : vector<16x32xf32>
    %c0_58 = arith.constant 0 : index
    %c0_59 = arith.constant 0 : index
    %141 = vector.load %arg14[%c0_58, %c0_59] : memref<16x32xf32, #tpu.memory_space<vmem>>, vector<16x32xf32>
    tpu.vector_store %arg14[%c0_58, %c0_59], %140 {strides = array<i32>} : memref<16x32xf32, #tpu.memory_space<vmem>>, vector<16x32xf32>,
    return
  }
  func.func @transform_0(%arg0: i32, %arg1: i32) -> (i32, i32) {
    %c0_i32 = arith.constant 0 : i32
    %c0_i32_0 = arith.constant 0 : i32
    return %arg0, %c0_i32 : i32, i32
  }
  func.func @transform_1(%arg0: i32, %arg1: i32) -> (i32, i32, i32) {
    %c0_i32 = arith.constant 0 : i32
    %c0_i32_0 = arith.constant 0 : i32
    %c0_i32_1 = arith.constant 0 : i32
    return %arg1, %c0_i32, %c0_i32_0 : i32, i32, i32
  }
  func.func @transform_2(%arg0: i32, %arg1: i32) -> (i32, i32, i32) {
    %c0_i32 = arith.constant 0 : i32
    %c0_i32_0 = arith.constant 0 : i32
    %c0_i32_1 = arith.constant 0 : i32
    return %arg1, %c0_i32, %c0_i32_0 : i32, i32, i32
  }
  func.func @transform_3(%arg0: i32, %arg1: i32) -> (i32, i32, i32) {
    %c0_i32 = arith.constant 0 : i32
    %c0_i32_0 = arith.constant 0 : i32
    %c0_i32_1 = arith.constant 0 : i32
    return %arg1, %c0_i32, %c0_i32_0 : i32, i32, i32
  }
  func.func @transform_4(%arg0: i32, %arg1: i32) -> (i32, i32, i32) {
    %c0_i32 = arith.constant 0 : i32
    %c0_i32_0 = arith.constant 0 : i32
    %c0_i32_1 = arith.constant 0 : i32
    return %arg1, %c0_i32, %c0_i32_0 : i32, i32, i32
  }
  func.func @transform_5(%arg0: i32, %arg1: i32) -> (i32, i32, i32) {
    %c0_i32 = arith.constant 0 : i32
    %c0_i32_0 = arith.constant 0 : i32
    %c0_i32_1 = arith.constant 0 : i32
    return %arg1, %c0_i32, %c0_i32_0 : i32, i32, i32
  }
  func.func @transform_6(%arg0: i32, %arg1: i32) -> (i32, i32, i32) {
    %c0_i32 = arith.constant 0 : i32
    %c0_i32_0 = arith.constant 0 : i32
    %c0_i32_1 = arith.constant 0 : i32
    return %arg1, %c0_i32, %c0_i32_0 : i32, i32, i32
  }
  func.func @transform_7(%arg0: i32, %arg1: i32) -> (i32, i32, i32) {
    %c0_i32 = arith.constant 0 : i32
    %c0_i32_0 = arith.constant 0 : i32
    %c0_i32_1 = arith.constant 0 : i32
    return %arg1, %c0_i32, %c0_i32_0 : i32, i32, i32
  }
  func.func @transform_8(%arg0: i32, %arg1: i32) -> (i32, i32, i32) {
    %c0_i32 = arith.constant 0 : i32
    %c0_i32_0 = arith.constant 0 : i32
    %c0_i32_1 = arith.constant 0 : i32
    return %arg1, %c0_i32, %c0_i32_0 : i32, i32, i32
  }
  func.func @transform_9(%arg0: i32, %arg1: i32) -> (i32, i32, i32) {
    %c0_i32 = arith.constant 0 : i32
    %c0_i32_0 = arith.constant 0 : i32
    %c0_i32_1 = arith.constant 0 : i32
    return %arg1, %c0_i32, %c0_i32_0 : i32, i32, i32
  }
  func.func @transform_10(%arg0: i32, %arg1: i32) -> (i32, i32, i32) {
    %c0_i32 = arith.constant 0 : i32
    %c0_i32_0 = arith.constant 0 : i32
    %c0_i32_1 = arith.constant 0 : i32
    return %arg1, %c0_i32, %c0_i32_0 : i32, i32, i32
  }
  func.func @transform_11(%arg0: i32, %arg1: i32) -> (i32, i32, i32) {
    %c0_i32 = arith.constant 0 : i32
    %c0_i32_0 = arith.constant 0 : i32
    %c0_i32_1 = arith.constant 0 : i32
    return %arg1, %c0_i32, %c0_i32_0 : i32, i32, i32
  }
  func.func @transform_12(%arg0: i32, %arg1: i32) -> (i32, i32) {
    %c0_i32 = arith.constant 0 : i32
    %c0_i32_0 = arith.constant 0 : i32
    return %arg0, %c0_i32 : i32, i32
  }
}

</mosaic_0001>

<llo_original>
// kernel: tpu_custom_call.1
$region0: #{tpu_custom_call.1}
  #allocation0 [shape = 'u32[]', space=smem, size = 0x4, offset = 0x4, fixed_abs, tag = 'smem constant byte address 0x4 - core index']
  #allocation1 [shape = 'u32[144,128]{1,0:T(1,128)}', space=vmem, size = 0x12000, scoped, tag = 'internal scratch']
  %s0 = inlined_call_operand.vmem [shape: f32[16,32], index: 0, kind: input, shape index: {}]
  %s1 = inlined_call_operand.vmem [shape: f32[2,1,32], index: 1, kind: input, shape index: {}]
  %s2 = inlined_call_operand.vmem [shape: f32[2,1,32], index: 2, kind: input, shape index: {}]
  %s3 = inlined_call_operand.vmem [shape: bf16[2,32,96], index: 3, kind: input, shape index: {}]
  %s4 = inlined_call_operand.vmem [shape: bf16[2,32,32], index: 4, kind: input, shape index: {}]
  %s5 = inlined_call_operand.vmem [shape: f32[2,1,32], index: 5, kind: input, shape index: {}]
  %s6 = inlined_call_operand.vmem [shape: f32[2,1,32], index: 6, kind: input, shape index: {}]
  %s7 = inlined_call_operand.vmem [shape: f32[2,1,32], index: 7, kind: input, shape index: {}]
  %s8 = inlined_call_operand.vmem [shape: bf16[2,32,128], index: 8, kind: input, shape index: {}]
  %s9 = inlined_call_operand.vmem [shape: f32[2,1,128], index: 9, kind: input, shape index: {}]
  %s10 = inlined_call_operand.vmem [shape: bf16[2,128,32], index: 10, kind: input, shape index: {}]
  %s11 = inlined_call_operand.vmem [shape: f32[2,1,32], index: 11, kind: input, shape index: {}]
  %s12 = inlined_call_operand.hbm [shape: f32[16,32], index: 12, kind: output, shape index: {}]
  %s13 = sld [smem:[#allocation0]]
  $region85: #{tpu_custom_call.1} parent=0
    _
  %s15 = ssub.s32 1, %s13
  %s16 = scalar_select 0, %s15, %s13
  $region1: #{tpu_custom_call.1} parent=0
    #allocation2 [shape = 'u8[8192]{0}', space=vmem, size = 0x2000, scoped, tag = 'output window, operand 0, single buffered']
    #allocation3 [shape = 's32[2]{0}', space=sflag, size = 0x8, scoped, tag = 'scoped memory for tpu_custom_call.1']
    %17 = vsyncpa [#allocation3], 0
    loop: start=0, step=1, limit=4
    $region2: #{tpu_custom_call.1} parent=1 // loop_pre_header
      _
    $region3: #{tpu_custom_call.1} parent=1 // loop_header
      %s19 = sphi 0, %s23
      %p20 = scmp.ge.s32.totalorder %s19, 4
      %s26 = sphi 0, %s38
      %s27 = sphi 0, %s34
      %s28 = sphi 0, %s26
      %s29 = sphi 0, %s27
      %s30 = sphi 0, %s28
      %s31 = sphi 0, %s29
      %s41 = sphi 0, %s43
      %s44 = sphi 0, %s41
      %s45 = sphi 0, %s44
      %s61 = sphi 0, %s45
      %s67 = sphi 0, %s69
      %s70 = sphi 0, %s67
      %s71 = sphi 0, %s70
      %s87 = sphi 0, %s71
      %s93 = sphi 0, %s95
      %s96 = sphi 0, %s93
      %s97 = sphi 0, %s96
      %s113 = sphi 0, %s97
      %s119 = sphi 0, %s121
      %s122 = sphi 0, %s119
      %s123 = sphi 0, %s122
      %s139 = sphi 0, %s123
      %s145 = sphi 0, %s147
      %s148 = sphi 0, %s145
      %s149 = sphi 0, %s148
      %s165 = sphi 0, %s149
      %s171 = sphi 0, %s173
      %s174 = sphi 0, %s171
      %s175 = sphi 0, %s174
      %s191 = sphi 0, %s175
      %s197 = sphi 0, %s199
      %s200 = sphi 0, %s197
      %s201 = sphi 0, %s200
      %s217 = sphi 0, %s201
      %s223 = sphi 0, %s225
      %s226 = sphi 0, %s223
      %s227 = sphi 0, %s226
      %s243 = sphi 0, %s227
      %s249 = sphi 0, %s251
      %s252 = sphi 0, %s249
      %s253 = sphi 0, %s252
      %s269 = sphi 0, %s253
      %s275 = sphi 0, %s277
      %s278 = sphi 0, %s275
      %s279 = sphi 0, %s278
      %s295 = sphi 0, %s279
      %s301 = sphi 0, %s303
      %s304 = sphi 0, %s301
      %s305 = sphi 0, %s304
      %s321 = sphi 0, %s305
      %s327 = sphi 0, %s329
      %s330 = sphi 0, %s327
      %s331 = sphi 0, %s330
      %s347 = sphi 0, %s331
      %s353 = sphi 0, %s355
      %s356 = sphi 0, %s353
      %s357 = sphi 0, %s356
      %s373 = sphi 0, %s357
    $region4: #{tpu_custom_call.1} parent=1 // loop_header_branch
      %22 = sbr.rel (%p20) target = $region8
    $region5: #{tpu_custom_call.1} parent=1 // loop_body
      %s24 = ssub.s32 %s19, 1
      %s25 = ssub.s32 %s19, 2
      %s32 = sadd.s32 1, %s27
      %p33 = scmp.ge.s32.totalorder %s32, 2
      %s34 = scalar_select %p33, 0, %s32
      %s35 = sadd.s32 1, %s26
      %s36 = scalar_select %p33, %s35, %s26
      %p37 = scmp.ge.s32.totalorder %s36, 1
      %s38 = scalar_select %p37, 0, %s36
      %s39 = ssub.s32 %s26, %s38
      %p40 = scmp.eq.s32.totalorder %s39, 0
      %s42 = sadd.s32 %s41, 1
      %s43 = scalar_select %p40, %s41, %s42
      %p46 = pneg %p40
      %p47 = scmp.eq.s32.totalorder %s19, 1
      %p48 = por %p46, %p47
      %p49 = scmp.ne.s32.totalorder %s41, %s44
      %p50 = scmp.eq.s32.totalorder %s19, 0
      %p51 = por %p49, %p50
      %p52 = scmp.ne.s32.totalorder %s41, %s44
      %p53 = scmp.eq.s32.totalorder %s24, 1
      %p54 = por %p52, %p53
      %p55 = scmp.ne.s32.totalorder %s44, %s45
      %p56 = scmp.eq.s32.totalorder %s24, 0
      %p57 = por %p55, %p56
      %p58 = scmp.ne.s32.totalorder %s44, %s45
      %p59 = scmp.eq.s32.totalorder %s25, 1
      %p60 = por %p58, %p59
      %p62 = scmp.ne.s32.totalorder %s45, %s61
      %p63 = scmp.eq.s32.totalorder %s25, 0
      %p64 = por %p62, %p63
      %s65 = ssub.s32 %s27, %s34
      %p66 = scmp.eq.s32.totalorder %s65, 0
      %s68 = sadd.s32 %s67, 1
      %s69 = scalar_select %p66, %s67, %s68
      %p72 = pneg %p66
      %p73 = scmp.eq.s32.totalorder %s19, 1
      %p74 = por %p72, %p73
      %p75 = scmp.ne.s32.totalorder %s67, %s70
      %p76 = scmp.eq.s32.totalorder %s19, 0
      %p77 = por %p75, %p76
      %p78 = scmp.ne.s32.totalorder %s67, %s70
      %p79 = scmp.eq.s32.totalorder %s24, 1
      %p80 = por %p78, %p79
      %p81 = scmp.ne.s32.totalorder %s70, %s71
      %p82 = scmp.eq.s32.totalorder %s24, 0
      %p83 = por %p81, %p82
      %p84 = scmp.ne.s32.totalorder %s70, %s71
      %p85 = scmp.eq.s32.totalorder %s25, 1
      %p86 = por %p84, %p85
      %p88 = scmp.ne.s32.totalorder %s71, %s87
      %p89 = scmp.eq.s32.totalorder %s25, 0
      %p90 = por %p88, %p89
      %s91 = ssub.s32 %s27, %s34
      %p92 = scmp.eq.s32.totalorder %s91, 0
      %s94 = sadd.s32 %s93, 1
      %s95 = scalar_select %p92, %s93, %s94
      %p98 = pneg %p92
      %p99 = scmp.eq.s32.totalorder %s19, 1
      %p100 = por %p98, %p99
      %p101 = scmp.ne.s32.totalorder %s93, %s96
      %p102 = scmp.eq.s32.totalorder %s19, 0
      %p103 = por %p101, %p102
      %p104 = scmp.ne.s32.totalorder %s93, %s96
      %p105 = scmp.eq.s32.totalorder %s24, 1
      %p106 = por %p104, %p105
      %p107 = scmp.ne.s32.totalorder %s96, %s97
      %p108 = scmp.eq.s32.totalorder %s24, 0
      %p109 = por %p107, %p108
      %p110 = scmp.ne.s32.totalorder %s96, %s97
      %p111 = scmp.eq.s32.totalorder %s25, 1
      %p112 = por %p110, %p111
      %p114 = scmp.ne.s32.totalorder %s97, %s113
      %p115 = scmp.eq.s32.totalorder %s25, 0
      %p116 = por %p114, %p115
      %s117 = ssub.s32 %s27, %s34
      %p118 = scmp.eq.s32.totalorder %s117, 0
      %s120 = sadd.s32 %s119, 1
      %s121 = scalar_select %p118, %s119, %s120
      %p124 = pneg %p118
      %p125 = scmp.eq.s32.totalorder %s19, 1
      %p126 = por %p124, %p125
      %p127 = scmp.ne.s32.totalorder %s119, %s122
      %p128 = scmp.eq.s32.totalorder %s19, 0
      %p129 = por %p127, %p128
      %p130 = scmp.ne.s32.totalorder %s119, %s122
      %p131 = scmp.eq.s32.totalorder %s24, 1
      %p132 = por %p130, %p131
      %p133 = scmp.ne.s32.totalorder %s122, %s123
      %p134 = scmp.eq.s32.totalorder %s24, 0
      %p135 = por %p133, %p134
      %p136 = scmp.ne.s32.totalorder %s122, %s123
      %p137 = scmp.eq.s32.totalorder %s25, 1
      %p138 = por %p136, %p137
      %p140 = scmp.ne.s32.totalorder %s123, %s139
      %p141 = scmp.eq.s32.totalorder %s25, 0
      %p142 = por %p140, %p141
      %s143 = ssub.s32 %s27, %s34
      %p144 = scmp.eq.s32.totalorder %s143, 0
      %s146 = sadd.s32 %s145, 1
      %s147 = scalar_select %p144, %s145, %s146
      %p150 = pneg %p144
      %p151 = scmp.eq.s32.totalorder %s19, 1
      %p152 = por %p150, %p151
      %p153 = scmp.ne.s32.totalorder %s145, %s148
      %p154 = scmp.eq.s32.totalorder %s19, 0
      %p155 = por %p153, %p154
      %p156 = scmp.ne.s32.totalorder %s145, %s148
      %p157 = scmp.eq.s32.totalorder %s24, 1
      %p158 = por %p156, %p157
      %p159 = scmp.ne.s32.totalorder %s148, %s149
      %p160 = scmp.eq.s32.totalorder %s24, 0
      %p161 = por %p159, %p160
      %p162 = scmp.ne.s32.totalorder %s148, %s149
      %p163 = scmp.eq.s32.totalorder %s25, 1
      %p164 = por %p162, %p163
      %p166 = scmp.ne.s32.totalorder %s149, %s165
      %p167 = scmp.eq.s32.totalorder %s25, 0
      %p168 = por %p166, %p167
      %s169 = ssub.s32 %s27, %s34
      %p170 = scmp.eq.s32.totalorder %s169, 0
      %s172 = sadd.s32 %s171, 1
      %s173 = scalar_select %p170, %s171, %s172
      %p176 = pneg %p170
      %p177 = scmp.eq.s32.totalorder %s19, 1
      %p178 = por %p176, %p177
      %p179 = scmp.ne.s32.totalorder %s171, %s174
      %p180 = scmp.eq.s32.totalorder %s19, 0
      %p181 = por %p179, %p180
      %p182 = scmp.ne.s32.totalorder %s171, %s174
      %p183 = scmp.eq.s32.totalorder %s24, 1
      %p184 = por %p182, %p183
      %p185 = scmp.ne.s32.totalorder %s174, %s175
      %p186 = scmp.eq.s32.totalorder %s24, 0
      %p187 = por %p185, %p186
      %p188 = scmp.ne.s32.totalorder %s174, %s175
      %p189 = scmp.eq.s32.totalorder %s25, 1
      %p190 = por %p188, %p189
      %p192 = scmp.ne.s32.totalorder %s175, %s191
      %p193 = scmp.eq.s32.totalorder %s25, 0
      %p194 = por %p192, %p193
      %s195 = ssub.s32 %s27, %s34
      %p196 = scmp.eq.s32.totalorder %s195, 0
      %s198 = sadd.s32 %s197, 1
      %s199 = scalar_select %p196, %s197, %s198
      %p202 = pneg %p196
      %p203 = scmp.eq.s32.totalorder %s19, 1
      %p204 = por %p202, %p203
      %p205 = scmp.ne.s32.totalorder %s197, %s200
      %p206 = scmp.eq.s32.totalorder %s19, 0
      %p207 = por %p205, %p206
      %p208 = scmp.ne.s32.totalorder %s197, %s200
      %p209 = scmp.eq.s32.totalorder %s24, 1
      %p210 = por %p208, %p209
      %p211 = scmp.ne.s32.totalorder %s200, %s201
      %p212 = scmp.eq.s32.totalorder %s24, 0
      %p213 = por %p211, %p212
      %p214 = scmp.ne.s32.totalorder %s200, %s201
      %p215 = scmp.eq.s32.totalorder %s25, 1
      %p216 = por %p214, %p215
      %p218 = scmp.ne.s32.totalorder %s201, %s217
      %p219 = scmp.eq.s32.totalorder %s25, 0
      %p220 = por %p218, %p219
      %s221 = ssub.s32 %s27, %s34
      %p222 = scmp.eq.s32.totalorder %s221, 0
      %s224 = sadd.s32 %s223, 1
      %s225 = scalar_select %p222, %s223, %s224
      %p228 = pneg %p222
      %p229 = scmp.eq.s32.totalorder %s19, 1
      %p230 = por %p228, %p229
      %p231 = scmp.ne.s32.totalorder %s223, %s226
      %p232 = scmp.eq.s32.totalorder %s19, 0
      %p233 = por %p231, %p232
      %p234 = scmp.ne.s32.totalorder %s223, %s226
      %p235 = scmp.eq.s32.totalorder %s24, 1
      %p236 = por %p234, %p235
      %p237 = scmp.ne.s32.totalorder %s226, %s227
      %p238 = scmp.eq.s32.totalorder %s24, 0
      %p239 = por %p237, %p238
      %p240 = scmp.ne.s32.totalorder %s226, %s227
      %p241 = scmp.eq.s32.totalorder %s25, 1
      %p242 = por %p240, %p241
      %p244 = scmp.ne.s32.totalorder %s227, %s243
      %p245 = scmp.eq.s32.totalorder %s25, 0
      %p246 = por %p244, %p245
      %s247 = ssub.s32 %s27, %s34
      %p248 = scmp.eq.s32.totalorder %s247, 0
      %s250 = sadd.s32 %s249, 1
      %s251 = scalar_select %p248, %s249, %s250
      %p254 = pneg %p248
      %p255 = scmp.eq.s32.totalorder %s19, 1
      %p256 = por %p254, %p255
      %p257 = scmp.ne.s32.totalorder %s249, %s252
      %p258 = scmp.eq.s32.totalorder %s19, 0
      %p259 = por %p257, %p258
      %p260 = scmp.ne.s32.totalorder %s249, %s252
      %p261 = scmp.eq.s32.totalorder %s24, 1
      %p262 = por %p260, %p261
      %p263 = scmp.ne.s32.totalorder %s252, %s253
      %p264 = scmp.eq.s32.totalorder %s24, 0
      %p265 = por %p263, %p264
      %p266 = scmp.ne.s32.totalorder %s252, %s253
      %p267 = scmp.eq.s32.totalorder %s25, 1
      %p268 = por %p266, %p267
      %p270 = scmp.ne.s32.totalorder %s253, %s269
      %p271 = scmp.eq.s32.totalorder %s25, 0
      %p272 = por %p270, %p271
      %s273 = ssub.s32 %s27, %s34
      %p274 = scmp.eq.s32.totalorder %s273, 0
      %s276 = sadd.s32 %s275, 1
      %s277 = scalar_select %p274, %s275, %s276
      %p280 = pneg %p274
      %p281 = scmp.eq.s32.totalorder %s19, 1
      %p282 = por %p280, %p281
      %p283 = scmp.ne.s32.totalorder %s275, %s278
      %p284 = scmp.eq.s32.totalorder %s19, 0
      %p285 = por %p283, %p284
      %p286 = scmp.ne.s32.totalorder %s275, %s278
      %p287 = scmp.eq.s32.totalorder %s24, 1
      %p288 = por %p286, %p287
      %p289 = scmp.ne.s32.totalorder %s278, %s279
      %p290 = scmp.eq.s32.totalorder %s24, 0
      %p291 = por %p289, %p290
      %p292 = scmp.ne.s32.totalorder %s278, %s279
      %p293 = scmp.eq.s32.totalorder %s25, 1
      %p294 = por %p292, %p293
      %p296 = scmp.ne.s32.totalorder %s279, %s295
      %p297 = scmp.eq.s32.totalorder %s25, 0
      %p298 = por %p296, %p297
      %s299 = ssub.s32 %s27, %s34
      %p300 = scmp.eq.s32.totalorder %s299, 0
      %s302 = sadd.s32 %s301, 1
      %s303 = scalar_select %p300, %s301, %s302
      %p306 = pneg %p300
      %p307 = scmp.eq.s32.totalorder %s19, 1
      %p308 = por %p306, %p307
      %p309 = scmp.ne.s32.totalorder %s301, %s304
      %p310 = scmp.eq.s32.totalorder %s19, 0
      %p311 = por %p309, %p310
      %p312 = scmp.ne.s32.totalorder %s301, %s304
      %p313 = scmp.eq.s32.totalorder %s24, 1
      %p314 = por %p312, %p313
      %p315 = scmp.ne.s32.totalorder %s304, %s305
      %p316 = scmp.eq.s32.totalorder %s24, 0
      %p317 = por %p315, %p316
      %p318 = scmp.ne.s32.totalorder %s304, %s305
      %p319 = scmp.eq.s32.totalorder %s25, 1
      %p320 = por %p318, %p319
      %p322 = scmp.ne.s32.totalorder %s305, %s321
      %p323 = scmp.eq.s32.totalorder %s25, 0
      %p324 = por %p322, %p323
      %s325 = ssub.s32 %s27, %s34
      %p326 = scmp.eq.s32.totalorder %s325, 0
      %s328 = sadd.s32 %s327, 1
      %s329 = scalar_select %p326, %s327, %s328
      %p332 = pneg %p326
      %p333 = scmp.eq.s32.totalorder %s19, 1
      %p334 = por %p332, %p333
      %p335 = scmp.ne.s32.totalorder %s327, %s330
      %p336 = scmp.eq.s32.totalorder %s19, 0
      %p337 = por %p335, %p336
      %p338 = scmp.ne.s32.totalorder %s327, %s330
      %p339 = scmp.eq.s32.totalorder %s24, 1
      %p340 = por %p338, %p339
      %p341 = scmp.ne.s32.totalorder %s330, %s331
      %p342 = scmp.eq.s32.totalorder %s24, 0
      %p343 = por %p341, %p342
      %p344 = scmp.ne.s32.totalorder %s330, %s331
      %p345 = scmp.eq.s32.totalorder %s25, 1
      %p346 = por %p344, %p345
      %p348 = scmp.ne.s32.totalorder %s331, %s347
      %p349 = scmp.eq.s32.totalorder %s25, 0
      %p350 = por %p348, %p349
      %s351 = ssub.s32 %s26, %s38
      %p352 = scmp.eq.s32.totalorder %s351, 0
      %s354 = sadd.s32 %s353, 1
      %s355 = scalar_select %p352, %s353, %s354
      %p358 = pneg %p352
      %p359 = scmp.eq.s32.totalorder %s19, 1
      %p360 = por %p358, %p359
      %p361 = scmp.ne.s32.totalorder %s353, %s356
      %p362 = scmp.eq.s32.totalorder %s19, 0
      %p363 = por %p361, %p362
      %p364 = scmp.ne.s32.totalorder %s353, %s356
      %p365 = scmp.eq.s32.totalorder %s24, 1
      %p366 = por %p364, %p365
      %p367 = scmp.ne.s32.totalorder %s356, %s357
      %p368 = scmp.eq.s32.totalorder %s24, 0
      %p369 = por %p367, %p368
      %p370 = scmp.ne.s32.totalorder %s356, %s357
      %p371 = scmp.eq.s32.totalorder %s25, 1
      %p372 = por %p370, %p371
      %p374 = scmp.ne.s32.totalorder %s357, %s373
      %p375 = scmp.eq.s32.totalorder %s25, 0
      %p376 = por %p374, %p375
      %p377 = scmp.le.s32.totalorder 1, %s19
      %p378 = scmp.lt.s32.totalorder %s19, 3
      %p379 = pnand %p377, %p378
      %p380 = pneg %p379
      // Predicated region
      $region9: #{tpu_custom_call.1} parent=5 // pred_check
        _
      $region10: #{tpu_custom_call.1} parent=5 // pred_check_branch
        %382 = sbr.rel (%p379) target = $region12
      $region11: #{tpu_custom_call.1} parent=5 // pred_region
        %s383 = ssub.s32 %s19, 1
        // Predicated region
        $region13: #{tpu_custom_call.1} parent=11 // pred_check
          %p384 = pneg %p57
        $region14: #{tpu_custom_call.1} parent=11 // pred_check_branch
          %386 = sbr.rel (%p384) target = $region16
        $region15: #{tpu_custom_call.1} parent=11 // pred_region
          %s387 = smul.u32 2, %s28
          %p388 = scmp.lt.s32.totalorder %s387, 1
          %s389 = scalar_select %p388, %s387, 1
          %s390 = smul.addr %s389, 8
          %s391 = scalar_lea.vmem %s0, %s390
          %s392 = smul.u32 2, %s28
        $region16: #{tpu_custom_call.1} parent=11 // pred_fallthru
          _
      $region12: #{tpu_custom_call.1} parent=5 // pred_fallthru
        _
      %p393 = scmp.lt.s32.totalorder %s19, 2
      // Predicated region
      $region17: #{tpu_custom_call.1} parent=5 // pred_check
        %p394 = pneg %p393
      $region18: #{tpu_custom_call.1} parent=5 // pred_check_branch
        %396 = sbr.rel (%p394) target = $region20
      $region19: #{tpu_custom_call.1} parent=5 // pred_region
        // Predicated region
        $region21: #{tpu_custom_call.1} parent=19 // pred_check
          %p397 = pneg %p77
        $region22: #{tpu_custom_call.1} parent=19 // pred_check_branch
          %399 = sbr.rel (%p397) target = $region24
        $region23: #{tpu_custom_call.1} parent=19 // pred_region
          %p400 = scmp.lt.s32.totalorder %s27, 1
          %s401 = scalar_select %p400, %s27, 1
          %s402 = scalar_lea.vmem %s1, %s401
        $region24: #{tpu_custom_call.1} parent=19 // pred_fallthru
          _
        // Predicated region
        $region25: #{tpu_custom_call.1} parent=19 // pred_check
          %p403 = pneg %p103
        $region26: #{tpu_custom_call.1} parent=19 // pred_check_branch
          %405 = sbr.rel (%p403) target = $region28
        $region27: #{tpu_custom_call.1} parent=19 // pred_region
          %p406 = scmp.lt.s32.totalorder %s27, 1
          %s407 = scalar_select %p406, %s27, 1
          %s408 = scalar_lea.vmem %s2, %s407
        $region28: #{tpu_custom_call.1} parent=19 // pred_fallthru
          _
        // Predicated region
        $region29: #{tpu_custom_call.1} parent=19 // pred_check
          %p409 = pneg %p129
        $region30: #{tpu_custom_call.1} parent=19 // pred_check_branch
          %411 = sbr.rel (%p409) target = $region32
        $region31: #{tpu_custom_call.1} parent=19 // pred_region
          %p412 = scmp.lt.s32.totalorder %s27, 1
          %s413 = scalar_select %p412, %s27, 1
          %s414 = smul.addr %s413, 4
          %s415 = smul.addr %s414, 4
          %s416 = scalar_lea.vmem %s3, %s415
        $region32: #{tpu_custom_call.1} parent=19 // pred_fallthru
          _
        // Predicated region
        $region33: #{tpu_custom_call.1} parent=19 // pred_check
          %p417 = pneg %p155
        $region34: #{tpu_custom_call.1} parent=19 // pred_check_branch
          %419 = sbr.rel (%p417) target = $region36
        $region35: #{tpu_custom_call.1} parent=19 // pred_region
          %p420 = scmp.lt.s32.totalorder %s27, 1
          %s421 = scalar_select %p420, %s27, 1
          %s422 = smul.addr %s421, 4
          %s423 = smul.addr %s422, 4
          %s424 = scalar_lea.vmem %s4, %s423
        $region36: #{tpu_custom_call.1} parent=19 // pred_fallthru
          _
        // Predicated region
        $region37: #{tpu_custom_call.1} parent=19 // pred_check
          %p425 = pneg %p181
        $region38: #{tpu_custom_call.1} parent=19 // pred_check_branch
          %427 = sbr.rel (%p425) target = $region40
        $region39: #{tpu_custom_call.1} parent=19 // pred_region
          %p428 = scmp.lt.s32.totalorder %s27, 1
          %s429 = scalar_select %p428, %s27, 1
          %s430 = scalar_lea.vmem %s5, %s429
        $region40: #{tpu_custom_call.1} parent=19 // pred_fallthru
          _
        // Predicated region
        $region41: #{tpu_custom_call.1} parent=19 // pred_check
          %p431 = pneg %p207
        $region42: #{tpu_custom_call.1} parent=19 // pred_check_branch
          %433 = sbr.rel (%p431) target = $region44
        $region43: #{tpu_custom_call.1} parent=19 // pred_region
          %p434 = scmp.lt.s32.totalorder %s27, 1
          %s435 = scalar_select %p434, %s27, 1
          %s436 = scalar_lea.vmem %s6, %s435
        $region44: #{tpu_custom_call.1} parent=19 // pred_fallthru
          _
        // Predicated region
        $region45: #{tpu_custom_call.1} parent=19 // pred_check
          %p437 = pneg %p233
        $region46: #{tpu_custom_call.1} parent=19 // pred_check_branch
          %439 = sbr.rel (%p437) target = $region48
        $region47: #{tpu_custom_call.1} parent=19 // pred_region
          %p440 = scmp.lt.s32.totalorder %s27, 1
          %s441 = scalar_select %p440, %s27, 1
          %s442 = scalar_lea.vmem %s7, %s441
        $region48: #{tpu_custom_call.1} parent=19 // pred_fallthru
          _
        // Predicated region
        $region49: #{tpu_custom_call.1} parent=19 // pred_check
          %p443 = pneg %p259
        $region50: #{tpu_custom_call.1} parent=19 // pred_check_branch
          %445 = sbr.rel (%p443) target = $region52
        $region51: #{tpu_custom_call.1} parent=19 // pred_region
          %p446 = scmp.lt.s32.totalorder %s27, 1
          %s447 = scalar_select %p446, %s27, 1
          %s448 = smul.addr %s447, 4
          %s449 = smul.addr %s448, 4
          %s450 = scalar_lea.vmem %s8, %s449
        $region52: #{tpu_custom_call.1} parent=19 // pred_fallthru
          _
        // Predicated region
        $region53: #{tpu_custom_call.1} parent=19 // pred_check
          %p451 = pneg %p285
        $region54: #{tpu_custom_call.1} parent=19 // pred_check_branch
          %453 = sbr.rel (%p451) target = $region56
        $region55: #{tpu_custom_call.1} parent=19 // pred_region
          %p454 = scmp.lt.s32.totalorder %s27, 1
          %s455 = scalar_select %p454, %s27, 1
          %s456 = scalar_lea.vmem %s9, %s455
        $region56: #{tpu_custom_call.1} parent=19 // pred_fallthru
          _
        // Predicated region
        $region57: #{tpu_custom_call.1} parent=19 // pred_check
          %p457 = pneg %p311
        $region58: #{tpu_custom_call.1} parent=19 // pred_check_branch
          %459 = sbr.rel (%p457) target = $region60
        $region59: #{tpu_custom_call.1} parent=19 // pred_region
          %p460 = scmp.lt.s32.totalorder %s27, 1
          %s461 = scalar_select %p460, %s27, 1
          %s462 = smul.addr %s461, 16
          %s463 = smul.addr %s462, 4
          %s464 = scalar_lea.vmem %s10, %s463
        $region60: #{tpu_custom_call.1} parent=19 // pred_fallthru
          _
        // Predicated region
        $region61: #{tpu_custom_call.1} parent=19 // pred_check
          %p465 = pneg %p337
        $region62: #{tpu_custom_call.1} parent=19 // pred_check_branch
          %467 = sbr.rel (%p465) target = $region64
        $region63: #{tpu_custom_call.1} parent=19 // pred_region
          %p468 = scmp.lt.s32.totalorder %s27, 1
          %s469 = scalar_select %p468, %s27, 1
          %s470 = scalar_lea.vmem %s11, %s469
        $region64: #{tpu_custom_call.1} parent=19 // pred_fallthru
          _
      $region20: #{tpu_custom_call.1} parent=5 // pred_fallthru
        _
      %p471 = scmp.le.s32.totalorder 1, %s19
      %p472 = scmp.lt.s32.totalorder %s19, 3
      %p473 = pnand %p471, %p472
      %p474 = pneg %p473
      // Predicated region
      $region65: #{tpu_custom_call.1} parent=5 // pred_check
        _
      $region66: #{tpu_custom_call.1} parent=5 // pred_check_branch
        %476 = sbr.rel (%p473) target = $region68
      $region67: #{tpu_custom_call.1} parent=5 // pred_region
        %s477 = ssub.s32 %s19, 1
        %s478 = smul.u32 2, %s28
        %p479 = scmp.lt.s32.totalorder %s478, 1
        %s480 = scalar_select %p479, %s478, 1
        %s481 = smul.addr %s480, 8
        %s482 = scalar_lea.vmem %s0, %s481
        %p483 = pneg %p57
        %p484 = pneg %p54
        %p485 = scmp.lt.s32.totalorder %s29, 1
        %s486 = scalar_select %p485, %s29, 1
        %s487 = scalar_lea.vmem %s1, %s486
        %p488 = pneg %p83
        %p489 = pneg %p80
        %p490 = scmp.lt.s32.totalorder %s29, 1
        %s491 = scalar_select %p490, %s29, 1
        %s492 = scalar_lea.vmem %s2, %s491
        %p493 = pneg %p109
        %p494 = pneg %p106
        %p495 = scmp.lt.s32.totalorder %s29, 1
        %s496 = scalar_select %p495, %s29, 1
        %s497 = smul.addr %s496, 4
        %s498 = smul.addr %s497, 4
        %s499 = scalar_lea.vmem %s3, %s498
        %p500 = pneg %p135
        %p501 = pneg %p132
        %p502 = scmp.lt.s32.totalorder %s29, 1
        %s503 = scalar_select %p502, %s29, 1
        %s504 = smul.addr %s503, 4
        %s505 = smul.addr %s504, 4
        %s506 = scalar_lea.vmem %s4, %s505
        %p507 = pneg %p161
        %p508 = pneg %p158
        %p509 = scmp.lt.s32.totalorder %s29, 1
        %s510 = scalar_select %p509, %s29, 1
        %s511 = scalar_lea.vmem %s5, %s510
        %p512 = pneg %p187
        %p513 = pneg %p184
        %p514 = scmp.lt.s32.totalorder %s29, 1
        %s515 = scalar_select %p514, %s29, 1
        %s516 = scalar_lea.vmem %s6, %s515
        %p517 = pneg %p213
        %p518 = pneg %p210
        %p519 = scmp.lt.s32.totalorder %s29, 1
        %s520 = scalar_select %p519, %s29, 1
        %s521 = scalar_lea.vmem %s7, %s520
        %p522 = pneg %p239
        %p523 = pneg %p236
        %p524 = scmp.lt.s32.totalorder %s29, 1
        %s525 = scalar_select %p524, %s29, 1
        %s526 = smul.addr %s525, 4
        %s527 = smul.addr %s526, 4
        %s528 = scalar_lea.vmem %s8, %s527
        %p529 = pneg %p265
        %p530 = pneg %p262
        %p531 = scmp.lt.s32.totalorder %s29, 1
        %s532 = scalar_select %p531, %s29, 1
        %s533 = scalar_lea.vmem %s9, %s532
        %p534 = pneg %p291
        %p535 = pneg %p288
        %p536 = scmp.lt.s32.totalorder %s29, 1
        %s537 = scalar_select %p536, %s29, 1
        %s538 = smul.addr %s537, 16
        %s539 = smul.addr %s538, 4
        %s540 = scalar_lea.vmem %s10, %s539
        %p541 = pneg %p317
        %p542 = pneg %p314
        %p543 = scmp.lt.s32.totalorder %s29, 1
        %s544 = scalar_select %p543, %s29, 1
        %s545 = scalar_lea.vmem %s11, %s544
        %p546 = pneg %p343
        %p547 = pneg %p340
        %p548 = pneg %p369
        %p549 = pneg %p366
        %s550 = smul.u32 2, %s28
        %p551 = scmp.lt.s32.totalorder %s550, 1
        %s552 = scalar_select %p551, %s550, 1
        %s553 = smul.addr %s552, 8
        %s554 = scalar_lea.vmem %s0, %s553
        %s555 = smul.u32 2, %s28
        %p556 = scmp.lt.s32.totalorder %s29, 1
        %s557 = scalar_select %p556, %s29, 1
        %s558 = scalar_lea.vmem %s1, %s557
        %p559 = scmp.lt.s32.totalorder %s29, 1
        %s560 = scalar_select %p559, %s29, 1
        %s561 = scalar_lea.vmem %s2, %s560
        %p562 = scmp.lt.s32.totalorder %s29, 1
        %s563 = scalar_select %p562, %s29, 1
        %s564 = smul.addr %s563, 4
        %s565 = smul.addr %s564, 4
        %s566 = scalar_lea.vmem %s3, %s565
        %p567 = scmp.lt.s32.totalorder %s29, 1
        %s568 = scalar_select %p567, %s29, 1
        %s569 = smul.addr %s568, 4
        %s570 = smul.addr %s569, 4
        %s571 = scalar_lea.vmem %s4, %s570
        %p572 = scmp.lt.s32.totalorder %s29, 1
        %s573 = scalar_select %p572, %s29, 1
        %s574 = scalar_lea.vmem %s5, %s573
        %p575 = scmp.lt.s32.totalorder %s29, 1
        %s576 = scalar_select %p575, %s29, 1
        %s577 = scalar_lea.vmem %s6, %s576
        %p578 = scmp.lt.s32.totalorder %s29, 1
        %s579 = scalar_select %p578, %s29, 1
        %s580 = scalar_lea.vmem %s7, %s579
        %p581 = scmp.lt.s32.totalorder %s29, 1
        %s582 = scalar_select %p581, %s29, 1
        %s583 = smul.addr %s582, 4
        %s584 = smul.addr %s583, 4
        %s585 = scalar_lea.vmem %s8, %s584
        %p586 = scmp.lt.s32.totalorder %s29, 1
        %s587 = scalar_select %p586, %s29, 1
        %s588 = scalar_lea.vmem %s9, %s587
        %p589 = scmp.lt.s32.totalorder %s29, 1
        %s590 = scalar_select %p589, %s29, 1
        %s591 = smul.addr %s590, 16
        %s592 = smul.addr %s591, 4
        %s593 = scalar_lea.vmem %s10, %s592
        %p594 = scmp.lt.s32.totalorder %s29, 1
        %s595 = scalar_select %p594, %s29, 1
        %s596 = scalar_lea.vmem %s11, %s595
        %s597 = smul.u32 2, %s28
        %p599 = scmp.eq.s32.totalorder %s29, 0
        // Predicated region
        $region69: #{tpu_custom_call.1} parent=67 // pred_check
          %p600 = pneg %p599
        $region70: #{tpu_custom_call.1} parent=67 // pred_check_branch
          %602 = sbr.rel (%p600) target = $region72
        $region71: #{tpu_custom_call.1} parent=67 // pred_region
          %v603 = vld [vmem:[%s554] sm:$0xff]
          %v604 = vld [vmem:[%s554 + $0x8] sm:$0xff]
          %vm605 = vcmask 261120
          %606 = vst.msk [vmem:[#allocation2] sm:$0xff] %vm605, %v603
          %607 = vst.msk [vmem:[#allocation2 + $0x8] sm:$0xff] %vm605, %v604
        $region72: #{tpu_custom_call.1} parent=67 // pred_fallthru
          _
        %v608 = vld [vmem:[#allocation2] sm:$0xff]
        %v609 = vld [vmem:[#allocation2 + $0x8] sm:$0xff]
        %v610 = vld [vmem:[%s558] sm:$0x1]
        %v611 = vld [vmem:[%s561] sm:$0x1]
        %vm612 = vcmask 261120
        %v613 = vsel %vm612, %v608, 0.0
        %614 = vadd.xlane.f32.xlu0 %v613
        %v615 = vpop.xlane.xlu0 %614
        %v616 = vsel %vm612, %v609, 0.0
        %617 = vadd.xlane.f32.xlu0 %v616
        %v618 = vpop.xlane.xlu0 %617
        %v619 = vrcp.pop 32.0
        %v620 = vmul.f32 %v615, %v619
        %v621 = vmul.f32 %v618, %v619
        %v622 = vsub.f32 %v608, %v620
        %v623 = vsub.f32 %v609, %v621
        %v624 = vmul.f32 %v622, %v622
        %v625 = vmul.f32 %v623, %v623
        %v626 = vsel %vm612, %v624, 0.0
        %627 = vadd.xlane.f32.xlu0 %v626
        %v628 = vpop.xlane.xlu0 %627
        %v629 = vsel %vm612, %v625, 0.0
        %630 = vadd.xlane.f32.xlu0 %v629
        %v631 = vpop.xlane.xlu0 %630
        %v632 = vmul.f32 %v628, %v619
        %v633 = vmul.f32 %v631, %v619
        %v634 = vadd.f32 %v632, 1e-05
        %v635 = vadd.f32 %v633, 1e-05
        %v636 = vrsqrt.pop %v634
        %v637 = vrsqrt.pop %v635
        %v638 = vmul.f32 %v622, %v636
        %v639 = vmul.f32 %v623, %v637
        %v641 = vlaneseq
        %v642 = vshrl.u32 %v641, 7
        %v643 = vsub.s32 0, %v642
        %v644 = vrot.slane %v610, %v643
        %v646 = vmul.f32 %v638, %v644
        %v647 = vmul.f32 %v639, %v644
        %v649 = vlaneseq
        %v650 = vshrl.u32 %v649, 7
        %v651 = vsub.s32 0, %v650
        %v652 = vrot.slane %v611, %v651
        %v654 = vadd.f32 %v646, %v652
        %v655 = vadd.f32 %v647, %v652
        %v656 = vpack.c.bf16 %v655, %v654
        %v657 = vld [vmem:[%s566] sm:$0xf]
        %v658 = vld [vmem:[%s566 + $0x4] sm:$0xf]
        %v659 = vld [vmem:[%s566 + $0x8] sm:$0xf]
        %v660 = vld [vmem:[%s566 + $0xc] sm:$0xf]
        %v665 = vunpack.c.l.b16 %v657
        %v666 = vunpack.c.l.b16 %v658
        %v667 = vunpack.c.l.b16 %v659
        %v668 = vunpack.c.l.b16 %v660
        %v669 = vpack.c.b16 %v666, %v665
        %v670 = vpack.c.b16 %v668, %v667
        %v674 = vsel %vm612, %v656, 0
        %676 = vmatprep.subr.bf16.mxu0 0
        %677 = vmatpush1.bf16.msra.mxu0 %v669
        %678 = vmatprep.subr.bf16.mxu0 0
        %679 = vmatpush1.bf16.msra.mxu0 %v670
        %680 = vmatprep.subr.bf16.mxu0 0
        %681 = vmatpush1.bf16.msra.mxu0 0
        %682 = vmatprep.subr.bf16.mxu0 0
        %683 = vmatpush1.bf16.msra.mxu0 0
        %684 = vmatprep.subr.bf16.mxu0 0
        %685 = vmatpush1.bf16.msra.mxu0 0
        %686 = vmatprep.subr.bf16.mxu0 0
        %687 = vmatpush1.bf16.msra.mxu0 0
        %688 = vmatprep.subr.bf16.mxu0 0
        %689 = vmatpush1.bf16.msra.mxu0 0
        %690 = vmatprep.subr.bf16.mxu0 0
        %691 = vmatpush1.bf16.msra.mxu0 0
        %692 = vmatprep.subr.bf16.mxu0 0
        %693 = vmatpush1.bf16.msra.mxu0 0
        %694 = vmatprep.subr.bf16.mxu0 0
        %695 = vmatpush1.bf16.msra.mxu0 0
        %696 = vmatprep.subr.bf16.mxu0 0
        %697 = vmatpush1.bf16.msra.mxu0 0
        %698 = vmatprep.subr.bf16.mxu0 0
        %699 = vmatpush1.bf16.msra.mxu0 0
        %700 = vmatprep.subr.bf16.mxu0 0
        %701 = vmatpush1.bf16.msra.mxu0 0
        %702 = vmatprep.subr.bf16.mxu0 0
        %703 = vmatpush1.bf16.msra.mxu0 0
        %704 = vmatprep.subr.bf16.mxu0 0
        %705 = vmatpush1.bf16.msra.mxu0 0
        %706 = vmatprep.subr.bf16.mxu0 0
        %707 = vmatpush1.bf16.msra.mxu0 0
        %708 = vmatprep.mubr.bf16.mxu0 0
        %709 = vmatmul.mubr.bf16.gmra.mrb[0].mxu0 %v674
        %v710 = vpop.f32.mrb[0].mxu0
        %v711 = vadd.f32 0.0, %v710
        %v712 = vpop.f32.mrb[0].mxu0
        %v713 = vpop.f32.mrb[0].mxu0
        %v714 = vadd.f32 0.0, %v713
        %v715 = vpop.f32.mrb[0].mxu0
        %716 = vdwg.mxu0
        %v717 = vmul.f32 %v711, 0.35355338
        %v718 = vmul.f32 %v714, 0.35355338
        %721 = vrot.lane.b32.xlu0 %v717, 120
        %v722 = vpop.permute.xlu0 %721
        %723 = vrot.lane.b32.xlu0 %v718, 120
        %v724 = vpop.permute.xlu0 %723
        %727 = vrot.lane.b32.xlu0 %v717, 112
        %v728 = vpop.permute.xlu0 %727
        %729 = vrot.lane.b32.xlu0 %v718, 112
        %v730 = vpop.permute.xlu0 %729
        %733 = vrot.lane.b32.xlu0 %v717, 104
        %v734 = vpop.permute.xlu0 %733
        %735 = vrot.lane.b32.xlu0 %v718, 104
        %v736 = vpop.permute.xlu0 %735
        %v739 = vcombine.low %v717, %v728
        %v740 = vcombine.high %v717, %v728
        %v742 = vunpack.c.l.s4 1983009808
        %v743 = vunpack.c.0.s8 %v742
        %v744 = vlaneseq
        %v745 = vshrl.u32 %v744, 7
        %v746 = vsub.s32 %v743, %v745
        %v747 = vrot.slane %v739, %v746
        %v749 = vunpack.c.l.s4 1983009808
        %v750 = vunpack.c.0.s8 %v749
        %v751 = vlaneseq
        %v752 = vshrl.u32 %v751, 7
        %v753 = vsub.s32 %v750, %v752
        %v754 = vrot.slane %v740, %v753
        %v755 = vcombine.low %v722, %v734
        %v756 = vcombine.high %v722, %v734
        %v758 = vunpack.c.l.s4 1983009808
        %v759 = vunpack.c.0.s8 %v758
        %v760 = vlaneseq
        %v761 = vshrl.u32 %v760, 7
        %v762 = vsub.s32 %v759, %v761
        %v763 = vrot.slane %v755, %v762
        %v765 = vunpack.c.l.s4 1983009808
        %v766 = vunpack.c.0.s8 %v765
        %v767 = vlaneseq
        %v768 = vshrl.u32 %v767, 7
        %v769 = vsub.s32 %v766, %v768
        %v770 = vrot.slane %v756, %v769
        %v771 = vcombine.low %v747, %v763
        %v772 = vcombine.high %v747, %v763
        %v774 = vunpack.c.l.s4 1934713408
        %v775 = vunpack.c.0.s8 %v774
        %v776 = vlaneseq
        %v777 = vshrl.u32 %v776, 7
        %v778 = vsub.s32 %v775, %v777
        %v779 = vrot.slane %v771, %v778
        %v781 = vunpack.c.l.s4 1934713408
        %v782 = vunpack.c.0.s8 %v781
        %v783 = vlaneseq
        %v784 = vshrl.u32 %v783, 7
        %v785 = vsub.s32 %v782, %v784
        %v786 = vrot.slane %v772, %v785
        %v787 = vcombine.low %v754, %v770
        %v788 = vcombine.high %v754, %v770
        %v790 = vunpack.c.l.s4 1934713408
        %v791 = vunpack.c.0.s8 %v790
        %v792 = vlaneseq
        %v793 = vshrl.u32 %v792, 7
        %v794 = vsub.s32 %v791, %v793
        %v795 = vrot.slane %v787, %v794
        %v797 = vunpack.c.l.s4 1934713408
        %v798 = vunpack.c.0.s8 %v797
        %v799 = vlaneseq
        %v800 = vshrl.u32 %v799, 7
        %v801 = vsub.s32 %v798, %v800
        %v802 = vrot.slane %v788, %v801
        %v803 = vcombine.high %v779, 0.0
        %v804 = vcombine.high %v786, 0.0
        %v805 = vcombine.high %v795, 0.0
        %v806 = vcombine.high %v802, 0.0
        %v807 = vcombine.low %v718, %v730
        %v808 = vcombine.high %v718, %v730
        %v810 = vunpack.c.l.s4 1983009808
        %v811 = vunpack.c.0.s8 %v810
        %v812 = vlaneseq
        %v813 = vshrl.u32 %v812, 7
        %v814 = vsub.s32 %v811, %v813
        %v815 = vrot.slane %v807, %v814
        %v817 = vunpack.c.l.s4 1983009808
        %v818 = vunpack.c.0.s8 %v817
        %v819 = vlaneseq
        %v820 = vshrl.u32 %v819, 7
        %v821 = vsub.s32 %v818, %v820
        %v822 = vrot.slane %v808, %v821
        %v823 = vcombine.low %v724, %v736
        %v824 = vcombine.high %v724, %v736
        %v826 = vunpack.c.l.s4 1983009808
        %v827 = vunpack.c.0.s8 %v826
        %v828 = vlaneseq
        %v829 = vshrl.u32 %v828, 7
        %v830 = vsub.s32 %v827, %v829
        %v831 = vrot.slane %v823, %v830
        %v833 = vunpack.c.l.s4 1983009808
        %v834 = vunpack.c.0.s8 %v833
        %v835 = vlaneseq
        %v836 = vshrl.u32 %v835, 7
        %v837 = vsub.s32 %v834, %v836
        %v838 = vrot.slane %v824, %v837
        %v839 = vcombine.low %v815, %v831
        %v840 = vcombine.high %v815, %v831
        %v842 = vunpack.c.l.s4 1934713408
        %v843 = vunpack.c.0.s8 %v842
        %v844 = vlaneseq
        %v845 = vshrl.u32 %v844, 7
        %v846 = vsub.s32 %v843, %v845
        %v847 = vrot.slane %v839, %v846
        %v849 = vunpack.c.l.s4 1934713408
        %v850 = vunpack.c.0.s8 %v849
        %v851 = vlaneseq
        %v852 = vshrl.u32 %v851, 7
        %v853 = vsub.s32 %v850, %v852
        %v854 = vrot.slane %v840, %v853
        %v855 = vcombine.low %v822, %v838
        %v856 = vcombine.high %v822, %v838
        %v858 = vunpack.c.l.s4 1934713408
        %v859 = vunpack.c.0.s8 %v858
        %v860 = vlaneseq
        %v861 = vshrl.u32 %v860, 7
        %v862 = vsub.s32 %v859, %v861
        %v863 = vrot.slane %v855, %v862
        %v865 = vunpack.c.l.s4 1934713408
        %v866 = vunpack.c.0.s8 %v865
        %v867 = vlaneseq
        %v868 = vshrl.u32 %v867, 7
        %v869 = vsub.s32 %v866, %v868
        %v870 = vrot.slane %v856, %v869
        %v871 = vcombine.high %v847, 0.0
        %v872 = vcombine.high %v854, 0.0
        %v873 = vcombine.high %v863, 0.0
        %v874 = vcombine.high %v870, 0.0
        %v875 = vcombine.low %v779, %v786
        %v877 = vunpack.c.l.s4 1983009808
        %v878 = vunpack.c.0.s8 %v877
        %v879 = vlaneseq
        %v880 = vshrl.u32 %v879, 7
        %v881 = vsub.s32 %v878, %v880
        %v882 = vrot.slane %v875, %v881
        %v883 = vcombine.low %v803, %v804
        %v885 = vunpack.c.l.s4 1983009808
        %v886 = vunpack.c.0.s8 %v885
        %v887 = vlaneseq
        %v888 = vshrl.u32 %v887, 7
        %v889 = vsub.s32 %v886, %v888
        %v890 = vrot.slane %v883, %v889
        %v891 = vcombine.low %v795, %v802
        %v893 = vunpack.c.l.s4 1983009808
        %v894 = vunpack.c.0.s8 %v893
        %v895 = vlaneseq
        %v896 = vshrl.u32 %v895, 7
        %v897 = vsub.s32 %v894, %v896
        %v898 = vrot.slane %v891, %v897
        %v899 = vcombine.low %v805, %v806
        %v901 = vunpack.c.l.s4 1983009808
        %v902 = vunpack.c.0.s8 %v901
        %v903 = vlaneseq
        %v904 = vshrl.u32 %v903, 7
        %v905 = vsub.s32 %v902, %v904
        %v906 = vrot.slane %v899, %v905
        %v907 = vcombine.low %v882, %v890
        %v908 = vcombine.high %v882, %v890
        %v910 = vunpack.c.l.s4 1934713408
        %v911 = vunpack.c.0.s8 %v910
        %v912 = vlaneseq
        %v913 = vshrl.u32 %v912, 7
        %v914 = vsub.s32 %v911, %v913
        %v915 = vrot.slane %v907, %v914
        %v917 = vunpack.c.l.s4 1934713408
        %v918 = vunpack.c.0.s8 %v917
        %v919 = vlaneseq
        %v920 = vshrl.u32 %v919, 7
        %v921 = vsub.s32 %v918, %v920
        %v922 = vrot.slane %v908, %v921
        %v923 = vcombine.low %v898, %v906
        %v924 = vcombine.high %v898, %v906
        %v926 = vunpack.c.l.s4 1934713408
        %v927 = vunpack.c.0.s8 %v926
        %v928 = vlaneseq
        %v929 = vshrl.u32 %v928, 7
        %v930 = vsub.s32 %v927, %v929
        %v931 = vrot.slane %v923, %v930
        %v933 = vunpack.c.l.s4 1934713408
        %v934 = vunpack.c.0.s8 %v933
        %v935 = vlaneseq
        %v936 = vshrl.u32 %v935, 7
        %v937 = vsub.s32 %v934, %v936
        %v938 = vrot.slane %v924, %v937
        %v939 = vcombine.low %v915, %v931
        %v940 = vcombine.high %v915, %v931
        %v941 = vcombine.low %v922, %v938
        %v942 = vcombine.high %v922, %v938
        %v943 = vcombine.low %v847, %v854
        %v945 = vunpack.c.l.s4 1983009808
        %v946 = vunpack.c.0.s8 %v945
        %v947 = vlaneseq
        %v948 = vshrl.u32 %v947, 7
        %v949 = vsub.s32 %v946, %v948
        %v950 = vrot.slane %v943, %v949
        %v951 = vcombine.low %v871, %v872
        %v953 = vunpack.c.l.s4 1983009808
        %v954 = vunpack.c.0.s8 %v953
        %v955 = vlaneseq
        %v956 = vshrl.u32 %v955, 7
        %v957 = vsub.s32 %v954, %v956
        %v958 = vrot.slane %v951, %v957
        %v959 = vcombine.low %v863, %v870
        %v961 = vunpack.c.l.s4 1983009808
        %v962 = vunpack.c.0.s8 %v961
        %v963 = vlaneseq
        %v964 = vshrl.u32 %v963, 7
        %v965 = vsub.s32 %v962, %v964
        %v966 = vrot.slane %v959, %v965
        %v967 = vcombine.low %v873, %v874
        %v969 = vunpack.c.l.s4 1983009808
        %v970 = vunpack.c.0.s8 %v969
        %v971 = vlaneseq
        %v972 = vshrl.u32 %v971, 7
        %v973 = vsub.s32 %v970, %v972
        %v974 = vrot.slane %v967, %v973
        %v975 = vcombine.low %v950, %v958
        %v976 = vcombine.high %v950, %v958
        %v978 = vunpack.c.l.s4 1934713408
        %v979 = vunpack.c.0.s8 %v978
        %v980 = vlaneseq
        %v981 = vshrl.u32 %v980, 7
        %v982 = vsub.s32 %v979, %v981
        %v983 = vrot.slane %v975, %v982
        %v985 = vunpack.c.l.s4 1934713408
        %v986 = vunpack.c.0.s8 %v985
        %v987 = vlaneseq
        %v988 = vshrl.u32 %v987, 7
        %v989 = vsub.s32 %v986, %v988
        %v990 = vrot.slane %v976, %v989
        %v991 = vcombine.low %v966, %v974
        %v992 = vcombine.high %v966, %v974
        %v994 = vunpack.c.l.s4 1934713408
        %v995 = vunpack.c.0.s8 %v994
        %v996 = vlaneseq
        %v997 = vshrl.u32 %v996, 7
        %v998 = vsub.s32 %v995, %v997
        %v999 = vrot.slane %v991, %v998
        %v1001 = vunpack.c.l.s4 1934713408
        %v1002 = vunpack.c.0.s8 %v1001
        %v1003 = vlaneseq
        %v1004 = vshrl.u32 %v1003, 7
        %v1005 = vsub.s32 %v1002, %v1004
        %v1006 = vrot.slane %v992, %v1005
        %v1007 = vcombine.low %v983, %v999
        %v1008 = vcombine.high %v983, %v999
        %v1009 = vcombine.low %v990, %v1006
        %v1010 = vcombine.high %v990, %v1006
        %v1011 = vpack.c.bf16 %v939, %v939
        %v1012 = vpack.c.bf16 %v940, %v940
        %v1013 = vpack.c.bf16 %v941, %v941
        %v1014 = vpack.c.bf16 %v942, %v942
        %v1015 = vpack.c.bf16 %v1007, %v1007
        %v1016 = vpack.c.bf16 %v1008, %v1008
        %v1017 = vpack.c.bf16 %v1009, %v1009
        %v1018 = vpack.c.bf16 %v1010, %v1010
        %1021 = vrot.lane.b32.xlu0 %v711, 120
        %v1022 = vpop.permute.xlu0 %1021
        %1023 = vrot.lane.b32.xlu0 %v714, 120
        %v1024 = vpop.permute.xlu0 %1023
        %1025 = vrot.lane.b32.xlu0 %v711, 112
        %v1026 = vpop.permute.xlu0 %1025
        %1027 = vrot.lane.b32.xlu0 %v714, 112
        %v1028 = vpop.permute.xlu0 %1027
        %1029 = vrot.lane.b32.xlu0 %v711, 104
        %v1030 = vpop.permute.xlu0 %1029
        %1031 = vrot.lane.b32.xlu0 %v714, 104
        %v1032 = vpop.permute.xlu0 %1031
        %1033 = vrot.lane.b32.xlu0 %v711, 96
        %v1034 = vpop.permute.xlu0 %1033
        %1035 = vrot.lane.b32.xlu0 %v714, 96
        %v1036 = vpop.permute.xlu0 %1035
        %1037 = vrot.lane.b32.xlu0 %v1022, 96
        %v1038 = vpop.permute.xlu0 %1037
        %1039 = vrot.lane.b32.xlu0 %v1024, 96
        %v1040 = vpop.permute.xlu0 %1039
        %1041 = vrot.lane.b32.xlu0 %v1026, 96
        %v1042 = vpop.permute.xlu0 %1041
        %1043 = vrot.lane.b32.xlu0 %v1028, 96
        %v1044 = vpop.permute.xlu0 %1043
        %1045 = vrot.lane.b32.xlu0 %v1030, 96
        %v1046 = vpop.permute.xlu0 %1045
        %1047 = vrot.lane.b32.xlu0 %v1032, 96
        %v1048 = vpop.permute.xlu0 %1047
        %v1057 = vcombine.low %v1034, %v1042
        %v1058 = vcombine.high %v1034, %v1042
        %v1060 = vunpack.c.l.s4 1983009808
        %v1061 = vunpack.c.0.s8 %v1060
        %v1062 = vlaneseq
        %v1063 = vshrl.u32 %v1062, 7
        %v1064 = vsub.s32 %v1061, %v1063
        %v1065 = vrot.slane %v1057, %v1064
        %v1067 = vunpack.c.l.s4 1983009808
        %v1068 = vunpack.c.0.s8 %v1067
        %v1069 = vlaneseq
        %v1070 = vshrl.u32 %v1069, 7
        %v1071 = vsub.s32 %v1068, %v1070
        %v1072 = vrot.slane %v1058, %v1071
        %v1073 = vcombine.low %v1038, %v1046
        %v1074 = vcombine.high %v1038, %v1046
        %v1076 = vunpack.c.l.s4 1983009808
        %v1077 = vunpack.c.0.s8 %v1076
        %v1078 = vlaneseq
        %v1079 = vshrl.u32 %v1078, 7
        %v1080 = vsub.s32 %v1077, %v1079
        %v1081 = vrot.slane %v1073, %v1080
        %v1083 = vunpack.c.l.s4 1983009808
        %v1084 = vunpack.c.0.s8 %v1083
        %v1085 = vlaneseq
        %v1086 = vshrl.u32 %v1085, 7
        %v1087 = vsub.s32 %v1084, %v1086
        %v1088 = vrot.slane %v1074, %v1087
        %v1089 = vcombine.low %v1065, %v1081
        %v1090 = vcombine.high %v1065, %v1081
        %v1092 = vunpack.c.l.s4 1934713408
        %v1093 = vunpack.c.0.s8 %v1092
        %v1094 = vlaneseq
        %v1095 = vshrl.u32 %v1094, 7
        %v1096 = vsub.s32 %v1093, %v1095
        %v1097 = vrot.slane %v1089, %v1096
        %v1099 = vunpack.c.l.s4 1934713408
        %v1100 = vunpack.c.0.s8 %v1099
        %v1101 = vlaneseq
        %v1102 = vshrl.u32 %v1101, 7
        %v1103 = vsub.s32 %v1100, %v1102
        %v1104 = vrot.slane %v1090, %v1103
        %v1105 = vcombine.low %v1072, %v1088
        %v1106 = vcombine.high %v1072, %v1088
        %v1108 = vunpack.c.l.s4 1934713408
        %v1109 = vunpack.c.0.s8 %v1108
        %v1110 = vlaneseq
        %v1111 = vshrl.u32 %v1110, 7
        %v1112 = vsub.s32 %v1109, %v1111
        %v1113 = vrot.slane %v1105, %v1112
        %v1115 = vunpack.c.l.s4 1934713408
        %v1116 = vunpack.c.0.s8 %v1115
        %v1117 = vlaneseq
        %v1118 = vshrl.u32 %v1117, 7
        %v1119 = vsub.s32 %v1116, %v1118
        %v1120 = vrot.slane %v1106, %v1119
        %v1121 = vcombine.high %v1097, 0.0
        %v1122 = vcombine.high %v1104, 0.0
        %v1123 = vcombine.high %v1113, 0.0
        %v1124 = vcombine.high %v1120, 0.0
        %v1125 = vcombine.low %v1036, %v1044
        %v1126 = vcombine.high %v1036, %v1044
        %v1128 = vunpack.c.l.s4 1983009808
        %v1129 = vunpack.c.0.s8 %v1128
        %v1130 = vlaneseq
        %v1131 = vshrl.u32 %v1130, 7
        %v1132 = vsub.s32 %v1129, %v1131
        %v1133 = vrot.slane %v1125, %v1132
        %v1135 = vunpack.c.l.s4 1983009808
        %v1136 = vunpack.c.0.s8 %v1135
        %v1137 = vlaneseq
        %v1138 = vshrl.u32 %v1137, 7
        %v1139 = vsub.s32 %v1136, %v1138
        %v1140 = vrot.slane %v1126, %v1139
        %v1141 = vcombine.low %v1040, %v1048
        %v1142 = vcombine.high %v1040, %v1048
        %v1144 = vunpack.c.l.s4 1983009808
        %v1145 = vunpack.c.0.s8 %v1144
        %v1146 = vlaneseq
        %v1147 = vshrl.u32 %v1146, 7
        %v1148 = vsub.s32 %v1145, %v1147
        %v1149 = vrot.slane %v1141, %v1148
        %v1151 = vunpack.c.l.s4 1983009808
        %v1152 = vunpack.c.0.s8 %v1151
        %v1153 = vlaneseq
        %v1154 = vshrl.u32 %v1153, 7
        %v1155 = vsub.s32 %v1152, %v1154
        %v1156 = vrot.slane %v1142, %v1155
        %v1157 = vcombine.low %v1133, %v1149
        %v1158 = vcombine.high %v1133, %v1149
        %v1160 = vunpack.c.l.s4 1934713408
        %v1161 = vunpack.c.0.s8 %v1160
        %v1162 = vlaneseq
        %v1163 = vshrl.u32 %v1162, 7
        %v1164 = vsub.s32 %v1161, %v1163
        %v1165 = vrot.slane %v1157, %v1164
        %v1167 = vunpack.c.l.s4 1934713408
        %v1168 = vunpack.c.0.s8 %v1167
        %v1169 = vlaneseq
        %v1170 = vshrl.u32 %v1169, 7
        %v1171 = vsub.s32 %v1168, %v1170
        %v1172 = vrot.slane %v1158, %v1171
        %v1173 = vcombine.low %v1140, %v1156
        %v1174 = vcombine.high %v1140, %v1156
        %v1176 = vunpack.c.l.s4 1934713408
        %v1177 = vunpack.c.0.s8 %v1176
        %v1178 = vlaneseq
        %v1179 = vshrl.u32 %v1178, 7
        %v1180 = vsub.s32 %v1177, %v1179
        %v1181 = vrot.slane %v1173, %v1180
        %v1183 = vunpack.c.l.s4 1934713408
        %v1184 = vunpack.c.0.s8 %v1183
        %v1185 = vlaneseq
        %v1186 = vshrl.u32 %v1185, 7
        %v1187 = vsub.s32 %v1184, %v1186
        %v1188 = vrot.slane %v1174, %v1187
        %v1189 = vcombine.high %v1165, 0.0
        %v1190 = vcombine.high %v1172, 0.0
        %v1191 = vcombine.high %v1181, 0.0
        %v1192 = vcombine.high %v1188, 0.0
        %v1193 = vcombine.low %v1097, %v1104
        %v1195 = vunpack.c.l.s4 1983009808
        %v1196 = vunpack.c.0.s8 %v1195
        %v1197 = vlaneseq
        %v1198 = vshrl.u32 %v1197, 7
        %v1199 = vsub.s32 %v1196, %v1198
        %v1200 = vrot.slane %v1193, %v1199
        %v1201 = vcombine.low %v1121, %v1122
        %v1203 = vunpack.c.l.s4 1983009808
        %v1204 = vunpack.c.0.s8 %v1203
        %v1205 = vlaneseq
        %v1206 = vshrl.u32 %v1205, 7
        %v1207 = vsub.s32 %v1204, %v1206
        %v1208 = vrot.slane %v1201, %v1207
        %v1209 = vcombine.low %v1113, %v1120
        %v1211 = vunpack.c.l.s4 1983009808
        %v1212 = vunpack.c.0.s8 %v1211
        %v1213 = vlaneseq
        %v1214 = vshrl.u32 %v1213, 7
        %v1215 = vsub.s32 %v1212, %v1214
        %v1216 = vrot.slane %v1209, %v1215
        %v1217 = vcombine.low %v1123, %v1124
        %v1219 = vunpack.c.l.s4 1983009808
        %v1220 = vunpack.c.0.s8 %v1219
        %v1221 = vlaneseq
        %v1222 = vshrl.u32 %v1221, 7
        %v1223 = vsub.s32 %v1220, %v1222
        %v1224 = vrot.slane %v1217, %v1223
        %v1225 = vcombine.low %v1200, %v1208
        %v1226 = vcombine.high %v1200, %v1208
        %v1228 = vunpack.c.l.s4 1934713408
        %v1229 = vunpack.c.0.s8 %v1228
        %v1230 = vlaneseq
        %v1231 = vshrl.u32 %v1230, 7
        %v1232 = vsub.s32 %v1229, %v1231
        %v1233 = vrot.slane %v1225, %v1232
        %v1235 = vunpack.c.l.s4 1934713408
        %v1236 = vunpack.c.0.s8 %v1235
        %v1237 = vlaneseq
        %v1238 = vshrl.u32 %v1237, 7
        %v1239 = vsub.s32 %v1236, %v1238
        %v1240 = vrot.slane %v1226, %v1239
        %v1241 = vcombine.low %v1216, %v1224
        %v1242 = vcombine.high %v1216, %v1224
        %v1244 = vunpack.c.l.s4 1934713408
        %v1245 = vunpack.c.0.s8 %v1244
        %v1246 = vlaneseq
        %v1247 = vshrl.u32 %v1246, 7
        %v1248 = vsub.s32 %v1245, %v1247
        %v1249 = vrot.slane %v1241, %v1248
        %v1251 = vunpack.c.l.s4 1934713408
        %v1252 = vunpack.c.0.s8 %v1251
        %v1253 = vlaneseq
        %v1254 = vshrl.u32 %v1253, 7
        %v1255 = vsub.s32 %v1252, %v1254
        %v1256 = vrot.slane %v1242, %v1255
        %v1257 = vcombine.low %v1233, %v1249
        %v1258 = vcombine.high %v1233, %v1249
        %v1259 = vcombine.low %v1240, %v1256
        %v1260 = vcombine.high %v1240, %v1256
        %v1261 = vcombine.low %v1165, %v1172
        %v1263 = vunpack.c.l.s4 1983009808
        %v1264 = vunpack.c.0.s8 %v1263
        %v1265 = vlaneseq
        %v1266 = vshrl.u32 %v1265, 7
        %v1267 = vsub.s32 %v1264, %v1266
        %v1268 = vrot.slane %v1261, %v1267
        %v1269 = vcombine.low %v1189, %v1190
        %v1271 = vunpack.c.l.s4 1983009808
        %v1272 = vunpack.c.0.s8 %v1271
        %v1273 = vlaneseq
        %v1274 = vshrl.u32 %v1273, 7
        %v1275 = vsub.s32 %v1272, %v1274
        %v1276 = vrot.slane %v1269, %v1275
        %v1277 = vcombine.low %v1181, %v1188
        %v1279 = vunpack.c.l.s4 1983009808
        %v1280 = vunpack.c.0.s8 %v1279
        %v1281 = vlaneseq
        %v1282 = vshrl.u32 %v1281, 7
        %v1283 = vsub.s32 %v1280, %v1282
        %v1284 = vrot.slane %v1277, %v1283
        %v1285 = vcombine.low %v1191, %v1192
        %v1287 = vunpack.c.l.s4 1983009808
        %v1288 = vunpack.c.0.s8 %v1287
        %v1289 = vlaneseq
        %v1290 = vshrl.u32 %v1289, 7
        %v1291 = vsub.s32 %v1288, %v1290
        %v1292 = vrot.slane %v1285, %v1291
        %v1293 = vcombine.low %v1268, %v1276
        %v1294 = vcombine.high %v1268, %v1276
        %v1296 = vunpack.c.l.s4 1934713408
        %v1297 = vunpack.c.0.s8 %v1296
        %v1298 = vlaneseq
        %v1299 = vshrl.u32 %v1298, 7
        %v1300 = vsub.s32 %v1297, %v1299
        %v1301 = vrot.slane %v1293, %v1300
        %v1303 = vunpack.c.l.s4 1934713408
        %v1304 = vunpack.c.0.s8 %v1303
        %v1305 = vlaneseq
        %v1306 = vshrl.u32 %v1305, 7
        %v1307 = vsub.s32 %v1304, %v1306
        %v1308 = vrot.slane %v1294, %v1307
        %v1309 = vcombine.low %v1284, %v1292
        %v1310 = vcombine.high %v1284, %v1292
        %v1312 = vunpack.c.l.s4 1934713408
        %v1313 = vunpack.c.0.s8 %v1312
        %v1314 = vlaneseq
        %v1315 = vshrl.u32 %v1314, 7
        %v1316 = vsub.s32 %v1313, %v1315
        %v1317 = vrot.slane %v1309, %v1316
        %v1319 = vunpack.c.l.s4 1934713408
        %v1320 = vunpack.c.0.s8 %v1319
        %v1321 = vlaneseq
        %v1322 = vshrl.u32 %v1321, 7
        %v1323 = vsub.s32 %v1320, %v1322
        %v1324 = vrot.slane %v1310, %v1323
        %v1325 = vcombine.low %v1301, %v1317
        %v1326 = vcombine.high %v1301, %v1317
        %v1327 = vcombine.low %v1308, %v1324
        %v1328 = vcombine.high %v1308, %v1324
        %v1329 = vpack.c.bf16 %v1257, %v1257
        %v1330 = vpack.c.bf16 %v1258, %v1258
        %v1331 = vpack.c.bf16 %v1259, %v1259
        %v1332 = vpack.c.bf16 %v1260, %v1260
        %v1333 = vpack.c.bf16 %v1325, %v1325
        %v1334 = vpack.c.bf16 %v1326, %v1326
        %v1335 = vpack.c.bf16 %v1327, %v1327
        %v1336 = vpack.c.bf16 %v1328, %v1328
        %1337 = vrot.lane.b32.xlu0 %v711, 64
        %v1338 = vpop.permute.xlu0 %1337
        %1339 = vrot.lane.b32.xlu0 %v714, 64
        %v1340 = vpop.permute.xlu0 %1339
        %1341 = vrot.lane.b32.xlu0 %v1022, 64
        %v1342 = vpop.permute.xlu0 %1341
        %1343 = vrot.lane.b32.xlu0 %v1024, 64
        %v1344 = vpop.permute.xlu0 %1343
        %1345 = vrot.lane.b32.xlu0 %v1026, 64
        %v1346 = vpop.permute.xlu0 %1345
        %1347 = vrot.lane.b32.xlu0 %v1028, 64
        %v1348 = vpop.permute.xlu0 %1347
        %1349 = vrot.lane.b32.xlu0 %v1030, 64
        %v1350 = vpop.permute.xlu0 %1349
        %1351 = vrot.lane.b32.xlu0 %v1032, 64
        %v1352 = vpop.permute.xlu0 %1351
        %v1361 = vcombine.low %v1338, %v1346
        %v1362 = vcombine.high %v1338, %v1346
        %v1364 = vunpack.c.l.s4 1983009808
        %v1365 = vunpack.c.0.s8 %v1364
        %v1366 = vlaneseq
        %v1367 = vshrl.u32 %v1366, 7
        %v1368 = vsub.s32 %v1365, %v1367
        %v1369 = vrot.slane %v1361, %v1368
        %v1371 = vunpack.c.l.s4 1983009808
        %v1372 = vunpack.c.0.s8 %v1371
        %v1373 = vlaneseq
        %v1374 = vshrl.u32 %v1373, 7
        %v1375 = vsub.s32 %v1372, %v1374
        %v1376 = vrot.slane %v1362, %v1375
        %v1377 = vcombine.low %v1342, %v1350
        %v1378 = vcombine.high %v1342, %v1350
        %v1380 = vunpack.c.l.s4 1983009808
        %v1381 = vunpack.c.0.s8 %v1380
        %v1382 = vlaneseq
        %v1383 = vshrl.u32 %v1382, 7
        %v1384 = vsub.s32 %v1381, %v1383
        %v1385 = vrot.slane %v1377, %v1384
        %v1387 = vunpack.c.l.s4 1983009808
        %v1388 = vunpack.c.0.s8 %v1387
        %v1389 = vlaneseq
        %v1390 = vshrl.u32 %v1389, 7
        %v1391 = vsub.s32 %v1388, %v1390
        %v1392 = vrot.slane %v1378, %v1391
        %v1393 = vcombine.low %v1369, %v1385
        %v1394 = vcombine.high %v1369, %v1385
        %v1396 = vunpack.c.l.s4 1934713408
        %v1397 = vunpack.c.0.s8 %v1396
        %v1398 = vlaneseq
        %v1399 = vshrl.u32 %v1398, 7
        %v1400 = vsub.s32 %v1397, %v1399
        %v1401 = vrot.slane %v1393, %v1400
        %v1403 = vunpack.c.l.s4 1934713408
        %v1404 = vunpack.c.0.s8 %v1403
        %v1405 = vlaneseq
        %v1406 = vshrl.u32 %v1405, 7
        %v1407 = vsub.s32 %v1404, %v1406
        %v1408 = vrot.slane %v1394, %v1407
        %v1409 = vcombine.low %v1376, %v1392
        %v1410 = vcombine.high %v1376, %v1392
        %v1412 = vunpack.c.l.s4 1934713408
        %v1413 = vunpack.c.0.s8 %v1412
        %v1414 = vlaneseq
        %v1415 = vshrl.u32 %v1414, 7
        %v1416 = vsub.s32 %v1413, %v1415
        %v1417 = vrot.slane %v1409, %v1416
        %v1419 = vunpack.c.l.s4 1934713408
        %v1420 = vunpack.c.0.s8 %v1419
        %v1421 = vlaneseq
        %v1422 = vshrl.u32 %v1421, 7
        %v1423 = vsub.s32 %v1420, %v1422
        %v1424 = vrot.slane %v1410, %v1423
        %v1425 = vcombine.high %v1401, 0.0
        %v1426 = vcombine.high %v1408, 0.0
        %v1427 = vcombine.high %v1417, 0.0
        %v1428 = vcombine.high %v1424, 0.0
        %v1429 = vcombine.low %v1340, %v1348
        %v1430 = vcombine.high %v1340, %v1348
        %v1432 = vunpack.c.l.s4 1983009808
        %v1433 = vunpack.c.0.s8 %v1432
        %v1434 = vlaneseq
        %v1435 = vshrl.u32 %v1434, 7
        %v1436 = vsub.s32 %v1433, %v1435
        %v1437 = vrot.slane %v1429, %v1436
        %v1439 = vunpack.c.l.s4 1983009808
        %v1440 = vunpack.c.0.s8 %v1439
        %v1441 = vlaneseq
        %v1442 = vshrl.u32 %v1441, 7
        %v1443 = vsub.s32 %v1440, %v1442
        %v1444 = vrot.slane %v1430, %v1443
        %v1445 = vcombine.low %v1344, %v1352
        %v1446 = vcombine.high %v1344, %v1352
        %v1448 = vunpack.c.l.s4 1983009808
        %v1449 = vunpack.c.0.s8 %v1448
        %v1450 = vlaneseq
        %v1451 = vshrl.u32 %v1450, 7
        %v1452 = vsub.s32 %v1449, %v1451
        %v1453 = vrot.slane %v1445, %v1452
        %v1455 = vunpack.c.l.s4 1983009808
        %v1456 = vunpack.c.0.s8 %v1455
        %v1457 = vlaneseq
        %v1458 = vshrl.u32 %v1457, 7
        %v1459 = vsub.s32 %v1456, %v1458
        %v1460 = vrot.slane %v1446, %v1459
        %v1461 = vcombine.low %v1437, %v1453
        %v1462 = vcombine.high %v1437, %v1453
        %v1464 = vunpack.c.l.s4 1934713408
        %v1465 = vunpack.c.0.s8 %v1464
        %v1466 = vlaneseq
        %v1467 = vshrl.u32 %v1466, 7
        %v1468 = vsub.s32 %v1465, %v1467
        %v1469 = vrot.slane %v1461, %v1468
        %v1471 = vunpack.c.l.s4 1934713408
        %v1472 = vunpack.c.0.s8 %v1471
        %v1473 = vlaneseq
        %v1474 = vshrl.u32 %v1473, 7
        %v1475 = vsub.s32 %v1472, %v1474
        %v1476 = vrot.slane %v1462, %v1475
        %v1477 = vcombine.low %v1444, %v1460
        %v1478 = vcombine.high %v1444, %v1460
        %v1480 = vunpack.c.l.s4 1934713408
        %v1481 = vunpack.c.0.s8 %v1480
        %v1482 = vlaneseq
        %v1483 = vshrl.u32 %v1482, 7
        %v1484 = vsub.s32 %v1481, %v1483
        %v1485 = vrot.slane %v1477, %v1484
        %v1487 = vunpack.c.l.s4 1934713408
        %v1488 = vunpack.c.0.s8 %v1487
        %v1489 = vlaneseq
        %v1490 = vshrl.u32 %v1489, 7
        %v1491 = vsub.s32 %v1488, %v1490
        %v1492 = vrot.slane %v1478, %v1491
        %v1493 = vcombine.high %v1469, 0.0
        %v1494 = vcombine.high %v1476, 0.0
        %v1495 = vcombine.high %v1485, 0.0
        %v1496 = vcombine.high %v1492, 0.0
        %v1497 = vcombine.low %v1401, %v1408
        %v1499 = vunpack.c.l.s4 1983009808
        %v1500 = vunpack.c.0.s8 %v1499
        %v1501 = vlaneseq
        %v1502 = vshrl.u32 %v1501, 7
        %v1503 = vsub.s32 %v1500, %v1502
        %v1504 = vrot.slane %v1497, %v1503
        %v1505 = vcombine.low %v1425, %v1426
        %v1507 = vunpack.c.l.s4 1983009808
        %v1508 = vunpack.c.0.s8 %v1507
        %v1509 = vlaneseq
        %v1510 = vshrl.u32 %v1509, 7
        %v1511 = vsub.s32 %v1508, %v1510
        %v1512 = vrot.slane %v1505, %v1511
        %v1513 = vcombine.low %v1417, %v1424
        %v1515 = vunpack.c.l.s4 1983009808
        %v1516 = vunpack.c.0.s8 %v1515
        %v1517 = vlaneseq
        %v1518 = vshrl.u32 %v1517, 7
        %v1519 = vsub.s32 %v1516, %v1518
        %v1520 = vrot.slane %v1513, %v1519
        %v1521 = vcombine.low %v1427, %v1428
        %v1523 = vunpack.c.l.s4 1983009808
        %v1524 = vunpack.c.0.s8 %v1523
        %v1525 = vlaneseq
        %v1526 = vshrl.u32 %v1525, 7
        %v1527 = vsub.s32 %v1524, %v1526
        %v1528 = vrot.slane %v1521, %v1527
        %v1529 = vcombine.low %v1504, %v1512
        %v1530 = vcombine.high %v1504, %v1512
        %v1532 = vunpack.c.l.s4 1934713408
        %v1533 = vunpack.c.0.s8 %v1532
        %v1534 = vlaneseq
        %v1535 = vshrl.u32 %v1534, 7
        %v1536 = vsub.s32 %v1533, %v1535
        %v1537 = vrot.slane %v1529, %v1536
        %v1539 = vunpack.c.l.s4 1934713408
        %v1540 = vunpack.c.0.s8 %v1539
        %v1541 = vlaneseq
        %v1542 = vshrl.u32 %v1541, 7
        %v1543 = vsub.s32 %v1540, %v1542
        %v1544 = vrot.slane %v1530, %v1543
        %v1545 = vcombine.low %v1520, %v1528
        %v1546 = vcombine.high %v1520, %v1528
        %v1548 = vunpack.c.l.s4 1934713408
        %v1549 = vunpack.c.0.s8 %v1548
        %v1550 = vlaneseq
        %v1551 = vshrl.u32 %v1550, 7
        %v1552 = vsub.s32 %v1549, %v1551
        %v1553 = vrot.slane %v1545, %v1552
        %v1555 = vunpack.c.l.s4 1934713408
        %v1556 = vunpack.c.0.s8 %v1555
        %v1557 = vlaneseq
        %v1558 = vshrl.u32 %v1557, 7
        %v1559 = vsub.s32 %v1556, %v1558
        %v1560 = vrot.slane %v1546, %v1559
        %v1561 = vcombine.low %v1537, %v1553
        %v1562 = vcombine.high %v1537, %v1553
        %v1563 = vcombine.low %v1544, %v1560
        %v1564 = vcombine.high %v1544, %v1560
        %v1565 = vcombine.low %v1469, %v1476
        %v1567 = vunpack.c.l.s4 1983009808
        %v1568 = vunpack.c.0.s8 %v1567
        %v1569 = vlaneseq
        %v1570 = vshrl.u32 %v1569, 7
        %v1571 = vsub.s32 %v1568, %v1570
        %v1572 = vrot.slane %v1565, %v1571
        %v1573 = vcombine.low %v1493, %v1494
        %v1575 = vunpack.c.l.s4 1983009808
        %v1576 = vunpack.c.0.s8 %v1575
        %v1577 = vlaneseq
        %v1578 = vshrl.u32 %v1577, 7
        %v1579 = vsub.s32 %v1576, %v1578
        %v1580 = vrot.slane %v1573, %v1579
        %v1581 = vcombine.low %v1485, %v1492
        %v1583 = vunpack.c.l.s4 1983009808
        %v1584 = vunpack.c.0.s8 %v1583
        %v1585 = vlaneseq
        %v1586 = vshrl.u32 %v1585, 7
        %v1587 = vsub.s32 %v1584, %v1586
        %v1588 = vrot.slane %v1581, %v1587
        %v1589 = vcombine.low %v1495, %v1496
        %v1591 = vunpack.c.l.s4 1983009808
        %v1592 = vunpack.c.0.s8 %v1591
        %v1593 = vlaneseq
        %v1594 = vshrl.u32 %v1593, 7
        %v1595 = vsub.s32 %v1592, %v1594
        %v1596 = vrot.slane %v1589, %v1595
        %v1597 = vcombine.low %v1572, %v1580
        %v1598 = vcombine.high %v1572, %v1580
        %v1600 = vunpack.c.l.s4 1934713408
        %v1601 = vunpack.c.0.s8 %v1600
        %v1602 = vlaneseq
        %v1603 = vshrl.u32 %v1602, 7
        %v1604 = vsub.s32 %v1601, %v1603
        %v1605 = vrot.slane %v1597, %v1604
        %v1607 = vunpack.c.l.s4 1934713408
        %v1608 = vunpack.c.0.s8 %v1607
        %v1609 = vlaneseq
        %v1610 = vshrl.u32 %v1609, 7
        %v1611 = vsub.s32 %v1608, %v1610
        %v1612 = vrot.slane %v1598, %v1611
        %v1613 = vcombine.low %v1588, %v1596
        %v1614 = vcombine.high %v1588, %v1596
        %v1616 = vunpack.c.l.s4 1934713408
        %v1617 = vunpack.c.0.s8 %v1616
        %v1618 = vlaneseq
        %v1619 = vshrl.u32 %v1618, 7
        %v1620 = vsub.s32 %v1617, %v1619
        %v1621 = vrot.slane %v1613, %v1620
        %v1623 = vunpack.c.l.s4 1934713408
        %v1624 = vunpack.c.0.s8 %v1623
        %v1625 = vlaneseq
        %v1626 = vshrl.u32 %v1625, 7
        %v1627 = vsub.s32 %v1624, %v1626
        %v1628 = vrot.slane %v1614, %v1627
        %v1629 = vcombine.low %v1605, %v1621
        %v1630 = vcombine.high %v1605, %v1621
        %v1631 = vcombine.low %v1612, %v1628
        %v1632 = vcombine.high %v1612, %v1628
        %v1633 = vpack.c.bf16 %v1561, %v1561
        %v1634 = vpack.c.bf16 %v1562, %v1562
        %v1635 = vpack.c.bf16 %v1563, %v1563
        %v1636 = vpack.c.bf16 %v1564, %v1564
        %v1637 = vpack.c.bf16 %v1629, %v1629
        %v1638 = vpack.c.bf16 %v1630, %v1630
        %v1639 = vpack.c.bf16 %v1631, %v1631
        %v1640 = vpack.c.bf16 %v1632, %v1632
        %vm1641 = vcmask 64512
        %v1643 = vsel %vm1641, %v1011, 0
        %v1646 = vsel %vm1641, %v1329, 0
        %1648 = vmatprep.subr.bf16.mxu0 0
        %1649 = vmatpush1.bf16.xpose.msra.mxu0 %v1646
        %1650 = vmatprep.subr.bf16.mxu0 0
        %1651 = vmatpush1.bf16.xpose.msra.mxu0 0
        %1652 = vmatprep.subr.bf16.mxu0 0
        %1653 = vmatpush1.bf16.xpose.msra.mxu0 0
        %1654 = vmatprep.subr.bf16.mxu0 0
        %1655 = vmatpush1.bf16.xpose.msra.mxu0 0
        %1656 = vmatprep.subr.bf16.mxu0 0
        %1657 = vmatpush1.bf16.xpose.msra.mxu0 0
        %1658 = vmatprep.subr.bf16.mxu0 0
        %1659 = vmatpush1.bf16.xpose.msra.mxu0 0
        %1660 = vmatprep.subr.bf16.mxu0 0
        %1661 = vmatpush1.bf16.xpose.msra.mxu0 0
        %1662 = vmatprep.subr.bf16.mxu0 0
        %1663 = vmatpush1.bf16.xpose.msra.mxu0 0
        %1664 = vmatprep.subr.bf16.mxu0 0
        %1665 = vmatpush1.bf16.xpose.msra.mxu0 0
        %1666 = vmatprep.subr.bf16.mxu0 0
        %1667 = vmatpush1.bf16.xpose.msra.mxu0 0
        %1668 = vmatprep.subr.bf16.mxu0 0
        %1669 = vmatpush1.bf16.xpose.msra.mxu0 0
        %1670 = vmatprep.subr.bf16.mxu0 0
        %1671 = vmatpush1.bf16.xpose.msra.mxu0 0
        %1672 = vmatprep.subr.bf16.mxu0 0
        %1673 = vmatpush1.bf16.xpose.msra.mxu0 0
        %1674 = vmatprep.subr.bf16.mxu0 0
        %1675 = vmatpush1.bf16.xpose.msra.mxu0 0
        %1676 = vmatprep.subr.bf16.mxu0 0
        %1677 = vmatpush1.bf16.xpose.msra.mxu0 0
        %1678 = vmatprep.subr.bf16.mxu0 0
        %1679 = vmatpush1.bf16.xpose.msra.mxu0 0
        %1680 = vmatprep.mubr.bf16.mxu0 0
        %1681 = vmatmul.mubr.bf16.gmra.mrb[0].mxu0 %v1643
        %v1682 = vpop.f32.mrb[0].mxu0
        %v1683 = vadd.f32 0.0, %v1682
        %v1684 = vpop.f32.mrb[0].mxu0
        %v1685 = vpop.f32.mrb[0].mxu0
        %v1686 = vpop.f32.mrb[0].mxu0
        %1687 = vdwg.mxu0
        %v1689 = vsel %vm1641, %v1012, 0
        %v1692 = vsel %vm1641, %v1330, 0
        %1694 = vmatprep.subr.bf16.mxu0 0
        %1695 = vmatpush1.bf16.xpose.msra.mxu0 %v1692
        %1696 = vmatprep.subr.bf16.mxu0 0
        %1697 = vmatpush1.bf16.xpose.msra.mxu0 0
        %1698 = vmatprep.subr.bf16.mxu0 0
        %1699 = vmatpush1.bf16.xpose.msra.mxu0 0
        %1700 = vmatprep.subr.bf16.mxu0 0
        %1701 = vmatpush1.bf16.xpose.msra.mxu0 0
        %1702 = vmatprep.subr.bf16.mxu0 0
        %1703 = vmatpush1.bf16.xpose.msra.mxu0 0
        %1704 = vmatprep.subr.bf16.mxu0 0
        %1705 = vmatpush1.bf16.xpose.msra.mxu0 0
        %1706 = vmatprep.subr.bf16.mxu0 0
        %1707 = vmatpush1.bf16.xpose.msra.mxu0 0
        %1708 = vmatprep.subr.bf16.mxu0 0
        %1709 = vmatpush1.bf16.xpose.msra.mxu0 0
        %1710 = vmatprep.subr.bf16.mxu0 0
        %1711 = vmatpush1.bf16.xpose.msra.mxu0 0
        %1712 = vmatprep.subr.bf16.mxu0 0
        %1713 = vmatpush1.bf16.xpose.msra.mxu0 0
        %1714 = vmatprep.subr.bf16.mxu0 0
        %1715 = vmatpush1.bf16.xpose.msra.mxu0 0
        %1716 = vmatprep.subr.bf16.mxu0 0
        %1717 = vmatpush1.bf16.xpose.msra.mxu0 0
        %1718 = vmatprep.subr.bf16.mxu0 0
        %1719 = vmatpush1.bf16.xpose.msra.mxu0 0
        %1720 = vmatprep.subr.bf16.mxu0 0
        %1721 = vmatpush1.bf16.xpose.msra.mxu0 0
        %1722 = vmatprep.subr.bf16.mxu0 0
        %1723 = vmatpush1.bf16.xpose.msra.mxu0 0
        %1724 = vmatprep.subr.bf16.mxu0 0
        %1725 = vmatpush1.bf16.xpose.msra.mxu0 0
        %1726 = vmatprep.mubr.bf16.mxu0 0
        %1727 = vmatmul.mubr.bf16.gmra.mrb[0].mxu0 %v1689
        %v1728 = vpop.f32.mrb[0].mxu0
        %v1729 = vadd.f32 0.0, %v1728
        %v1730 = vpop.f32.mrb[0].mxu0
        %v1731 = vpop.f32.mrb[0].mxu0
        %v1732 = vpop.f32.mrb[0].mxu0
        %1733 = vdwg.mxu0
        %v1735 = vsel %vm1641, %v1013, 0
        %v1738 = vsel %vm1641, %v1331, 0
        %1740 = vmatprep.subr.bf16.mxu0 0
        %1741 = vmatpush1.bf16.xpose.msra.mxu0 %v1738
        %1742 = vmatprep.subr.bf16.mxu0 0
        %1743 = vmatpush1.bf16.xpose.msra.mxu0 0
        %1744 = vmatprep.subr.bf16.mxu0 0
        %1745 = vmatpush1.bf16.xpose.msra.mxu0 0
        %1746 = vmatprep.subr.bf16.mxu0 0
        %1747 = vmatpush1.bf16.xpose.msra.mxu0 0
        %1748 = vmatprep.subr.bf16.mxu0 0
        %1749 = vmatpush1.bf16.xpose.msra.mxu0 0
        %1750 = vmatprep.subr.bf16.mxu0 0
        %1751 = vmatpush1.bf16.xpose.msra.mxu0 0
        %1752 = vmatprep.subr.bf16.mxu0 0
        %1753 = vmatpush1.bf16.xpose.msra.mxu0 0
        %1754 = vmatprep.subr.bf16.mxu0 0
        %1755 = vmatpush1.bf16.xpose.msra.mxu0 0
        %1756 = vmatprep.subr.bf16.mxu0 0
        %1757 = vmatpush1.bf16.xpose.msra.mxu0 0
        %1758 = vmatprep.subr.bf16.mxu0 0
        %1759 = vmatpush1.bf16.xpose.msra.mxu0 0
        %1760 = vmatprep.subr.bf16.mxu0 0
        %1761 = vmatpush1.bf16.xpose.msra.mxu0 0
        %1762 = vmatprep.subr.bf16.mxu0 0
        %1763 = vmatpush1.bf16.xpose.msra.mxu0 0
        %1764 = vmatprep.subr.bf16.mxu0 0
        %1765 = vmatpush1.bf16.xpose.msra.mxu0 0
        %1766 = vmatprep.subr.bf16.mxu0 0
        %1767 = vmatpush1.bf16.xpose.msra.mxu0 0
        %1768 = vmatprep.subr.bf16.mxu0 0
        %1769 = vmatpush1.bf16.xpose.msra.mxu0 0
        %1770 = vmatprep.subr.bf16.mxu0 0
        %1771 = vmatpush1.bf16.xpose.msra.mxu0 0
        %1772 = vmatprep.mubr.bf16.mxu0 0
        %1773 = vmatmul.mubr.bf16.gmra.mrb[0].mxu0 %v1735
        %v1774 = vpop.f32.mrb[0].mxu0
        %v1775 = vadd.f32 0.0, %v1774
        %v1776 = vpop.f32.mrb[0].mxu0
        %v1777 = vpop.f32.mrb[0].mxu0
        %v1778 = vpop.f32.mrb[0].mxu0
        %1779 = vdwg.mxu0
        %v1781 = vsel %vm1641, %v1014, 0
        %v1784 = vsel %vm1641, %v1332, 0
        %1786 = vmatprep.subr.bf16.mxu0 0
        %1787 = vmatpush1.bf16.xpose.msra.mxu0 %v1784
        %1788 = vmatprep.subr.bf16.mxu0 0
        %1789 = vmatpush1.bf16.xpose.msra.mxu0 0
        %1790 = vmatprep.subr.bf16.mxu0 0
        %1791 = vmatpush1.bf16.xpose.msra.mxu0 0
        %1792 = vmatprep.subr.bf16.mxu0 0
        %1793 = vmatpush1.bf16.xpose.msra.mxu0 0
        %1794 = vmatprep.subr.bf16.mxu0 0
        %1795 = vmatpush1.bf16.xpose.msra.mxu0 0
        %1796 = vmatprep.subr.bf16.mxu0 0
        %1797 = vmatpush1.bf16.xpose.msra.mxu0 0
        %1798 = vmatprep.subr.bf16.mxu0 0
        %1799 = vmatpush1.bf16.xpose.msra.mxu0 0
        %1800 = vmatprep.subr.bf16.mxu0 0
        %1801 = vmatpush1.bf16.xpose.msra.mxu0 0
        %1802 = vmatprep.subr.bf16.mxu0 0
        %1803 = vmatpush1.bf16.xpose.msra.mxu0 0
        %1804 = vmatprep.subr.bf16.mxu0 0
        %1805 = vmatpush1.bf16.xpose.msra.mxu0 0
        %1806 = vmatprep.subr.bf16.mxu0 0
        %1807 = vmatpush1.bf16.xpose.msra.mxu0 0
        %1808 = vmatprep.subr.bf16.mxu0 0
        %1809 = vmatpush1.bf16.xpose.msra.mxu0 0
        %1810 = vmatprep.subr.bf16.mxu0 0
        %1811 = vmatpush1.bf16.xpose.msra.mxu0 0
        %1812 = vmatprep.subr.bf16.mxu0 0
        %1813 = vmatpush1.bf16.xpose.msra.mxu0 0
        %1814 = vmatprep.subr.bf16.mxu0 0
        %1815 = vmatpush1.bf16.xpose.msra.mxu0 0
        %1816 = vmatprep.subr.bf16.mxu0 0
        %1817 = vmatpush1.bf16.xpose.msra.mxu0 0
        %1818 = vmatprep.mubr.bf16.mxu0 0
        %1819 = vmatmul.mubr.bf16.gmra.mrb[0].mxu0 %v1781
        %v1820 = vpop.f32.mrb[0].mxu0
        %v1821 = vadd.f32 0.0, %v1820
        %v1822 = vpop.f32.mrb[0].mxu0
        %v1823 = vpop.f32.mrb[0].mxu0
        %v1824 = vpop.f32.mrb[0].mxu0
        %1825 = vdwg.mxu0
        %v1827 = vsel %vm1641, %v1015, 0
        %v1830 = vsel %vm1641, %v1333, 0
        %1832 = vmatprep.subr.bf16.mxu0 0
        %1833 = vmatpush1.bf16.xpose.msra.mxu0 %v1830
        %1834 = vmatprep.subr.bf16.mxu0 0
        %1835 = vmatpush1.bf16.xpose.msra.mxu0 0
        %1836 = vmatprep.subr.bf16.mxu0 0
        %1837 = vmatpush1.bf16.xpose.msra.mxu0 0
        %1838 = vmatprep.subr.bf16.mxu0 0
        %1839 = vmatpush1.bf16.xpose.msra.mxu0 0
        %1840 = vmatprep.subr.bf16.mxu0 0
        %1841 = vmatpush1.bf16.xpose.msra.mxu0 0
        %1842 = vmatprep.subr.bf16.mxu0 0
        %1843 = vmatpush1.bf16.xpose.msra.mxu0 0
        %1844 = vmatprep.subr.bf16.mxu0 0
        %1845 = vmatpush1.bf16.xpose.msra.mxu0 0
        %1846 = vmatprep.subr.bf16.mxu0 0
        %1847 = vmatpush1.bf16.xpose.msra.mxu0 0
        %1848 = vmatprep.subr.bf16.mxu0 0
        %1849 = vmatpush1.bf16.xpose.msra.mxu0 0
        %1850 = vmatprep.subr.bf16.mxu0 0
        %1851 = vmatpush1.bf16.xpose.msra.mxu0 0
        %1852 = vmatprep.subr.bf16.mxu0 0
        %1853 = vmatpush1.bf16.xpose.msra.mxu0 0
        %1854 = vmatprep.subr.bf16.mxu0 0
        %1855 = vmatpush1.bf16.xpose.msra.mxu0 0
        %1856 = vmatprep.subr.bf16.mxu0 0
        %1857 = vmatpush1.bf16.xpose.msra.mxu0 0
        %1858 = vmatprep.subr.bf16.mxu0 0
        %1859 = vmatpush1.bf16.xpose.msra.mxu0 0
        %1860 = vmatprep.subr.bf16.mxu0 0
        %1861 = vmatpush1.bf16.xpose.msra.mxu0 0
        %1862 = vmatprep.subr.bf16.mxu0 0
        %1863 = vmatpush1.bf16.xpose.msra.mxu0 0
        %1864 = vmatprep.mubr.bf16.mxu0 0
        %1865 = vmatmul.mubr.bf16.gmra.mrb[0].mxu0 %v1827
        %v1866 = vpop.f32.mrb[0].mxu0
        %v1867 = vadd.f32 0.0, %v1866
        %v1868 = vpop.f32.mrb[0].mxu0
        %v1869 = vpop.f32.mrb[0].mxu0
        %v1870 = vpop.f32.mrb[0].mxu0
        %1871 = vdwg.mxu0
        %v1873 = vsel %vm1641, %v1016, 0
        %v1876 = vsel %vm1641, %v1334, 0
        %1878 = vmatprep.subr.bf16.mxu0 0
        %1879 = vmatpush1.bf16.xpose.msra.mxu0 %v1876
        %1880 = vmatprep.subr.bf16.mxu0 0
        %1881 = vmatpush1.bf16.xpose.msra.mxu0 0
        %1882 = vmatprep.subr.bf16.mxu0 0
        %1883 = vmatpush1.bf16.xpose.msra.mxu0 0
        %1884 = vmatprep.subr.bf16.mxu0 0
        %1885 = vmatpush1.bf16.xpose.msra.mxu0 0
        %1886 = vmatprep.subr.bf16.mxu0 0
        %1887 = vmatpush1.bf16.xpose.msra.mxu0 0
        %1888 = vmatprep.subr.bf16.mxu0 0
        %1889 = vmatpush1.bf16.xpose.msra.mxu0 0
        %1890 = vmatprep.subr.bf16.mxu0 0
        %1891 = vmatpush1.bf16.xpose.msra.mxu0 0
        %1892 = vmatprep.subr.bf16.mxu0 0
        %1893 = vmatpush1.bf16.xpose.msra.mxu0 0
        %1894 = vmatprep.subr.bf16.mxu0 0
        %1895 = vmatpush1.bf16.xpose.msra.mxu0 0
        %1896 = vmatprep.subr.bf16.mxu0 0
        %1897 = vmatpush1.bf16.xpose.msra.mxu0 0
        %1898 = vmatprep.subr.bf16.mxu0 0
        %1899 = vmatpush1.bf16.xpose.msra.mxu0 0
        %1900 = vmatprep.subr.bf16.mxu0 0
        %1901 = vmatpush1.bf16.xpose.msra.mxu0 0
        %1902 = vmatprep.subr.bf16.mxu0 0
        %1903 = vmatpush1.bf16.xpose.msra.mxu0 0
        %1904 = vmatprep.subr.bf16.mxu0 0
        %1905 = vmatpush1.bf16.xpose.msra.mxu0 0
        %1906 = vmatprep.subr.bf16.mxu0 0
        %1907 = vmatpush1.bf16.xpose.msra.mxu0 0
        %1908 = vmatprep.subr.bf16.mxu0 0
        %1909 = vmatpush1.bf16.xpose.msra.mxu0 0
        %1910 = vmatprep.mubr.bf16.mxu0 0
        %1911 = vmatmul.mubr.bf16.gmra.mrb[0].mxu0 %v1873
        %v1912 = vpop.f32.mrb[0].mxu0
        %v1913 = vadd.f32 0.0, %v1912
        %v1914 = vpop.f32.mrb[0].mxu0
        %v1915 = vpop.f32.mrb[0].mxu0
        %v1916 = vpop.f32.mrb[0].mxu0
        %1917 = vdwg.mxu0
        %v1919 = vsel %vm1641, %v1017, 0
        %v1922 = vsel %vm1641, %v1335, 0
        %1924 = vmatprep.subr.bf16.mxu0 0
        %1925 = vmatpush1.bf16.xpose.msra.mxu0 %v1922
        %1926 = vmatprep.subr.bf16.mxu0 0
        %1927 = vmatpush1.bf16.xpose.msra.mxu0 0
        %1928 = vmatprep.subr.bf16.mxu0 0
        %1929 = vmatpush1.bf16.xpose.msra.mxu0 0
        %1930 = vmatprep.subr.bf16.mxu0 0
        %1931 = vmatpush1.bf16.xpose.msra.mxu0 0
        %1932 = vmatprep.subr.bf16.mxu0 0
        %1933 = vmatpush1.bf16.xpose.msra.mxu0 0
        %1934 = vmatprep.subr.bf16.mxu0 0
        %1935 = vmatpush1.bf16.xpose.msra.mxu0 0
        %1936 = vmatprep.subr.bf16.mxu0 0
        %1937 = vmatpush1.bf16.xpose.msra.mxu0 0
        %1938 = vmatprep.subr.bf16.mxu0 0
        %1939 = vmatpush1.bf16.xpose.msra.mxu0 0
        %1940 = vmatprep.subr.bf16.mxu0 0
        %1941 = vmatpush1.bf16.xpose.msra.mxu0 0
        %1942 = vmatprep.subr.bf16.mxu0 0
        %1943 = vmatpush1.bf16.xpose.msra.mxu0 0
        %1944 = vmatprep.subr.bf16.mxu0 0
        %1945 = vmatpush1.bf16.xpose.msra.mxu0 0
        %1946 = vmatprep.subr.bf16.mxu0 0
        %1947 = vmatpush1.bf16.xpose.msra.mxu0 0
        %1948 = vmatprep.subr.bf16.mxu0 0
        %1949 = vmatpush1.bf16.xpose.msra.mxu0 0
        %1950 = vmatprep.subr.bf16.mxu0 0
        %1951 = vmatpush1.bf16.xpose.msra.mxu0 0
        %1952 = vmatprep.subr.bf16.mxu0 0
        %1953 = vmatpush1.bf16.xpose.msra.mxu0 0
        %1954 = vmatprep.subr.bf16.mxu0 0
        %1955 = vmatpush1.bf16.xpose.msra.mxu0 0
        %1956 = vmatprep.mubr.bf16.mxu0 0
        %1957 = vmatmul.mubr.bf16.gmra.mrb[0].mxu0 %v1919
        %v1958 = vpop.f32.mrb[0].mxu0
        %v1959 = vadd.f32 0.0, %v1958
        %v1960 = vpop.f32.mrb[0].mxu0
        %v1961 = vpop.f32.mrb[0].mxu0
        %v1962 = vpop.f32.mrb[0].mxu0
        %1963 = vdwg.mxu0
        %v1965 = vsel %vm1641, %v1018, 0
        %v1968 = vsel %vm1641, %v1336, 0
        %1970 = vmatprep.subr.bf16.mxu0 0
        %1971 = vmatpush1.bf16.xpose.msra.mxu0 %v1968
        %1972 = vmatprep.subr.bf16.mxu0 0
        %1973 = vmatpush1.bf16.xpose.msra.mxu0 0
        %1974 = vmatprep.subr.bf16.mxu0 0
        %1975 = vmatpush1.bf16.xpose.msra.mxu0 0
        %1976 = vmatprep.subr.bf16.mxu0 0
        %1977 = vmatpush1.bf16.xpose.msra.mxu0 0
        %1978 = vmatprep.subr.bf16.mxu0 0
        %1979 = vmatpush1.bf16.xpose.msra.mxu0 0
        %1980 = vmatprep.subr.bf16.mxu0 0
        %1981 = vmatpush1.bf16.xpose.msra.mxu0 0
        %1982 = vmatprep.subr.bf16.mxu0 0
        %1983 = vmatpush1.bf16.xpose.msra.mxu0 0
        %1984 = vmatprep.subr.bf16.mxu0 0
        %1985 = vmatpush1.bf16.xpose.msra.mxu0 0
        %1986 = vmatprep.subr.bf16.mxu0 0
        %1987 = vmatpush1.bf16.xpose.msra.mxu0 0
        %1988 = vmatprep.subr.bf16.mxu0 0
        %1989 = vmatpush1.bf16.xpose.msra.mxu0 0
        %1990 = vmatprep.subr.bf16.mxu0 0
        %1991 = vmatpush1.bf16.xpose.msra.mxu0 0
        %1992 = vmatprep.subr.bf16.mxu0 0
        %1993 = vmatpush1.bf16.xpose.msra.mxu0 0
        %1994 = vmatprep.subr.bf16.mxu0 0
        %1995 = vmatpush1.bf16.xpose.msra.mxu0 0
        %1996 = vmatprep.subr.bf16.mxu0 0
        %1997 = vmatpush1.bf16.xpose.msra.mxu0 0
        %1998 = vmatprep.subr.bf16.mxu0 0
        %1999 = vmatpush1.bf16.xpose.msra.mxu0 0
        %2000 = vmatprep.subr.bf16.mxu0 0
        %2001 = vmatpush1.bf16.xpose.msra.mxu0 0
        %2002 = vmatprep.mubr.bf16.mxu0 0
        %2003 = vmatmul.mubr.bf16.gmra.mrb[0].mxu0 %v1965
        %v2004 = vpop.f32.mrb[0].mxu0
        %v2005 = vadd.f32 0.0, %v2004
        %v2006 = vpop.f32.mrb[0].mxu0
        %v2007 = vpop.f32.mrb[0].mxu0
        %v2008 = vpop.f32.mrb[0].mxu0
        %2009 = vdwg.mxu0
        %v2010 = vsel %vm1641, %v1683, -inf
        %2011 = vmax.xlane.f32.xlu0 %v2010
        %v2012 = vpop.xlane.xlu0 %2011
        %v2013 = vsel %vm1641, %v1729, -inf
        %2014 = vmax.xlane.f32.xlu0 %v2013
        %v2015 = vpop.xlane.xlu0 %2014
        %v2016 = vsel %vm1641, %v1775, -inf
        %2017 = vmax.xlane.f32.xlu0 %v2016
        %v2018 = vpop.xlane.xlu0 %2017
        %v2019 = vsel %vm1641, %v1821, -inf
        %2020 = vmax.xlane.f32.xlu0 %v2019
        %v2021 = vpop.xlane.xlu0 %2020
        %v2022 = vsel %vm1641, %v1867, -inf
        %2023 = vmax.xlane.f32.xlu0 %v2022
        %v2024 = vpop.xlane.xlu0 %2023
        %v2025 = vsel %vm1641, %v1913, -inf
        %2026 = vmax.xlane.f32.xlu0 %v2025
        %v2027 = vpop.xlane.xlu0 %2026
        %v2028 = vsel %vm1641, %v1959, -inf
        %2029 = vmax.xlane.f32.xlu0 %v2028
        %v2030 = vpop.xlane.xlu0 %2029
        %v2031 = vsel %vm1641, %v2005, -inf
        %2032 = vmax.xlane.f32.xlu0 %v2031
        %v2033 = vpop.xlane.xlu0 %2032
        %v2034 = vsub.f32 %v1683, %v2012
        %v2035 = vsub.f32 %v1729, %v2015
        %v2036 = vsub.f32 %v1775, %v2018
        %v2037 = vsub.f32 %v1821, %v2021
        %v2038 = vsub.f32 %v1867, %v2024
        %v2039 = vsub.f32 %v1913, %v2027
        %v2040 = vsub.f32 %v1959, %v2030
        %v2041 = vsub.f32 %v2005, %v2033
        %v2042 = vmul.f32 %v2034, 1.442695
        %v2043 = vpow.pop %v2042
        %v2044 = vmul.f32 %v2035, 1.442695
        %v2045 = vpow.pop %v2044
        %v2046 = vmul.f32 %v2036, 1.442695
        %v2047 = vpow.pop %v2046
        %v2048 = vmul.f32 %v2037, 1.442695
        %v2049 = vpow.pop %v2048
        %v2050 = vmul.f32 %v2038, 1.442695
        %v2051 = vpow.pop %v2050
        %v2052 = vmul.f32 %v2039, 1.442695
        %v2053 = vpow.pop %v2052
        %v2054 = vmul.f32 %v2040, 1.442695
        %v2055 = vpow.pop %v2054
        %v2056 = vmul.f32 %v2041, 1.442695
        %v2057 = vpow.pop %v2056
        %v2058 = vsel %vm1641, %v2043, 0.0
        %2059 = vadd.xlane.f32.xlu0 %v2058
        %v2060 = vpop.xlane.xlu0 %2059
        %v2061 = vsel %vm1641, %v2045, 0.0
        %2062 = vadd.xlane.f32.xlu0 %v2061
        %v2063 = vpop.xlane.xlu0 %2062
        %v2064 = vsel %vm1641, %v2047, 0.0
        %2065 = vadd.xlane.f32.xlu0 %v2064
        %v2066 = vpop.xlane.xlu0 %2065
        %v2067 = vsel %vm1641, %v2049, 0.0
        %2068 = vadd.xlane.f32.xlu0 %v2067
        %v2069 = vpop.xlane.xlu0 %2068
        %v2070 = vsel %vm1641, %v2051, 0.0
        %2071 = vadd.xlane.f32.xlu0 %v2070
        %v2072 = vpop.xlane.xlu0 %2071
        %v2073 = vsel %vm1641, %v2053, 0.0
        %2074 = vadd.xlane.f32.xlu0 %v2073
        %v2075 = vpop.xlane.xlu0 %2074
        %v2076 = vsel %vm1641, %v2055, 0.0
        %2077 = vadd.xlane.f32.xlu0 %v2076
        %v2078 = vpop.xlane.xlu0 %2077
        %v2079 = vsel %vm1641, %v2057, 0.0
        %2080 = vadd.xlane.f32.xlu0 %v2079
        %v2081 = vpop.xlane.xlu0 %2080
        %v2082 = vpack.c.bf16 %v2043, %v2043
        %v2083 = vpack.c.bf16 %v2045, %v2045
        %v2084 = vpack.c.bf16 %v2047, %v2047
        %v2085 = vpack.c.bf16 %v2049, %v2049
        %v2086 = vpack.c.bf16 %v2051, %v2051
        %v2087 = vpack.c.bf16 %v2053, %v2053
        %v2088 = vpack.c.bf16 %v2055, %v2055
        %v2089 = vpack.c.bf16 %v2057, %v2057
        %v2091 = vsel %vm1641, %v2082, 0
        %vm2093 = vcmask 1043456
        %v2095 = vsel %vm2093, %v1633, 0
        %2097 = vmatprep.subr.bf16.mxu0 0
        %2098 = vmatpush1.bf16.msra.mxu0 %v2095
        %2099 = vmatprep.subr.bf16.mxu0 0
        %2100 = vmatpush1.bf16.msra.mxu0 0
        %2101 = vmatprep.subr.bf16.mxu0 0
        %2102 = vmatpush1.bf16.msra.mxu0 0
        %2103 = vmatprep.subr.bf16.mxu0 0
        %2104 = vmatpush1.bf16.msra.mxu0 0
        %2105 = vmatprep.subr.bf16.mxu0 0
        %2106 = vmatpush1.bf16.msra.mxu0 0
        %2107 = vmatprep.subr.bf16.mxu0 0
        %2108 = vmatpush1.bf16.msra.mxu0 0
        %2109 = vmatprep.subr.bf16.mxu0 0
        %2110 = vmatpush1.bf16.msra.mxu0 0
        %2111 = vmatprep.subr.bf16.mxu0 0
        %2112 = vmatpush1.bf16.msra.mxu0 0
        %2113 = vmatprep.subr.bf16.mxu0 0
        %2114 = vmatpush1.bf16.msra.mxu0 0
        %2115 = vmatprep.subr.bf16.mxu0 0
        %2116 = vmatpush1.bf16.msra.mxu0 0
        %2117 = vmatprep.subr.bf16.mxu0 0
        %2118 = vmatpush1.bf16.msra.mxu0 0
        %2119 = vmatprep.subr.bf16.mxu0 0
        %2120 = vmatpush1.bf16.msra.mxu0 0
        %2121 = vmatprep.subr.bf16.mxu0 0
        %2122 = vmatpush1.bf16.msra.mxu0 0
        %2123 = vmatprep.subr.bf16.mxu0 0
        %2124 = vmatpush1.bf16.msra.mxu0 0
        %2125 = vmatprep.subr.bf16.mxu0 0
        %2126 = vmatpush1.bf16.msra.mxu0 0
        %2127 = vmatprep.subr.bf16.mxu0 0
        %2128 = vmatpush1.bf16.msra.mxu0 0
        %2129 = vmatprep.mubr.bf16.mxu0 0
        %2130 = vmatmul.mubr.bf16.gmra.mrb[0].mxu0 %v2091
        %v2131 = vpop.f32.mrb[0].mxu0
        %v2132 = vadd.f32 0.0, %v2131
        %v2133 = vpop.f32.mrb[0].mxu0
        %v2134 = vpop.f32.mrb[0].mxu0
        %v2135 = vpop.f32.mrb[0].mxu0
        %2136 = vdwg.mxu0
        %v2138 = vsel %vm1641, %v2083, 0
        %v2141 = vsel %vm2093, %v1634, 0
        %2143 = vmatprep.subr.bf16.mxu0 0
        %2144 = vmatpush1.bf16.msra.mxu0 %v2141
        %2145 = vmatprep.subr.bf16.mxu0 0
        %2146 = vmatpush1.bf16.msra.mxu0 0
        %2147 = vmatprep.subr.bf16.mxu0 0
        %2148 = vmatpush1.bf16.msra.mxu0 0
        %2149 = vmatprep.subr.bf16.mxu0 0
        %2150 = vmatpush1.bf16.msra.mxu0 0
        %2151 = vmatprep.subr.bf16.mxu0 0
        %2152 = vmatpush1.bf16.msra.mxu0 0
        %2153 = vmatprep.subr.bf16.mxu0 0
        %2154 = vmatpush1.bf16.msra.mxu0 0
        %2155 = vmatprep.subr.bf16.mxu0 0
        %2156 = vmatpush1.bf16.msra.mxu0 0
        %2157 = vmatprep.subr.bf16.mxu0 0
        %2158 = vmatpush1.bf16.msra.mxu0 0
        %2159 = vmatprep.subr.bf16.mxu0 0
        %2160 = vmatpush1.bf16.msra.mxu0 0
        %2161 = vmatprep.subr.bf16.mxu0 0
        %2162 = vmatpush1.bf16.msra.mxu0 0
        %2163 = vmatprep.subr.bf16.mxu0 0
        %2164 = vmatpush1.bf16.msra.mxu0 0
        %2165 = vmatprep.subr.bf16.mxu0 0
        %2166 = vmatpush1.bf16.msra.mxu0 0
        %2167 = vmatprep.subr.bf16.mxu0 0
        %2168 = vmatpush1.bf16.msra.mxu0 0
        %2169 = vmatprep.subr.bf16.mxu0 0
        %2170 = vmatpush1.bf16.msra.mxu0 0
        %2171 = vmatprep.subr.bf16.mxu0 0
        %2172 = vmatpush1.bf16.msra.mxu0 0
        %2173 = vmatprep.subr.bf16.mxu0 0
        %2174 = vmatpush1.bf16.msra.mxu0 0
        %2175 = vmatprep.mubr.bf16.mxu0 0
        %2176 = vmatmul.mubr.bf16.gmra.mrb[0].mxu0 %v2138
        %v2177 = vpop.f32.mrb[0].mxu0
        %v2178 = vadd.f32 0.0, %v2177
        %v2179 = vpop.f32.mrb[0].mxu0
        %v2180 = vpop.f32.mrb[0].mxu0
        %v2181 = vpop.f32.mrb[0].mxu0
        %2182 = vdwg.mxu0
        %v2184 = vsel %vm1641, %v2084, 0
        %v2187 = vsel %vm2093, %v1635, 0
        %2189 = vmatprep.subr.bf16.mxu0 0
        %2190 = vmatpush1.bf16.msra.mxu0 %v2187
        %2191 = vmatprep.subr.bf16.mxu0 0
        %2192 = vmatpush1.bf16.msra.mxu0 0
        %2193 = vmatprep.subr.bf16.mxu0 0
        %2194 = vmatpush1.bf16.msra.mxu0 0
        %2195 = vmatprep.subr.bf16.mxu0 0
        %2196 = vmatpush1.bf16.msra.mxu0 0
        %2197 = vmatprep.subr.bf16.mxu0 0
        %2198 = vmatpush1.bf16.msra.mxu0 0
        %2199 = vmatprep.subr.bf16.mxu0 0
        %2200 = vmatpush1.bf16.msra.mxu0 0
        %2201 = vmatprep.subr.bf16.mxu0 0
        %2202 = vmatpush1.bf16.msra.mxu0 0
        %2203 = vmatprep.subr.bf16.mxu0 0
        %2204 = vmatpush1.bf16.msra.mxu0 0
        %2205 = vmatprep.subr.bf16.mxu0 0
        %2206 = vmatpush1.bf16.msra.mxu0 0
        %2207 = vmatprep.subr.bf16.mxu0 0
        %2208 = vmatpush1.bf16.msra.mxu0 0
        %2209 = vmatprep.subr.bf16.mxu0 0
        %2210 = vmatpush1.bf16.msra.mxu0 0
        %2211 = vmatprep.subr.bf16.mxu0 0
        %2212 = vmatpush1.bf16.msra.mxu0 0
        %2213 = vmatprep.subr.bf16.mxu0 0
        %2214 = vmatpush1.bf16.msra.mxu0 0
        %2215 = vmatprep.subr.bf16.mxu0 0
        %2216 = vmatpush1.bf16.msra.mxu0 0
        %2217 = vmatprep.subr.bf16.mxu0 0
        %2218 = vmatpush1.bf16.msra.mxu0 0
        %2219 = vmatprep.subr.bf16.mxu0 0
        %2220 = vmatpush1.bf16.msra.mxu0 0
        %2221 = vmatprep.mubr.bf16.mxu0 0
        %2222 = vmatmul.mubr.bf16.gmra.mrb[0].mxu0 %v2184
        %v2223 = vpop.f32.mrb[0].mxu0
        %v2224 = vadd.f32 0.0, %v2223
        %v2225 = vpop.f32.mrb[0].mxu0
        %v2226 = vpop.f32.mrb[0].mxu0
        %v2227 = vpop.f32.mrb[0].mxu0
        %2228 = vdwg.mxu0
        %v2230 = vsel %vm1641, %v2085, 0
        %v2233 = vsel %vm2093, %v1636, 0
        %2235 = vmatprep.subr.bf16.mxu0 0
        %2236 = vmatpush1.bf16.msra.mxu0 %v2233
        %2237 = vmatprep.subr.bf16.mxu0 0
        %2238 = vmatpush1.bf16.msra.mxu0 0
        %2239 = vmatprep.subr.bf16.mxu0 0
        %2240 = vmatpush1.bf16.msra.mxu0 0
        %2241 = vmatprep.subr.bf16.mxu0 0
        %2242 = vmatpush1.bf16.msra.mxu0 0
        %2243 = vmatprep.subr.bf16.mxu0 0
        %2244 = vmatpush1.bf16.msra.mxu0 0
        %2245 = vmatprep.subr.bf16.mxu0 0
        %2246 = vmatpush1.bf16.msra.mxu0 0
        %2247 = vmatprep.subr.bf16.mxu0 0
        %2248 = vmatpush1.bf16.msra.mxu0 0
        %2249 = vmatprep.subr.bf16.mxu0 0
        %2250 = vmatpush1.bf16.msra.mxu0 0
        %2251 = vmatprep.subr.bf16.mxu0 0
        %2252 = vmatpush1.bf16.msra.mxu0 0
        %2253 = vmatprep.subr.bf16.mxu0 0
        %2254 = vmatpush1.bf16.msra.mxu0 0
        %2255 = vmatprep.subr.bf16.mxu0 0
        %2256 = vmatpush1.bf16.msra.mxu0 0
        %2257 = vmatprep.subr.bf16.mxu0 0
        %2258 = vmatpush1.bf16.msra.mxu0 0
        %2259 = vmatprep.subr.bf16.mxu0 0
        %2260 = vmatpush1.bf16.msra.mxu0 0
        %2261 = vmatprep.subr.bf16.mxu0 0
        %2262 = vmatpush1.bf16.msra.mxu0 0
        %2263 = vmatprep.subr.bf16.mxu0 0
        %2264 = vmatpush1.bf16.msra.mxu0 0
        %2265 = vmatprep.subr.bf16.mxu0 0
        %2266 = vmatpush1.bf16.msra.mxu0 0
        %2267 = vmatprep.mubr.bf16.mxu0 0
        %2268 = vmatmul.mubr.bf16.gmra.mrb[0].mxu0 %v2230
        %v2269 = vpop.f32.mrb[0].mxu0
        %v2270 = vadd.f32 0.0, %v2269
        %v2271 = vpop.f32.mrb[0].mxu0
        %v2272 = vpop.f32.mrb[0].mxu0
        %v2273 = vpop.f32.mrb[0].mxu0
        %2274 = vdwg.mxu0
        %v2276 = vsel %vm1641, %v2086, 0
        %v2279 = vsel %vm2093, %v1637, 0
        %2281 = vmatprep.subr.bf16.mxu0 0
        %2282 = vmatpush1.bf16.msra.mxu0 %v2279
        %2283 = vmatprep.subr.bf16.mxu0 0
        %2284 = vmatpush1.bf16.msra.mxu0 0
        %2285 = vmatprep.subr.bf16.mxu0 0
        %2286 = vmatpush1.bf16.msra.mxu0 0
        %2287 = vmatprep.subr.bf16.mxu0 0
        %2288 = vmatpush1.bf16.msra.mxu0 0
        %2289 = vmatprep.subr.bf16.mxu0 0
        %2290 = vmatpush1.bf16.msra.mxu0 0
        %2291 = vmatprep.subr.bf16.mxu0 0
        %2292 = vmatpush1.bf16.msra.mxu0 0
        %2293 = vmatprep.subr.bf16.mxu0 0
        %2294 = vmatpush1.bf16.msra.mxu0 0
        %2295 = vmatprep.subr.bf16.mxu0 0
        %2296 = vmatpush1.bf16.msra.mxu0 0
        %2297 = vmatprep.subr.bf16.mxu0 0
        %2298 = vmatpush1.bf16.msra.mxu0 0
        %2299 = vmatprep.subr.bf16.mxu0 0
        %2300 = vmatpush1.bf16.msra.mxu0 0
        %2301 = vmatprep.subr.bf16.mxu0 0
        %2302 = vmatpush1.bf16.msra.mxu0 0
        %2303 = vmatprep.subr.bf16.mxu0 0
        %2304 = vmatpush1.bf16.msra.mxu0 0
        %2305 = vmatprep.subr.bf16.mxu0 0
        %2306 = vmatpush1.bf16.msra.mxu0 0
        %2307 = vmatprep.subr.bf16.mxu0 0
        %2308 = vmatpush1.bf16.msra.mxu0 0
        %2309 = vmatprep.subr.bf16.mxu0 0
        %2310 = vmatpush1.bf16.msra.mxu0 0
        %2311 = vmatprep.subr.bf16.mxu0 0
        %2312 = vmatpush1.bf16.msra.mxu0 0
        %2313 = vmatprep.mubr.bf16.mxu0 0
        %2314 = vmatmul.mubr.bf16.gmra.mrb[0].mxu0 %v2276
        %v2315 = vpop.f32.mrb[0].mxu0
        %v2316 = vadd.f32 0.0, %v2315
        %v2317 = vpop.f32.mrb[0].mxu0
        %v2318 = vpop.f32.mrb[0].mxu0
        %v2319 = vpop.f32.mrb[0].mxu0
        %2320 = vdwg.mxu0
        %v2322 = vsel %vm1641, %v2087, 0
        %v2325 = vsel %vm2093, %v1638, 0
        %2327 = vmatprep.subr.bf16.mxu0 0
        %2328 = vmatpush1.bf16.msra.mxu0 %v2325
        %2329 = vmatprep.subr.bf16.mxu0 0
        %2330 = vmatpush1.bf16.msra.mxu0 0
        %2331 = vmatprep.subr.bf16.mxu0 0
        %2332 = vmatpush1.bf16.msra.mxu0 0
        %2333 = vmatprep.subr.bf16.mxu0 0
        %2334 = vmatpush1.bf16.msra.mxu0 0
        %2335 = vmatprep.subr.bf16.mxu0 0
        %2336 = vmatpush1.bf16.msra.mxu0 0
        %2337 = vmatprep.subr.bf16.mxu0 0
        %2338 = vmatpush1.bf16.msra.mxu0 0
        %2339 = vmatprep.subr.bf16.mxu0 0
        %2340 = vmatpush1.bf16.msra.mxu0 0
        %2341 = vmatprep.subr.bf16.mxu0 0
        %2342 = vmatpush1.bf16.msra.mxu0 0
        %2343 = vmatprep.subr.bf16.mxu0 0
        %2344 = vmatpush1.bf16.msra.mxu0 0
        %2345 = vmatprep.subr.bf16.mxu0 0
        %2346 = vmatpush1.bf16.msra.mxu0 0
        %2347 = vmatprep.subr.bf16.mxu0 0
        %2348 = vmatpush1.bf16.msra.mxu0 0
        %2349 = vmatprep.subr.bf16.mxu0 0
        %2350 = vmatpush1.bf16.msra.mxu0 0
        %2351 = vmatprep.subr.bf16.mxu0 0
        %2352 = vmatpush1.bf16.msra.mxu0 0
        %2353 = vmatprep.subr.bf16.mxu0 0
        %2354 = vmatpush1.bf16.msra.mxu0 0
        %2355 = vmatprep.subr.bf16.mxu0 0
        %2356 = vmatpush1.bf16.msra.mxu0 0
        %2357 = vmatprep.subr.bf16.mxu0 0
        %2358 = vmatpush1.bf16.msra.mxu0 0
        %2359 = vmatprep.mubr.bf16.mxu0 0
        %2360 = vmatmul.mubr.bf16.gmra.mrb[0].mxu0 %v2322
        %v2361 = vpop.f32.mrb[0].mxu0
        %v2362 = vadd.f32 0.0, %v2361
        %v2363 = vpop.f32.mrb[0].mxu0
        %v2364 = vpop.f32.mrb[0].mxu0
        %v2365 = vpop.f32.mrb[0].mxu0
        %2366 = vdwg.mxu0
        %v2368 = vsel %vm1641, %v2088, 0
        %v2371 = vsel %vm2093, %v1639, 0
        %2373 = vmatprep.subr.bf16.mxu0 0
        %2374 = vmatpush1.bf16.msra.mxu0 %v2371
        %2375 = vmatprep.subr.bf16.mxu0 0
        %2376 = vmatpush1.bf16.msra.mxu0 0
        %2377 = vmatprep.subr.bf16.mxu0 0
        %2378 = vmatpush1.bf16.msra.mxu0 0
        %2379 = vmatprep.subr.bf16.mxu0 0
        %2380 = vmatpush1.bf16.msra.mxu0 0
        %2381 = vmatprep.subr.bf16.mxu0 0
        %2382 = vmatpush1.bf16.msra.mxu0 0
        %2383 = vmatprep.subr.bf16.mxu0 0
        %2384 = vmatpush1.bf16.msra.mxu0 0
        %2385 = vmatprep.subr.bf16.mxu0 0
        %2386 = vmatpush1.bf16.msra.mxu0 0
        %2387 = vmatprep.subr.bf16.mxu0 0
        %2388 = vmatpush1.bf16.msra.mxu0 0
        %2389 = vmatprep.subr.bf16.mxu0 0
        %2390 = vmatpush1.bf16.msra.mxu0 0
        %2391 = vmatprep.subr.bf16.mxu0 0
        %2392 = vmatpush1.bf16.msra.mxu0 0
        %2393 = vmatprep.subr.bf16.mxu0 0
        %2394 = vmatpush1.bf16.msra.mxu0 0
        %2395 = vmatprep.subr.bf16.mxu0 0
        %2396 = vmatpush1.bf16.msra.mxu0 0
        %2397 = vmatprep.subr.bf16.mxu0 0
        %2398 = vmatpush1.bf16.msra.mxu0 0
        %2399 = vmatprep.subr.bf16.mxu0 0
        %2400 = vmatpush1.bf16.msra.mxu0 0
        %2401 = vmatprep.subr.bf16.mxu0 0
        %2402 = vmatpush1.bf16.msra.mxu0 0
        %2403 = vmatprep.subr.bf16.mxu0 0
        %2404 = vmatpush1.bf16.msra.mxu0 0
        %2405 = vmatprep.mubr.bf16.mxu0 0
        %2406 = vmatmul.mubr.bf16.gmra.mrb[0].mxu0 %v2368
        %v2407 = vpop.f32.mrb[0].mxu0
        %v2408 = vadd.f32 0.0, %v2407
        %v2409 = vpop.f32.mrb[0].mxu0
        %v2410 = vpop.f32.mrb[0].mxu0
        %v2411 = vpop.f32.mrb[0].mxu0
        %2412 = vdwg.mxu0
        %v2414 = vsel %vm1641, %v2089, 0
        %v2417 = vsel %vm2093, %v1640, 0
        %2419 = vmatprep.subr.bf16.mxu0 0
        %2420 = vmatpush1.bf16.msra.mxu0 %v2417
        %2421 = vmatprep.subr.bf16.mxu0 0
        %2422 = vmatpush1.bf16.msra.mxu0 0
        %2423 = vmatprep.subr.bf16.mxu0 0
        %2424 = vmatpush1.bf16.msra.mxu0 0
        %2425 = vmatprep.subr.bf16.mxu0 0
        %2426 = vmatpush1.bf16.msra.mxu0 0
        %2427 = vmatprep.subr.bf16.mxu0 0
        %2428 = vmatpush1.bf16.msra.mxu0 0
        %2429 = vmatprep.subr.bf16.mxu0 0
        %2430 = vmatpush1.bf16.msra.mxu0 0
        %2431 = vmatprep.subr.bf16.mxu0 0
        %2432 = vmatpush1.bf16.msra.mxu0 0
        %2433 = vmatprep.subr.bf16.mxu0 0
        %2434 = vmatpush1.bf16.msra.mxu0 0
        %2435 = vmatprep.subr.bf16.mxu0 0
        %2436 = vmatpush1.bf16.msra.mxu0 0
        %2437 = vmatprep.subr.bf16.mxu0 0
        %2438 = vmatpush1.bf16.msra.mxu0 0
        %2439 = vmatprep.subr.bf16.mxu0 0
        %2440 = vmatpush1.bf16.msra.mxu0 0
        %2441 = vmatprep.subr.bf16.mxu0 0
        %2442 = vmatpush1.bf16.msra.mxu0 0
        %2443 = vmatprep.subr.bf16.mxu0 0
        %2444 = vmatpush1.bf16.msra.mxu0 0
        %2445 = vmatprep.subr.bf16.mxu0 0
        %2446 = vmatpush1.bf16.msra.mxu0 0
        %2447 = vmatprep.subr.bf16.mxu0 0
        %2448 = vmatpush1.bf16.msra.mxu0 0
        %2449 = vmatprep.subr.bf16.mxu0 0
        %2450 = vmatpush1.bf16.msra.mxu0 0
        %2451 = vmatprep.mubr.bf16.mxu0 0
        %2452 = vmatmul.mubr.bf16.gmra.mrb[0].mxu0 %v2414
        %v2453 = vpop.f32.mrb[0].mxu0
        %v2454 = vadd.f32 0.0, %v2453
        %v2455 = vpop.f32.mrb[0].mxu0
        %v2456 = vpop.f32.mrb[0].mxu0
        %v2457 = vpop.f32.mrb[0].mxu0
        %2458 = vdwg.mxu0
        %v2459 = vrcp.pop %v2060
        %v2460 = vrcp.pop %v2063
        %v2461 = vrcp.pop %v2066
        %v2462 = vrcp.pop %v2069
        %v2463 = vrcp.pop %v2072
        %v2464 = vrcp.pop %v2075
        %v2465 = vrcp.pop %v2078
        %v2466 = vrcp.pop %v2081
        %v2467 = vmul.f32 %v2132, %v2459
        %v2468 = vmul.f32 %v2178, %v2460
        %v2469 = vmul.f32 %v2224, %v2461
        %v2470 = vmul.f32 %v2270, %v2462
        %v2471 = vmul.f32 %v2316, %v2463
        %v2472 = vmul.f32 %v2362, %v2464
        %v2473 = vmul.f32 %v2408, %v2465
        %v2474 = vmul.f32 %v2454, %v2466
        %v2475 = vcombine.low %v2467, %v2469
        %v2476 = vcombine.high %v2467, %v2469
        %v2478 = vunpack.c.l.s4 1983009808
        %v2479 = vunpack.c.0.s8 %v2478
        %v2480 = vlaneseq
        %v2481 = vshrl.u32 %v2480, 7
        %v2482 = vsub.s32 %v2479, %v2481
        %v2483 = vrot.slane %v2475, %v2482
        %v2485 = vunpack.c.l.s4 1983009808
        %v2486 = vunpack.c.0.s8 %v2485
        %v2487 = vlaneseq
        %v2488 = vshrl.u32 %v2487, 7
        %v2489 = vsub.s32 %v2486, %v2488
        %v2490 = vrot.slane %v2476, %v2489
        %v2491 = vcombine.low %v2468, %v2470
        %v2492 = vcombine.high %v2468, %v2470
        %v2494 = vunpack.c.l.s4 1983009808
        %v2495 = vunpack.c.0.s8 %v2494
        %v2496 = vlaneseq
        %v2497 = vshrl.u32 %v2496, 7
        %v2498 = vsub.s32 %v2495, %v2497
        %v2499 = vrot.slane %v2491, %v2498
        %v2501 = vunpack.c.l.s4 1983009808
        %v2502 = vunpack.c.0.s8 %v2501
        %v2503 = vlaneseq
        %v2504 = vshrl.u32 %v2503, 7
        %v2505 = vsub.s32 %v2502, %v2504
        %v2506 = vrot.slane %v2492, %v2505
        %v2507 = vcombine.low %v2483, %v2499
        %v2508 = vcombine.high %v2483, %v2499
        %v2510 = vunpack.c.l.s4 1934713408
        %v2511 = vunpack.c.0.s8 %v2510
        %v2512 = vlaneseq
        %v2513 = vshrl.u32 %v2512, 7
        %v2514 = vsub.s32 %v2511, %v2513
        %v2515 = vrot.slane %v2507, %v2514
        %v2517 = vunpack.c.l.s4 1934713408
        %v2518 = vunpack.c.0.s8 %v2517
        %v2519 = vlaneseq
        %v2520 = vshrl.u32 %v2519, 7
        %v2521 = vsub.s32 %v2518, %v2520
        %v2522 = vrot.slane %v2508, %v2521
        %v2523 = vcombine.low %v2490, %v2506
        %v2524 = vcombine.high %v2490, %v2506
        %v2526 = vunpack.c.l.s4 1934713408
        %v2527 = vunpack.c.0.s8 %v2526
        %v2528 = vlaneseq
        %v2529 = vshrl.u32 %v2528, 7
        %v2530 = vsub.s32 %v2527, %v2529
        %v2531 = vrot.slane %v2523, %v2530
        %v2533 = vunpack.c.l.s4 1934713408
        %v2534 = vunpack.c.0.s8 %v2533
        %v2535 = vlaneseq
        %v2536 = vshrl.u32 %v2535, 7
        %v2537 = vsub.s32 %v2534, %v2536
        %v2538 = vrot.slane %v2524, %v2537
        %v2539 = vcombine.high %v2515, 0.0
        %v2540 = vcombine.high %v2522, 0.0
        %v2541 = vcombine.high %v2531, 0.0
        %v2542 = vcombine.high %v2538, 0.0
        %v2543 = vcombine.low %v2471, %v2473
        %v2544 = vcombine.high %v2471, %v2473
        %v2546 = vunpack.c.l.s4 1983009808
        %v2547 = vunpack.c.0.s8 %v2546
        %v2548 = vlaneseq
        %v2549 = vshrl.u32 %v2548, 7
        %v2550 = vsub.s32 %v2547, %v2549
        %v2551 = vrot.slane %v2543, %v2550
        %v2553 = vunpack.c.l.s4 1983009808
        %v2554 = vunpack.c.0.s8 %v2553
        %v2555 = vlaneseq
        %v2556 = vshrl.u32 %v2555, 7
        %v2557 = vsub.s32 %v2554, %v2556
        %v2558 = vrot.slane %v2544, %v2557
        %v2559 = vcombine.low %v2472, %v2474
        %v2560 = vcombine.high %v2472, %v2474
        %v2562 = vunpack.c.l.s4 1983009808
        %v2563 = vunpack.c.0.s8 %v2562
        %v2564 = vlaneseq
        %v2565 = vshrl.u32 %v2564, 7
        %v2566 = vsub.s32 %v2563, %v2565
        %v2567 = vrot.slane %v2559, %v2566
        %v2569 = vunpack.c.l.s4 1983009808
        %v2570 = vunpack.c.0.s8 %v2569
        %v2571 = vlaneseq
        %v2572 = vshrl.u32 %v2571, 7
        %v2573 = vsub.s32 %v2570, %v2572
        %v2574 = vrot.slane %v2560, %v2573
        %v2575 = vcombine.low %v2551, %v2567
        %v2576 = vcombine.high %v2551, %v2567
        %v2578 = vunpack.c.l.s4 1934713408
        %v2579 = vunpack.c.0.s8 %v2578
        %v2580 = vlaneseq
        %v2581 = vshrl.u32 %v2580, 7
        %v2582 = vsub.s32 %v2579, %v2581
        %v2583 = vrot.slane %v2575, %v2582
        %v2585 = vunpack.c.l.s4 1934713408
        %v2586 = vunpack.c.0.s8 %v2585
        %v2587 = vlaneseq
        %v2588 = vshrl.u32 %v2587, 7
        %v2589 = vsub.s32 %v2586, %v2588
        %v2590 = vrot.slane %v2576, %v2589
        %v2591 = vcombine.low %v2558, %v2574
        %v2592 = vcombine.high %v2558, %v2574
        %v2594 = vunpack.c.l.s4 1934713408
        %v2595 = vunpack.c.0.s8 %v2594
        %v2596 = vlaneseq
        %v2597 = vshrl.u32 %v2596, 7
        %v2598 = vsub.s32 %v2595, %v2597
        %v2599 = vrot.slane %v2591, %v2598
        %v2601 = vunpack.c.l.s4 1934713408
        %v2602 = vunpack.c.0.s8 %v2601
        %v2603 = vlaneseq
        %v2604 = vshrl.u32 %v2603, 7
        %v2605 = vsub.s32 %v2602, %v2604
        %v2606 = vrot.slane %v2592, %v2605
        %v2607 = vcombine.high %v2583, 0.0
        %v2608 = vcombine.high %v2590, 0.0
        %v2609 = vcombine.high %v2599, 0.0
        %v2610 = vcombine.high %v2606, 0.0
        %v2611 = vcombine.low %v2515, %v2522
        %v2613 = vunpack.c.l.s4 1983009808
        %v2614 = vunpack.c.0.s8 %v2613
        %v2615 = vlaneseq
        %v2616 = vshrl.u32 %v2615, 7
        %v2617 = vsub.s32 %v2614, %v2616
        %v2618 = vrot.slane %v2611, %v2617
        %v2619 = vcombine.low %v2539, %v2540
        %v2621 = vunpack.c.l.s4 1983009808
        %v2622 = vunpack.c.0.s8 %v2621
        %v2623 = vlaneseq
        %v2624 = vshrl.u32 %v2623, 7
        %v2625 = vsub.s32 %v2622, %v2624
        %v2626 = vrot.slane %v2619, %v2625
        %v2627 = vcombine.low %v2531, %v2538
        %v2629 = vunpack.c.l.s4 1983009808
        %v2630 = vunpack.c.0.s8 %v2629
        %v2631 = vlaneseq
        %v2632 = vshrl.u32 %v2631, 7
        %v2633 = vsub.s32 %v2630, %v2632
        %v2634 = vrot.slane %v2627, %v2633
        %v2635 = vcombine.low %v2541, %v2542
        %v2637 = vunpack.c.l.s4 1983009808
        %v2638 = vunpack.c.0.s8 %v2637
        %v2639 = vlaneseq
        %v2640 = vshrl.u32 %v2639, 7
        %v2641 = vsub.s32 %v2638, %v2640
        %v2642 = vrot.slane %v2635, %v2641
        %v2643 = vcombine.low %v2618, %v2626
        %v2644 = vcombine.high %v2618, %v2626
        %v2646 = vunpack.c.l.s4 1934713408
        %v2647 = vunpack.c.0.s8 %v2646
        %v2648 = vlaneseq
        %v2649 = vshrl.u32 %v2648, 7
        %v2650 = vsub.s32 %v2647, %v2649
        %v2651 = vrot.slane %v2643, %v2650
        %v2653 = vunpack.c.l.s4 1934713408
        %v2654 = vunpack.c.0.s8 %v2653
        %v2655 = vlaneseq
        %v2656 = vshrl.u32 %v2655, 7
        %v2657 = vsub.s32 %v2654, %v2656
        %v2658 = vrot.slane %v2644, %v2657
        %v2659 = vcombine.low %v2634, %v2642
        %v2660 = vcombine.high %v2634, %v2642
        %v2662 = vunpack.c.l.s4 1934713408
        %v2663 = vunpack.c.0.s8 %v2662
        %v2664 = vlaneseq
        %v2665 = vshrl.u32 %v2664, 7
        %v2666 = vsub.s32 %v2663, %v2665
        %v2667 = vrot.slane %v2659, %v2666
        %v2669 = vunpack.c.l.s4 1934713408
        %v2670 = vunpack.c.0.s8 %v2669
        %v2671 = vlaneseq
        %v2672 = vshrl.u32 %v2671, 7
        %v2673 = vsub.s32 %v2670, %v2672
        %v2674 = vrot.slane %v2660, %v2673
        %v2675 = vcombine.low %v2651, %v2667
        %v2676 = vcombine.high %v2651, %v2667
        %v2677 = vcombine.low %v2658, %v2674
        %v2678 = vcombine.high %v2658, %v2674
        %v2679 = vcombine.low %v2583, %v2590
        %v2681 = vunpack.c.l.s4 1983009808
        %v2682 = vunpack.c.0.s8 %v2681
        %v2683 = vlaneseq
        %v2684 = vshrl.u32 %v2683, 7
        %v2685 = vsub.s32 %v2682, %v2684
        %v2686 = vrot.slane %v2679, %v2685
        %v2687 = vcombine.low %v2607, %v2608
        %v2689 = vunpack.c.l.s4 1983009808
        %v2690 = vunpack.c.0.s8 %v2689
        %v2691 = vlaneseq
        %v2692 = vshrl.u32 %v2691, 7
        %v2693 = vsub.s32 %v2690, %v2692
        %v2694 = vrot.slane %v2687, %v2693
        %v2695 = vcombine.low %v2599, %v2606
        %v2697 = vunpack.c.l.s4 1983009808
        %v2698 = vunpack.c.0.s8 %v2697
        %v2699 = vlaneseq
        %v2700 = vshrl.u32 %v2699, 7
        %v2701 = vsub.s32 %v2698, %v2700
        %v2702 = vrot.slane %v2695, %v2701
        %v2703 = vcombine.low %v2609, %v2610
        %v2705 = vunpack.c.l.s4 1983009808
        %v2706 = vunpack.c.0.s8 %v2705
        %v2707 = vlaneseq
        %v2708 = vshrl.u32 %v2707, 7
        %v2709 = vsub.s32 %v2706, %v2708
        %v2710 = vrot.slane %v2703, %v2709
        %v2711 = vcombine.low %v2686, %v2694
        %v2712 = vcombine.high %v2686, %v2694
        %v2714 = vunpack.c.l.s4 1934713408
        %v2715 = vunpack.c.0.s8 %v2714
        %v2716 = vlaneseq
        %v2717 = vshrl.u32 %v2716, 7
        %v2718 = vsub.s32 %v2715, %v2717
        %v2719 = vrot.slane %v2711, %v2718
        %v2721 = vunpack.c.l.s4 1934713408
        %v2722 = vunpack.c.0.s8 %v2721
        %v2723 = vlaneseq
        %v2724 = vshrl.u32 %v2723, 7
        %v2725 = vsub.s32 %v2722, %v2724
        %v2726 = vrot.slane %v2712, %v2725
        %v2727 = vcombine.low %v2702, %v2710
        %v2728 = vcombine.high %v2702, %v2710
        %v2730 = vunpack.c.l.s4 1934713408
        %v2731 = vunpack.c.0.s8 %v2730
        %v2732 = vlaneseq
        %v2733 = vshrl.u32 %v2732, 7
        %v2734 = vsub.s32 %v2731, %v2733
        %v2735 = vrot.slane %v2727, %v2734
        %v2737 = vunpack.c.l.s4 1934713408
        %v2738 = vunpack.c.0.s8 %v2737
        %v2739 = vlaneseq
        %v2740 = vshrl.u32 %v2739, 7
        %v2741 = vsub.s32 %v2738, %v2740
        %v2742 = vrot.slane %v2728, %v2741
        %v2743 = vcombine.low %v2719, %v2735
        %v2744 = vcombine.high %v2719, %v2735
        %v2745 = vcombine.low %v2726, %v2742
        %v2746 = vcombine.high %v2726, %v2742
        %2749 = vrot.lane.b32.xlu0 %v2676, 8
        %v2750 = vpop.permute.xlu0 %2749
        %2751 = vrot.lane.b32.xlu0 %v2744, 8
        %v2752 = vpop.permute.xlu0 %2751
        %2757 = vrot.lane.b32.xlu0 %v2677, 16
        %v2758 = vpop.permute.xlu0 %2757
        %2759 = vrot.lane.b32.xlu0 %v2745, 16
        %v2760 = vpop.permute.xlu0 %2759
        %2765 = vrot.lane.b32.xlu0 %v2678, 24
        %v2766 = vpop.permute.xlu0 %2765
        %2767 = vrot.lane.b32.xlu0 %v2746, 24
        %v2768 = vpop.permute.xlu0 %2767
        %v2771 = vsel %vm1641, %v2675, %v2750
        %v2772 = vsel %vm1641, %v2743, %v2752
        %vm2773 = vcmask 130048
        %v2774 = vsel %vm2773, %v2771, %v2758
        %v2775 = vsel %vm2773, %v2772, %v2760
        %vm2776 = vcmask 195584
        %v2777 = vsel %vm2776, %v2774, %v2766
        %v2778 = vsel %vm2776, %v2775, %v2768
        %v2779 = vpack.c.bf16 %v2778, %v2777
        %v2780 = vld [vmem:[%s571] sm:$0xf]
        %v2781 = vld [vmem:[%s571 + $0x4] sm:$0xf]
        %v2782 = vld [vmem:[%s571 + $0x8] sm:$0xf]
        %v2783 = vld [vmem:[%s571 + $0xc] sm:$0xf]
        %v2784 = vld [vmem:[%s574] sm:$0x1]
        %v2786 = vlaneseq
        %v2787 = vshrl.u32 %v2786, 7
        %v2788 = vsub.s32 0, %v2787
        %v2789 = vrot.slane %v2784, %v2788
        %v2795 = vunpack.c.l.b16 %v2780
        %v2796 = vunpack.c.l.b16 %v2781
        %v2797 = vunpack.c.l.b16 %v2782
        %v2798 = vunpack.c.l.b16 %v2783
        %v2799 = vpack.c.b16 %v2796, %v2795
        %v2800 = vpack.c.b16 %v2798, %v2797
        %v2804 = vsel %vm612, %v2779, 0
        %2806 = vmatprep.subr.bf16.mxu0 0
        %2807 = vmatpush1.bf16.msra.mxu0 %v2799
        %2808 = vmatprep.subr.bf16.mxu0 0
        %2809 = vmatpush1.bf16.msra.mxu0 %v2800
        %2810 = vmatprep.subr.bf16.mxu0 0
        %2811 = vmatpush1.bf16.msra.mxu0 0
        %2812 = vmatprep.subr.bf16.mxu0 0
        %2813 = vmatpush1.bf16.msra.mxu0 0
        %2814 = vmatprep.subr.bf16.mxu0 0
        %2815 = vmatpush1.bf16.msra.mxu0 0
        %2816 = vmatprep.subr.bf16.mxu0 0
        %2817 = vmatpush1.bf16.msra.mxu0 0
        %2818 = vmatprep.subr.bf16.mxu0 0
        %2819 = vmatpush1.bf16.msra.mxu0 0
        %2820 = vmatprep.subr.bf16.mxu0 0
        %2821 = vmatpush1.bf16.msra.mxu0 0
        %2822 = vmatprep.subr.bf16.mxu0 0
        %2823 = vmatpush1.bf16.msra.mxu0 0
        %2824 = vmatprep.subr.bf16.mxu0 0
        %2825 = vmatpush1.bf16.msra.mxu0 0
        %2826 = vmatprep.subr.bf16.mxu0 0
        %2827 = vmatpush1.bf16.msra.mxu0 0
        %2828 = vmatprep.subr.bf16.mxu0 0
        %2829 = vmatpush1.bf16.msra.mxu0 0
        %2830 = vmatprep.subr.bf16.mxu0 0
        %2831 = vmatpush1.bf16.msra.mxu0 0
        %2832 = vmatprep.subr.bf16.mxu0 0
        %2833 = vmatpush1.bf16.msra.mxu0 0
        %2834 = vmatprep.subr.bf16.mxu0 0
        %2835 = vmatpush1.bf16.msra.mxu0 0
        %2836 = vmatprep.subr.bf16.mxu0 0
        %2837 = vmatpush1.bf16.msra.mxu0 0
        %2838 = vmatprep.mubr.bf16.mxu0 0
        %2839 = vmatmul.mubr.bf16.gmra.mrb[0].mxu0 %v2804
        %v2840 = vpop.f32.mrb[0].mxu0
        %v2841 = vadd.f32 %v2789, %v2840
        %v2842 = vpop.f32.mrb[0].mxu0
        %v2843 = vpop.f32.mrb[0].mxu0
        %v2844 = vadd.f32 %v2789, %v2843
        %v2845 = vpop.f32.mrb[0].mxu0
        %2846 = vdwg.mxu0
        %v2847 = vadd.f32 %v608, %v2841
        %v2848 = vadd.f32 %v609, %v2844
        %v2849 = vld [vmem:[%s577] sm:$0x1]
        %v2850 = vld [vmem:[%s580] sm:$0x1]
        %v2851 = vsel %vm612, %v2847, 0.0
        %2852 = vadd.xlane.f32.xlu0 %v2851
        %v2853 = vpop.xlane.xlu0 %2852
        %v2854 = vsel %vm612, %v2848, 0.0
        %2855 = vadd.xlane.f32.xlu0 %v2854
        %v2856 = vpop.xlane.xlu0 %2855
        %v2857 = vmul.f32 %v2853, %v619
        %v2858 = vmul.f32 %v2856, %v619
        %v2859 = vsub.f32 %v2847, %v2857
        %v2860 = vsub.f32 %v2848, %v2858
        %v2861 = vmul.f32 %v2859, %v2859
        %v2862 = vmul.f32 %v2860, %v2860
        %v2863 = vsel %vm612, %v2861, 0.0
        %2864 = vadd.xlane.f32.xlu0 %v2863
        %v2865 = vpop.xlane.xlu0 %2864
        %v2866 = vsel %vm612, %v2862, 0.0
        %2867 = vadd.xlane.f32.xlu0 %v2866
        %v2868 = vpop.xlane.xlu0 %2867
        %v2869 = vmul.f32 %v2865, %v619
        %v2870 = vmul.f32 %v2868, %v619
        %v2871 = vadd.f32 %v2869, 1e-05
        %v2872 = vadd.f32 %v2870, 1e-05
        %v2873 = vrsqrt.pop %v2871
        %v2874 = vrsqrt.pop %v2872
        %v2875 = vmul.f32 %v2859, %v2873
        %v2876 = vmul.f32 %v2860, %v2874
        %v2878 = vlaneseq
        %v2879 = vshrl.u32 %v2878, 7
        %v2880 = vsub.s32 0, %v2879
        %v2881 = vrot.slane %v2849, %v2880
        %v2883 = vmul.f32 %v2875, %v2881
        %v2884 = vmul.f32 %v2876, %v2881
        %v2886 = vlaneseq
        %v2887 = vshrl.u32 %v2886, 7
        %v2888 = vsub.s32 0, %v2887
        %v2889 = vrot.slane %v2850, %v2888
        %v2891 = vadd.f32 %v2883, %v2889
        %v2892 = vadd.f32 %v2884, %v2889
        %v2893 = vpack.c.bf16 %v2892, %v2891
        %v2894 = vld [vmem:[%s588] sm:$0x1]
        %v2895 = vld [vmem:[%s585] sm:$0xf]
        %v2896 = vld [vmem:[%s585 + $0x4] sm:$0xf]
        %v2897 = vld [vmem:[%s585 + $0x8] sm:$0xf]
        %v2898 = vld [vmem:[%s585 + $0xc] sm:$0xf]
        %v2900 = vlaneseq
        %v2901 = vshrl.u32 %v2900, 7
        %v2902 = vsub.s32 0, %v2901
        %v2903 = vrot.slane %v2894, %v2902
        %v2909 = vunpack.c.l.b16 %v2895
        %v2910 = vunpack.c.l.b16 %v2896
        %v2911 = vunpack.c.l.b16 %v2897
        %v2912 = vunpack.c.l.b16 %v2898
        %v2913 = vpack.c.b16 %v2910, %v2909
        %v2914 = vpack.c.b16 %v2912, %v2911
        %v2918 = vsel %vm612, %v2893, 0
        %2920 = vmatprep.subr.bf16.mxu0 0
        %2921 = vmatpush1.bf16.msra.mxu0 %v2913
        %2922 = vmatprep.subr.bf16.mxu0 0
        %2923 = vmatpush1.bf16.msra.mxu0 %v2914
        %2924 = vmatprep.subr.bf16.mxu0 0
        %2925 = vmatpush1.bf16.msra.mxu0 0
        %2926 = vmatprep.subr.bf16.mxu0 0
        %2927 = vmatpush1.bf16.msra.mxu0 0
        %2928 = vmatprep.subr.bf16.mxu0 0
        %2929 = vmatpush1.bf16.msra.mxu0 0
        %2930 = vmatprep.subr.bf16.mxu0 0
        %2931 = vmatpush1.bf16.msra.mxu0 0
        %2932 = vmatprep.subr.bf16.mxu0 0
        %2933 = vmatpush1.bf16.msra.mxu0 0
        %2934 = vmatprep.subr.bf16.mxu0 0
        %2935 = vmatpush1.bf16.msra.mxu0 0
        %2936 = vmatprep.subr.bf16.mxu0 0
        %2937 = vmatpush1.bf16.msra.mxu0 0
        %2938 = vmatprep.subr.bf16.mxu0 0
        %2939 = vmatpush1.bf16.msra.mxu0 0
        %2940 = vmatprep.subr.bf16.mxu0 0
        %2941 = vmatpush1.bf16.msra.mxu0 0
        %2942 = vmatprep.subr.bf16.mxu0 0
        %2943 = vmatpush1.bf16.msra.mxu0 0
        %2944 = vmatprep.subr.bf16.mxu0 0
        %2945 = vmatpush1.bf16.msra.mxu0 0
        %2946 = vmatprep.subr.bf16.mxu0 0
        %2947 = vmatpush1.bf16.msra.mxu0 0
        %2948 = vmatprep.subr.bf16.mxu0 0
        %2949 = vmatpush1.bf16.msra.mxu0 0
        %2950 = vmatprep.subr.bf16.mxu0 0
        %2951 = vmatpush1.bf16.msra.mxu0 0
        %2952 = vmatprep.mubr.bf16.mxu0 0
        %2953 = vmatmul.mubr.bf16.gmra.mrb[0].mxu0 %v2918
        %v2954 = vpop.f32.mrb[0].mxu0
        %v2955 = vadd.f32 %v2903, %v2954
        %v2956 = vpop.f32.mrb[0].mxu0
        %v2957 = vpop.f32.mrb[0].mxu0
        %v2958 = vadd.f32 %v2903, %v2957
        %v2959 = vpop.f32.mrb[0].mxu0
        %2960 = vdwg.mxu0
        %v2961 = vmul.f32 %v2955, %v2955
        %v2962 = vmul.f32 %v2958, %v2958
        %v2963 = vmul.f32 %v2955, %v2961
        %v2964 = vmul.f32 %v2958, %v2962
        %v2965 = vmul.f32 %v2963, 0.044715
        %v2966 = vmul.f32 %v2964, 0.044715
        %v2967 = vadd.f32 %v2955, %v2965
        %v2968 = vadd.f32 %v2958, %v2966
        %v2969 = vmul.f32 %v2967, 0.7978846
        %v2970 = vmul.f32 %v2968, 0.7978846
        %v2971 = vtanh.pop %v2969
        %v2972 = vtanh.pop %v2970
        %v2973 = vadd.f32 %v2971, 1.0
        %v2974 = vadd.f32 %v2972, 1.0
        %v2975 = vmul.f32 %v2973, 0.5
        %v2976 = vmul.f32 %v2974, 0.5
        %v2977 = vmul.f32 %v2955, %v2975
        %v2978 = vmul.f32 %v2958, %v2976
        %v2979 = vpack.c.bf16 %v2978, %v2977
        %v2980 = vld [vmem:[%s593] sm:$0xf]
        %v2981 = vld [vmem:[%s593 + $0x4] sm:$0xf]
        %v2982 = vld [vmem:[%s593 + $0x8] sm:$0xf]
        %v2983 = vld [vmem:[%s593 + $0xc] sm:$0xf]
        %v2984 = vld [vmem:[%s593 + $0x10] sm:$0xf]
        %v2985 = vld [vmem:[%s593 + $0x14] sm:$0xf]
        %v2986 = vld [vmem:[%s593 + $0x18] sm:$0xf]
        %v2987 = vld [vmem:[%s593 + $0x1c] sm:$0xf]
        %v2988 = vld [vmem:[%s593 + $0x20] sm:$0xf]
        %v2989 = vld [vmem:[%s593 + $0x24] sm:$0xf]
        %v2990 = vld [vmem:[%s593 + $0x28] sm:$0xf]
        %v2991 = vld [vmem:[%s593 + $0x2c] sm:$0xf]
        %v2992 = vld [vmem:[%s593 + $0x30] sm:$0xf]
        %v2993 = vld [vmem:[%s593 + $0x34] sm:$0xf]
        %v2994 = vld [vmem:[%s593 + $0x38] sm:$0xf]
        %v2995 = vld [vmem:[%s593 + $0x3c] sm:$0xf]
        %v3012 = vunpack.c.l.b16 %v2980
        %v3013 = vunpack.c.l.b16 %v2981
        %v3014 = vunpack.c.l.b16 %v2982
        %v3015 = vunpack.c.l.b16 %v2983
        %v3016 = vunpack.c.l.b16 %v2984
        %v3017 = vunpack.c.l.b16 %v2985
        %v3018 = vunpack.c.l.b16 %v2986
        %v3019 = vunpack.c.l.b16 %v2987
        %v3020 = vunpack.c.l.b16 %v2988
        %v3021 = vunpack.c.l.b16 %v2989
        %v3022 = vunpack.c.l.b16 %v2990
        %v3023 = vunpack.c.l.b16 %v2991
        %v3024 = vunpack.c.l.b16 %v2992
        %v3025 = vunpack.c.l.b16 %v2993
        %v3026 = vunpack.c.l.b16 %v2994
        %v3027 = vunpack.c.l.b16 %v2995
        %v3028 = vpack.c.b16 %v3013, %v3012
        %v3029 = vpack.c.b16 %v3015, %v3014
        %v3030 = vpack.c.b16 %v3017, %v3016
        %v3031 = vpack.c.b16 %v3019, %v3018
        %v3032 = vpack.c.b16 %v3021, %v3020
        %v3033 = vpack.c.b16 %v3023, %v3022
        %v3034 = vpack.c.b16 %v3025, %v3024
        %v3035 = vpack.c.b16 %v3027, %v3026
        %3044 = vmatprep.subr.bf16.mxu0 0
        %3045 = vmatpush1.bf16.msra.mxu0 %v3028
        %3046 = vmatprep.subr.bf16.mxu0 0
        %3047 = vmatpush1.bf16.msra.mxu0 %v3029
        %3048 = vmatprep.subr.bf16.mxu0 0
        %3049 = vmatpush1.bf16.msra.mxu0 %v3030
        %3050 = vmatprep.subr.bf16.mxu0 0
        %3051 = vmatpush1.bf16.msra.mxu0 %v3031
        %3052 = vmatprep.subr.bf16.mxu0 0
        %3053 = vmatpush1.bf16.msra.mxu0 %v3032
        %3054 = vmatprep.subr.bf16.mxu0 0
        %3055 = vmatpush1.bf16.msra.mxu0 %v3033
        %3056 = vmatprep.subr.bf16.mxu0 0
        %3057 = vmatpush1.bf16.msra.mxu0 %v3034
        %3058 = vmatprep.subr.bf16.mxu0 0
        %3059 = vmatpush1.bf16.msra.mxu0 %v3035
        %3060 = vmatprep.subr.bf16.mxu0 0
        %3061 = vmatpush1.bf16.msra.mxu0 0
        %3062 = vmatprep.subr.bf16.mxu0 0
        %3063 = vmatpush1.bf16.msra.mxu0 0
        %3064 = vmatprep.subr.bf16.mxu0 0
        %3065 = vmatpush1.bf16.msra.mxu0 0
        %3066 = vmatprep.subr.bf16.mxu0 0
        %3067 = vmatpush1.bf16.msra.mxu0 0
        %3068 = vmatprep.subr.bf16.mxu0 0
        %3069 = vmatpush1.bf16.msra.mxu0 0
        %3070 = vmatprep.subr.bf16.mxu0 0
        %3071 = vmatpush1.bf16.msra.mxu0 0
        %3072 = vmatprep.subr.bf16.mxu0 0
        %3073 = vmatpush1.bf16.msra.mxu0 0
        %3074 = vmatprep.subr.bf16.mxu0 0
        %3075 = vmatpush1.bf16.msra.mxu0 0
        %3076 = vmatprep.mubr.bf16.mxu0 0
        %3077 = vmatmul.mubr.bf16.gmra.mrb[0].mxu0 %v2979
        %v3078 = vpop.f32.mrb[0].mxu0
        %v3079 = vadd.f32 0.0, %v3078
        %v3080 = vpop.f32.mrb[0].mxu0
        %v3081 = vpop.f32.mrb[0].mxu0
        %v3082 = vadd.f32 0.0, %v3081
        %v3083 = vpop.f32.mrb[0].mxu0
        %3084 = vdwg.mxu0
        %v3085 = vadd.f32 %v2847, %v3079
        %v3086 = vadd.f32 %v2848, %v3082
        %v3087 = vld [vmem:[%s596] sm:$0x1]
        %v3089 = vlaneseq
        %v3090 = vshrl.u32 %v3089, 7
        %v3091 = vsub.s32 0, %v3090
        %v3092 = vrot.slane %v3087, %v3091
        %v3094 = vadd.f32 %v3085, %v3092
        %v3095 = vadd.f32 %v3086, %v3092
        %3096 = vst.msk [vmem:[#allocation2] sm:$0xff] %vm612, %v3094
        %3097 = vst.msk [vmem:[#allocation2 + $0x8] sm:$0xff] %vm612, %v3095
        // Predicated region
        $region73: #{tpu_custom_call.1} parent=67 // pred_check
          %p3098 = pneg %p366
        $region74: #{tpu_custom_call.1} parent=67 // pred_check_branch
          %3100 = sbr.rel (%p3098) target = $region76
        $region75: #{tpu_custom_call.1} parent=67 // pred_region
          %s3101 = smul.u32 2, %s28
          %s3103 = ssub.s32 256, 256
          %3104 = vsyncadd [#allocation3], %s3103
          %s3105 = smul.addr %s3101, 128
          %s3106 = scalar_lea.hbm %s12, %s3105
          %s3107 = sshll.u32 [#allocation2], 4
          %s3108 = int_to_ptr.vmem [resolvable:$true] %s3107
          %3113 = dma.vmem_to_hbm [thread:$0]  %s3108, 256, %s3106, [#allocation3], 128, 128, 8
        $region76: #{tpu_custom_call.1} parent=67 // pred_fallthru
          _
        // Predicated region
        $region77: #{tpu_custom_call.1} parent=67 // pred_check
          %p3114 = pneg %p366
        $region78: #{tpu_custom_call.1} parent=67 // pred_check_branch
          %3116 = sbr.rel (%p3114) target = $region80
        $region79: #{tpu_custom_call.1} parent=67 // pred_region
          %3117 = dma.done [#allocation3], 256
        $region80: #{tpu_custom_call.1} parent=67 // pred_fallthru
          _
      $region68: #{tpu_custom_call.1} parent=5 // pred_fallthru
        _
      %p3118 = scmp.le.s32.totalorder 2, %s19
      // Predicated region
      $region81: #{tpu_custom_call.1} parent=5 // pred_check
        %p3119 = pneg %p3118
      $region82: #{tpu_custom_call.1} parent=5 // pred_check_branch
        %3121 = sbr.rel (%p3119) target = $region84
      $region83: #{tpu_custom_call.1} parent=5 // pred_region
        %s3122 = ssub.s32 %s19, 2
      $region84: #{tpu_custom_call.1} parent=5 // pred_fallthru
        _
    $region6: #{tpu_custom_call.1} parent=1 // loop_footer
      %s23 = sadd.s32 1, %s19
    $region7: #{tpu_custom_call.1} parent=1 // loop_footer_branch
      %18 = sbr.rel target = $region3
    $region8: #{tpu_custom_call.1} parent=1 // loop_exit
      _
    %3123 = vsyncpa [#allocation3], 1
    %s3124 = scalar_lea.sflag [#allocation3], 1
    %3125 = vsyncpa %s3124, 1

</llo_original>
